<compile_context>
chip_gen: v5e
topology: v5e:2x2
jax: 0.10.0
libtpu: 0.0.40
codegen_flags: <defaults>
</compile_context>

<pallas_src>
import functools

import jax
import jax.numpy as jnp
from jax.experimental import pallas as pl
from jax.experimental.pallas import tpu as pltpu

_BN_EPS = 1e-5


# ----------------------------------------------------------------------------
# Fused DownX kernel (one grid step per block of Bb batch elements)
# ----------------------------------------------------------------------------
def _fused_downx_kernel(Bb, Ho, Wo, p_ref, wd_ref, dw_ref, bsh_ref, w1_ref,
                        w2_ref, o_ref, pad_ref, dw_scr):
    C = o_ref.shape[-1]
    M = Bb * Ho * Wo

    # ---- zero the halo scratch once (interior is overwritten every step) ---
    # Batch axis is "arbitrary" (sequential, in order), so this runs first.
    @pl.when(pl.program_id(0) == 0)
    def _():
        pad_ref[...] = jnp.zeros(pad_ref.shape, pad_ref.dtype)

    # ---- 2x2 stride-2 down conv: one MXU matmul over all Bb images ---------
    # (Bb*Ho*Wo, 4*Cin) bf16 @ (4*Cin, C) bf16 -> f32 accumulator.
    y = jnp.dot(p_ref[...].reshape(M, p_ref.shape[-1]), wd_ref[...],
                preferred_element_type=jnp.float32)

    # Scatter the down-conv result into the halo scratch.  The interior
    # starts at row 3 / column 8, so the W offset is sublane-aligned and the
    # store is an unmasked full-width store.
    pad_ref[:, pl.ds(3, Ho), pl.ds(8, Wo), :] = y.reshape(Bb, Ho, Wo, C)

    # ---- depthwise 7x7 conv (padding=3) + folded BN + ReLU ------------------
    wdw = dw_ref[...]                                  # (49, C) f32, BN-folded
    bsh = bsh_ref[0, :]                                # (C,)   BN shift
    for b in range(Bb):                                # Bb is small & static
        acc = jnp.zeros((Ho, Wo, C), jnp.float32)
        for kx in range(7):                            # 7 column loads, 49 VPU MACs
            col = pad_ref[b, :, pl.ds(5 + kx, Wo), :]  # (Ho+6, Wo, C)
            for ky in range(7):
                acc = acc + col[ky:ky + Ho] * wdw[ky * 7 + kx, :]
        acc = jnp.maximum(acc + bsh, 0.0)
        dw_scr[b] = acc.reshape(Ho * Wo, C).astype(jnp.bfloat16)

    # ---- 1x1 expand (C -> 4C) + ReLU, 1x1 project (4C -> C) + ReLU ---------
    # Chunk over the hidden 4C dimension so the (M, 4C) f32 activation is
    # never materialized (ReLU is elementwise, so chunking is exact).
    a = dw_scr[...].reshape(M, C)                      # bf16 LHS for the MXU
    H4 = w1_ref.shape[-1]
    n_chunks = H4 // 128 if (H4 >= 128 and H4 % 128 == 0) else 1
    csz = H4 // n_chunks
    out = jnp.zeros((M, C), jnp.float32)
    for c in range(n_chunks):
        h = jnp.dot(a, w1_ref[:, c * csz:(c + 1) * csz],
                    preferred_element_type=jnp.float32)
        h = jnp.maximum(h, 0.0).astype(jnp.bfloat16)
        out = out + jnp.dot(h, w2_ref[c * csz:(c + 1) * csz, :],
                            preferred_element_type=jnp.float32)
    o_ref[...] = jnp.maximum(out, 0.0).reshape(Bb, Ho, Wo, C)


def downx_forward(params, x_nchw, *, batch_block=8):
    """DownX forward.  NCHW in / NCHW out (f32), matching the PyTorch module."""
    w_down = params["w_down"]     # (Cout, Cin, 2, 2)
    w_dw = params["w_dw"]         # (Cout, 1, 7, 7)   depthwise (groups=Cout)
    w_pw1 = params["w_pw1"]       # (4*Cout, Cout, 1, 1)
    w_pw2 = params["w_pw2"]       # (Cout, 4*Cout, 1, 1)
    Cout, Cin = w_down.shape[:2]

    B, _, H, W = x_nchw.shape
    Ho, Wo = H // 2, W // 2

    Bb = max(1, min(batch_block, B))
    while B % Bb:
        Bb -= 1

    # NCHW -> per-output-pixel 2x2 patches, inner order (ky, kx, cin).
    # This is a SINGLE transposing copy (both reshapes are free) with the
    # bf16 convert fused in — no separate NHWC round trip, no extra gather.
    patches = (x_nchw[:, :, :2 * Ho, :2 * Wo]
               .reshape(B, Cin, Ho, 2, Wo, 2)
               .transpose(0, 2, 4, 3, 5, 1)            # (B, Ho, Wo, ky, kx, Cin)
               .reshape(B, Ho * Wo, 4 * Cin)
               .astype(jnp.bfloat16))

    # Weight repacking (tiny, once per call).
    wd_mat = (jnp.transpose(w_down, (2, 3, 1, 0))       # (2,2,Cin,Cout)
              .reshape(4 * Cin, Cout).astype(jnp.bfloat16))

    # BatchNorm (eval mode) folded into the depthwise weights + a shift.
    gamma = params.get("bn_gamma", jnp.ones((Cout,), jnp.float32))
    beta = params.get("bn_beta", jnp.zeros((Cout,), jnp.float32))
    rmean = params.get("bn_mean", jnp.zeros((Cout,), jnp.float32))
    rvar = params.get("bn_var", jnp.ones((Cout,), jnp.float32))
    bn_scale = gamma * jax.lax.rsqrt(rvar + _BN_EPS)
    bn_shift = (beta - rmean * bn_scale).reshape(1, Cout).astype(jnp.float32)
    dw_mat = ((jnp.transpose(w_dw[:, 0], (1, 2, 0)) * bn_scale)   # (7,7,Cout)
              .reshape(49, Cout).astype(jnp.float32))             # VPU work -> f32
    w1_mat = jnp.transpose(w_pw1[:, :, 0, 0], (1, 0)).astype(jnp.bfloat16)  # (C, 4C)
    w2_mat = jnp.transpose(w_pw2[:, :, 0, 0], (1, 0)).astype(jnp.bfloat16)  # (4C, C)

    kernel = functools.partial(_fused_downx_kernel, Bb, Ho, Wo)
    out = pl.pallas_call(
        kernel,
        out_shape=jax.ShapeDtypeStruct((B, Ho, Wo, Cout), jnp.float32),
        grid=(B // Bb,),
        in_specs=[
            pl.BlockSpec((Bb, Ho * Wo, 4 * Cin), lambda i: (i, 0, 0)),
            pl.BlockSpec((4 * Cin, Cout), lambda i: (0, 0)),
            pl.BlockSpec((49, Cout), lambda i: (0, 0)),
            pl.BlockSpec((1, Cout), lambda i: (0, 0)),
            pl.BlockSpec((Cout, 4 * Cout), lambda i: (0, 0)),
            pl.BlockSpec((4 * Cout, Cout), lambda i: (0, 0)),
        ],
        out_specs=pl.BlockSpec((Bb, Ho, Wo, Cout), lambda i: (i, 0, 0, 0)),
        scratch_shapes=[
            # Halo scratch: +6 rows (H pad 3+3), W interior at offset 8 with
            # >=3 readable zero columns on each side.  Zeroed only at step 0.
            pltpu.VMEM((Bb, Ho + 6, Wo + 16, Cout), jnp.float32),
            # Depthwise output staged in bf16 (LHS of the 1x1 expand matmul).
            pltpu.VMEM((Bb, Ho * Wo, Cout), jnp.bfloat16),
        ],
        # "arbitrary": the halo scratch is initialized only at program_id 0,
        # so iterations must run sequentially in order on one core.
        compiler_params=pltpu.CompilerParams(
            dimension_semantics=("arbitrary",)),
    )(patches, wd_mat, dw_mat, bn_shift, w1_mat, w2_mat)
    return jnp.transpose(out, (0, 3, 1, 2))


# ----------------------------------------------------------------------------
# Pure-JAX f32 reference (for validation only)
# ----------------------------------------------------------------------------
def downx_reference(params, x_nchw):
    dn = ("NHWC", "HWIO", "NHWC")
    Cout = params["w_down"].shape[0]
    gamma = params.get("bn_gamma", jnp.ones((Cout,), jnp.float32))
    beta = params.get("bn_beta", jnp.zeros((Cout,), jnp.float32))
    rmean = params.get("bn_mean", jnp.zeros((Cout,), jnp.float32))
    rvar = params.get("bn_var", jnp.ones((Cout,), jnp.float32))

    x = jnp.transpose(x_nchw, (0, 2, 3, 1)).astype(jnp.float32)
    y = jax.lax.conv_general_dilated(
        x, jnp.transpose(params["w_down"], (2, 3, 1, 0)),
        window_strides=(2, 2), padding="VALID", dimension_numbers=dn)
    z = jax.lax.conv_general_dilated(
        y, jnp.transpose(params["w_dw"], (2, 3, 1, 0)),
        window_strides=(1, 1), padding=[(3, 3), (3, 3)],
        dimension_numbers=dn, feature_group_count=Cout)
    z = (z - rmean) * (gamma * jax.lax.rsqrt(rvar + _BN_EPS)) + beta   # BN (eval)
    z = jnp.maximum(z, 0.0)
    z = jax.lax.conv_general_dilated(
        z, jnp.transpose(params["w_pw1"], (2, 3, 1, 0)),
        window_strides=(1, 1), padding="VALID", dimension_numbers=dn)
    z = jnp.maximum(z, 0.0)
    z = jax.lax.conv_general_dilated(
        z, jnp.transpose(params["w_pw2"], (2, 3, 1, 0)),
        window_strides=(1, 1), padding="VALID", dimension_numbers=dn)
    z = jnp.maximum(z, 0.0)
    return jnp.transpose(z, (0, 3, 1, 2))


if __name__ == "__main__":
    in_channels, out_channels = 64, 128
    B, H, W = 2, 16, 16

    k0, k1, k2, k3, k4 = jax.random.split(jax.random.PRNGKey(0), 5)
    params = {
        "w_down": 0.05 * jax.random.normal(
            k0, (out_channels, in_channels, 2, 2), jnp.float32),
        "w_dw": 0.05 * jax.random.normal(
            k1, (out_channels, 1, 7, 7), jnp.float32),
        "w_pw1": 0.05 * jax.random.normal(
            k2, (4 * out_channels, out_channels, 1, 1), jnp.float32),
        "w_pw2": 0.05 * jax.random.normal(
            k3, (out_channels, 4 * out_channels, 1, 1), jnp.float32),
    }
    x = jax.random.normal(k4, (B, in_channels, H, W), jnp.float32)

    fwd = jax.jit(downx_forward)
    out = jax.block_until_ready(fwd(params, x))

    assert out.shape == (B, out_channels, H // 2, W // 2), out.shape
    assert bool(jnp.all(jnp.isfinite(out)))
    assert bool(jnp.all(out >= 0.0))          # final ReLU

    ref = jax.block_until_ready(jax.jit(downx_reference)(params, x))
    max_err = float(jnp.max(jnp.abs(out - ref)))
    assert max_err < 5e-2, f"max abs error vs f32 reference: {max_err}"

    print("KERNEL_OK")
</pallas_src>

<mosaic_0001>
module attributes {stable_mosaic.version = 11 : i64} {
  func.func @_fused_downx_kernel(%arg0: i32, %arg1: memref<2x64x256xbf16, #tpu.memory_space<vmem>>, %arg2: memref<256x128xbf16, #tpu.memory_space<vmem>>, %arg3: memref<49x128xf32, #tpu.memory_space<vmem>>, %arg4: memref<1x128xf32, #tpu.memory_space<vmem>>, %arg5: memref<128x512xbf16, #tpu.memory_space<vmem>>, %arg6: memref<512x128xbf16, #tpu.memory_space<vmem>>, %arg7: memref<2x8x8x128xf32, #tpu.memory_space<vmem>>, %arg8: memref<2x14x24x128xf32, #tpu.memory_space<vmem>>, %arg9: memref<2x64x128xbf16, #tpu.memory_space<vmem>>) attributes {dimension_semantics = [#tpu.dimension_semantics<arbitrary>], iteration_bounds = array<i64: 1>, scalar_prefetch = 0 : i64, scratch_operands = 2 : i64, tpu.core_type = #tpu.core_type<tc>, window_params = [{transform_indices = @transform_0, window_bounds = array<i64: 2, 64, 256>}, {pipeline_mode = #tpu.pipeline_mode<synchronous>, transform_indices = @transform_1, window_bounds = array<i64: 256, 128>}, {pipeline_mode = #tpu.pipeline_mode<synchronous>, transform_indices = @transform_2, window_bounds = array<i64: 49, 128>}, {pipeline_mode = #tpu.pipeline_mode<synchronous>, transform_indices = @transform_3, window_bounds = array<i64: 1, 128>}, {pipeline_mode = #tpu.pipeline_mode<synchronous>, transform_indices = @transform_4, window_bounds = array<i64: 128, 512>}, {pipeline_mode = #tpu.pipeline_mode<synchronous>, transform_indices = @transform_5, window_bounds = array<i64: 512, 128>}, {transform_indices = @transform_6, window_bounds = array<i64: 2, 8, 8, 128>}]} {
    %c0_i32 = arith.constant 0 : i32
    %0 = arith.cmpi eq, %arg0, %c0_i32 : i32
    %1 = arith.extui %0 : i1 to i32
    %c0_i32_0 = arith.constant 0 : i32
    %2 = arith.cmpi ne, %1, %c0_i32_0 : i32
    scf.if %2 {
      %cst_104 = arith.constant 0.000000e+00 : f32
      %787 = vector.broadcast %cst_104 : f32 to vector<2x14x24x128xf32>
      %c0_105 = arith.constant 0 : index
      %c0_106 = arith.constant 0 : index
      %c0_107 = arith.constant 0 : index
      %c0_108 = arith.constant 0 : index
      %788 = vector.load %arg8[%c0_105, %c0_106, %c0_107, %c0_108] : memref<2x14x24x128xf32, #tpu.memory_space<vmem>>, vector<2x14x24x128xf32>
      tpu.vector_store %arg8[%c0_105, %c0_106, %c0_107, %c0_108], %787 {strides = array<i32>} : memref<2x14x24x128xf32, #tpu.memory_space<vmem>>, vector<2x14x24x128xf32>,
    } else {
    }
    %c0 = arith.constant 0 : index
    %c0_1 = arith.constant 0 : index
    %c0_2 = arith.constant 0 : index
    %3 = vector.load %arg1[%c0, %c0_1, %c0_2] : memref<2x64x256xbf16, #tpu.memory_space<vmem>>, vector<2x64x256xbf16>
    %4 = vector.shape_cast %3 : vector<2x64x256xbf16> to vector<128x256xbf16>
    %c0_3 = arith.constant 0 : index
    %c0_4 = arith.constant 0 : index
    %5 = vector.load %arg2[%c0_3, %c0_4] : memref<256x128xbf16, #tpu.memory_space<vmem>>, vector<256x128xbf16>
    %cst = arith.constant dense<0.000000e+00> : vector<128x128xf32>
    %6 = tpu.matmul %4, %5, %cst {dimension_numbers = #tpu.dot_dimension_numbers<[1], [0], [0], [1], [0, 0, 1, 1], [], []>} : vector<128x256xbf16>, vector<256x128xbf16>, vector<128x128xf32> -> vector<128x128xf32>
    %7 = vector.shape_cast %6 : vector<128x128xf32> to vector<2x8x8x128xf32>
    %c0_5 = arith.constant 0 : index
    %c3 = arith.constant 3 : index
    %c8 = arith.constant 8 : index
    %c0_6 = arith.constant 0 : index
    %8 = vector.load %arg8[%c0_5, %c3, %c8, %c0_6] : memref<2x14x24x128xf32, #tpu.memory_space<vmem>>, vector<2x8x8x128xf32>
    tpu.vector_store %arg8[%c0_5, %c3, %c8, %c0_6], %7 {strides = array<i32>} : memref<2x14x24x128xf32, #tpu.memory_space<vmem>>, vector<2x8x8x128xf32>,
    %c0_7 = arith.constant 0 : index
    %c0_8 = arith.constant 0 : index
    %9 = vector.load %arg3[%c0_7, %c0_8] : memref<49x128xf32, #tpu.memory_space<vmem>>, vector<49x128xf32>
    %c0_9 = arith.constant 0 : index
    %c0_10 = arith.constant 0 : index
    %10 = vector.load %arg4[%c0_9, %c0_10] : memref<1x128xf32, #tpu.memory_space<vmem>>, vector<1x128xf32>
    %11 = vector.shape_cast %10 : vector<1x128xf32> to vector<128xf32>
    %cst_11 = arith.constant 0.000000e+00 : f32
    %12 = vector.broadcast %cst_11 : f32 to vector<8x8x128xf32>
    %c0_12 = arith.constant 0 : index
    %c0_13 = arith.constant 0 : index
    %c5 = arith.constant 5 : index
    %c0_14 = arith.constant 0 : index
    %13 = vector.load %arg8[%c0_12, %c0_13, %c5, %c0_14] : memref<2x14x24x128xf32, #tpu.memory_space<vmem>>, vector<1x14x8x128xf32>
    %14 = vector.shape_cast %13 : vector<1x14x8x128xf32> to vector<14x8x128xf32>
    %15 = vector.extract_strided_slice %14 {offsets = [0, 0, 0], sizes = [8, 8, 128], strides = [1, 1, 1]} : vector<14x8x128xf32> to vector<8x8x128xf32>
    %16 = vector.extract_strided_slice %9 {offsets = [0, 0], sizes = [1, 128], strides = [1, 1]} : vector<49x128xf32> to vector<1x128xf32>
    %17 = vector.shape_cast %16 : vector<1x128xf32> to vector<128xf32>
    %18 = vector.shape_cast %17 : vector<128xf32> to vector<1x1x128xf32>
    %19 = vector.broadcast %18 : vector<1x1x128xf32> to vector<8x8x128xf32>
    %20 = arith.mulf %15, %19 : vector<8x8x128xf32>
    %21 = arith.addf %12, %20 : vector<8x8x128xf32>
    %22 = vector.extract_strided_slice %14 {offsets = [1, 0, 0], sizes = [8, 8, 128], strides = [1, 1, 1]} : vector<14x8x128xf32> to vector<8x8x128xf32>
    %23 = vector.extract_strided_slice %9 {offsets = [7, 0], sizes = [1, 128], strides = [1, 1]} : vector<49x128xf32> to vector<1x128xf32>
    %24 = vector.shape_cast %23 : vector<1x128xf32> to vector<128xf32>
    %25 = vector.shape_cast %24 : vector<128xf32> to vector<1x1x128xf32>
    %26 = vector.broadcast %25 : vector<1x1x128xf32> to vector<8x8x128xf32>
    %27 = arith.mulf %22, %26 : vector<8x8x128xf32>
    %28 = arith.addf %21, %27 : vector<8x8x128xf32>
    %29 = vector.extract_strided_slice %14 {offsets = [2, 0, 0], sizes = [8, 8, 128], strides = [1, 1, 1]} : vector<14x8x128xf32> to vector<8x8x128xf32>
    %30 = vector.extract_strided_slice %9 {offsets = [14, 0], sizes = [1, 128], strides = [1, 1]} : vector<49x128xf32> to vector<1x128xf32>
    %31 = vector.shape_cast %30 : vector<1x128xf32> to vector<128xf32>
    %32 = vector.shape_cast %31 : vector<128xf32> to vector<1x1x128xf32>
    %33 = vector.broadcast %32 : vector<1x1x128xf32> to vector<8x8x128xf32>
    %34 = arith.mulf %29, %33 : vector<8x8x128xf32>
    %35 = arith.addf %28, %34 : vector<8x8x128xf32>
    %36 = vector.extract_strided_slice %14 {offsets = [3, 0, 0], sizes = [8, 8, 128], strides = [1, 1, 1]} : vector<14x8x128xf32> to vector<8x8x128xf32>
    %37 = vector.extract_strided_slice %9 {offsets = [21, 0], sizes = [1, 128], strides = [1, 1]} : vector<49x128xf32> to vector<1x128xf32>
    %38 = vector.shape_cast %37 : vector<1x128xf32> to vector<128xf32>
    %39 = vector.shape_cast %38 : vector<128xf32> to vector<1x1x128xf32>
    %40 = vector.broadcast %39 : vector<1x1x128xf32> to vector<8x8x128xf32>
    %41 = arith.mulf %36, %40 : vector<8x8x128xf32>
    %42 = arith.addf %35, %41 : vector<8x8x128xf32>
    %43 = vector.extract_strided_slice %14 {offsets = [4, 0, 0], sizes = [8, 8, 128], strides = [1, 1, 1]} : vector<14x8x128xf32> to vector<8x8x128xf32>
    %44 = vector.extract_strided_slice %9 {offsets = [28, 0], sizes = [1, 128], strides = [1, 1]} : vector<49x128xf32> to vector<1x128xf32>
    %45 = vector.shape_cast %44 : vector<1x128xf32> to vector<128xf32>
    %46 = vector.shape_cast %45 : vector<128xf32> to vector<1x1x128xf32>
    %47 = vector.broadcast %46 : vector<1x1x128xf32> to vector<8x8x128xf32>
    %48 = arith.mulf %43, %47 : vector<8x8x128xf32>
    %49 = arith.addf %42, %48 : vector<8x8x128xf32>
    %50 = vector.extract_strided_slice %14 {offsets = [5, 0, 0], sizes = [8, 8, 128], strides = [1, 1, 1]} : vector<14x8x128xf32> to vector<8x8x128xf32>
    %51 = vector.extract_strided_slice %9 {offsets = [35, 0], sizes = [1, 128], strides = [1, 1]} : vector<49x128xf32> to vector<1x128xf32>
    %52 = vector.shape_cast %51 : vector<1x128xf32> to vector<128xf32>
    %53 = vector.shape_cast %52 : vector<128xf32> to vector<1x1x128xf32>
    %54 = vector.broadcast %53 : vector<1x1x128xf32> to vector<8x8x128xf32>
    %55 = arith.mulf %50, %54 : vector<8x8x128xf32>
    %56 = arith.addf %49, %55 : vector<8x8x128xf32>
    %57 = vector.extract_strided_slice %14 {offsets = [6, 0, 0], sizes = [8, 8, 128], strides = [1, 1, 1]} : vector<14x8x128xf32> to vector<8x8x128xf32>
    %58 = vector.extract_strided_slice %9 {offsets = [42, 0], sizes = [1, 128], strides = [1, 1]} : vector<49x128xf32> to vector<1x128xf32>
    %59 = vector.shape_cast %58 : vector<1x128xf32> to vector<128xf32>
    %60 = vector.shape_cast %59 : vector<128xf32> to vector<1x1x128xf32>
    %61 = vector.broadcast %60 : vector<1x1x128xf32> to vector<8x8x128xf32>
    %62 = arith.mulf %57, %61 : vector<8x8x128xf32>
    %63 = arith.addf %56, %62 : vector<8x8x128xf32>
    %c0_15 = arith.constant 0 : index
    %c0_16 = arith.constant 0 : index
    %c6 = arith.constant 6 : index
    %c0_17 = arith.constant 0 : index
    %64 = vector.load %arg8[%c0_15, %c0_16, %c6, %c0_17] : memref<2x14x24x128xf32, #tpu.memory_space<vmem>>, vector<1x14x8x128xf32>
    %65 = vector.shape_cast %64 : vector<1x14x8x128xf32> to vector<14x8x128xf32>
    %66 = vector.extract_strided_slice %65 {offsets = [0, 0, 0], sizes = [8, 8, 128], strides = [1, 1, 1]} : vector<14x8x128xf32> to vector<8x8x128xf32>
    %67 = vector.extract_strided_slice %9 {offsets = [1, 0], sizes = [1, 128], strides = [1, 1]} : vector<49x128xf32> to vector<1x128xf32>
    %68 = vector.shape_cast %67 : vector<1x128xf32> to vector<128xf32>
    %69 = vector.shape_cast %68 : vector<128xf32> to vector<1x1x128xf32>
    %70 = vector.broadcast %69 : vector<1x1x128xf32> to vector<8x8x128xf32>
    %71 = arith.mulf %66, %70 : vector<8x8x128xf32>
    %72 = arith.addf %63, %71 : vector<8x8x128xf32>
    %73 = vector.extract_strided_slice %65 {offsets = [1, 0, 0], sizes = [8, 8, 128], strides = [1, 1, 1]} : vector<14x8x128xf32> to vector<8x8x128xf32>
    %74 = vector.extract_strided_slice %9 {offsets = [8, 0], sizes = [1, 128], strides = [1, 1]} : vector<49x128xf32> to vector<1x128xf32>
    %75 = vector.shape_cast %74 : vector<1x128xf32> to vector<128xf32>
    %76 = vector.shape_cast %75 : vector<128xf32> to vector<1x1x128xf32>
    %77 = vector.broadcast %76 : vector<1x1x128xf32> to vector<8x8x128xf32>
    %78 = arith.mulf %73, %77 : vector<8x8x128xf32>
    %79 = arith.addf %72, %78 : vector<8x8x128xf32>
    %80 = vector.extract_strided_slice %65 {offsets = [2, 0, 0], sizes = [8, 8, 128], strides = [1, 1, 1]} : vector<14x8x128xf32> to vector<8x8x128xf32>
    %81 = vector.extract_strided_slice %9 {offsets = [15, 0], sizes = [1, 128], strides = [1, 1]} : vector<49x128xf32> to vector<1x128xf32>
    %82 = vector.shape_cast %81 : vector<1x128xf32> to vector<128xf32>
    %83 = vector.shape_cast %82 : vector<128xf32> to vector<1x1x128xf32>
    %84 = vector.broadcast %83 : vector<1x1x128xf32> to vector<8x8x128xf32>
    %85 = arith.mulf %80, %84 : vector<8x8x128xf32>
    %86 = arith.addf %79, %85 : vector<8x8x128xf32>
    %87 = vector.extract_strided_slice %65 {offsets = [3, 0, 0], sizes = [8, 8, 128], strides = [1, 1, 1]} : vector<14x8x128xf32> to vector<8x8x128xf32>
    %88 = vector.extract_strided_slice %9 {offsets = [22, 0], sizes = [1, 128], strides = [1, 1]} : vector<49x128xf32> to vector<1x128xf32>
    %89 = vector.shape_cast %88 : vector<1x128xf32> to vector<128xf32>
    %90 = vector.shape_cast %89 : vector<128xf32> to vector<1x1x128xf32>
    %91 = vector.broadcast %90 : vector<1x1x128xf32> to vector<8x8x128xf32>
    %92 = arith.mulf %87, %91 : vector<8x8x128xf32>
    %93 = arith.addf %86, %92 : vector<8x8x128xf32>
    %94 = vector.extract_strided_slice %65 {offsets = [4, 0, 0], sizes = [8, 8, 128], strides = [1, 1, 1]} : vector<14x8x128xf32> to vector<8x8x128xf32>
    %95 = vector.extract_strided_slice %9 {offsets = [29, 0], sizes = [1, 128], strides = [1, 1]} : vector<49x128xf32> to vector<1x128xf32>
    %96 = vector.shape_cast %95 : vector<1x128xf32> to vector<128xf32>
    %97 = vector.shape_cast %96 : vector<128xf32> to vector<1x1x128xf32>
    %98 = vector.broadcast %97 : vector<1x1x128xf32> to vector<8x8x128xf32>
    %99 = arith.mulf %94, %98 : vector<8x8x128xf32>
    %100 = arith.addf %93, %99 : vector<8x8x128xf32>
    %101 = vector.extract_strided_slice %65 {offsets = [5, 0, 0], sizes = [8, 8, 128], strides = [1, 1, 1]} : vector<14x8x128xf32> to vector<8x8x128xf32>
    %102 = vector.extract_strided_slice %9 {offsets = [36, 0], sizes = [1, 128], strides = [1, 1]} : vector<49x128xf32> to vector<1x128xf32>
    %103 = vector.shape_cast %102 : vector<1x128xf32> to vector<128xf32>
    %104 = vector.shape_cast %103 : vector<128xf32> to vector<1x1x128xf32>
    %105 = vector.broadcast %104 : vector<1x1x128xf32> to vector<8x8x128xf32>
    %106 = arith.mulf %101, %105 : vector<8x8x128xf32>
    %107 = arith.addf %100, %106 : vector<8x8x128xf32>
    %108 = vector.extract_strided_slice %65 {offsets = [6, 0, 0], sizes = [8, 8, 128], strides = [1, 1, 1]} : vector<14x8x128xf32> to vector<8x8x128xf32>
    %109 = vector.extract_strided_slice %9 {offsets = [43, 0], sizes = [1, 128], strides = [1, 1]} : vector<49x128xf32> to vector<1x128xf32>
    %110 = vector.shape_cast %109 : vector<1x128xf32> to vector<128xf32>
    %111 = vector.shape_cast %110 : vector<128xf32> to vector<1x1x128xf32>
    %112 = vector.broadcast %111 : vector<1x1x128xf32> to vector<8x8x128xf32>
    %113 = arith.mulf %108, %112 : vector<8x8x128xf32>
    %114 = arith.addf %107, %113 : vector<8x8x128xf32>
    %c0_18 = arith.constant 0 : index
    %c0_19 = arith.constant 0 : index
    %c7 = arith.constant 7 : index
    %c0_20 = arith.constant 0 : index
    %115 = vector.load %arg8[%c0_18, %c0_19, %c7, %c0_20] : memref<2x14x24x128xf32, #tpu.memory_space<vmem>>, vector<1x14x8x128xf32>
    %116 = vector.shape_cast %115 : vector<1x14x8x128xf32> to vector<14x8x128xf32>
    %117 = vector.extract_strided_slice %116 {offsets = [0, 0, 0], sizes = [8, 8, 128], strides = [1, 1, 1]} : vector<14x8x128xf32> to vector<8x8x128xf32>
    %118 = vector.extract_strided_slice %9 {offsets = [2, 0], sizes = [1, 128], strides = [1, 1]} : vector<49x128xf32> to vector<1x128xf32>
    %119 = vector.shape_cast %118 : vector<1x128xf32> to vector<128xf32>
    %120 = vector.shape_cast %119 : vector<128xf32> to vector<1x1x128xf32>
    %121 = vector.broadcast %120 : vector<1x1x128xf32> to vector<8x8x128xf32>
    %122 = arith.mulf %117, %121 : vector<8x8x128xf32>
    %123 = arith.addf %114, %122 : vector<8x8x128xf32>
    %124 = vector.extract_strided_slice %116 {offsets = [1, 0, 0], sizes = [8, 8, 128], strides = [1, 1, 1]} : vector<14x8x128xf32> to vector<8x8x128xf32>
    %125 = vector.extract_strided_slice %9 {offsets = [9, 0], sizes = [1, 128], strides = [1, 1]} : vector<49x128xf32> to vector<1x128xf32>
    %126 = vector.shape_cast %125 : vector<1x128xf32> to vector<128xf32>
    %127 = vector.shape_cast %126 : vector<128xf32> to vector<1x1x128xf32>
    %128 = vector.broadcast %127 : vector<1x1x128xf32> to vector<8x8x128xf32>
    %129 = arith.mulf %124, %128 : vector<8x8x128xf32>
    %130 = arith.addf %123, %129 : vector<8x8x128xf32>
    %131 = vector.extract_strided_slice %116 {offsets = [2, 0, 0], sizes = [8, 8, 128], strides = [1, 1, 1]} : vector<14x8x128xf32> to vector<8x8x128xf32>
    %132 = vector.extract_strided_slice %9 {offsets = [16, 0], sizes = [1, 128], strides = [1, 1]} : vector<49x128xf32> to vector<1x128xf32>
    %133 = vector.shape_cast %132 : vector<1x128xf32> to vector<128xf32>
    %134 = vector.shape_cast %133 : vector<128xf32> to vector<1x1x128xf32>
    %135 = vector.broadcast %134 : vector<1x1x128xf32> to vector<8x8x128xf32>
    %136 = arith.mulf %131, %135 : vector<8x8x128xf32>
    %137 = arith.addf %130, %136 : vector<8x8x128xf32>
    %138 = vector.extract_strided_slice %116 {offsets = [3, 0, 0], sizes = [8, 8, 128], strides = [1, 1, 1]} : vector<14x8x128xf32> to vector<8x8x128xf32>
    %139 = vector.extract_strided_slice %9 {offsets = [23, 0], sizes = [1, 128], strides = [1, 1]} : vector<49x128xf32> to vector<1x128xf32>
    %140 = vector.shape_cast %139 : vector<1x128xf32> to vector<128xf32>
    %141 = vector.shape_cast %140 : vector<128xf32> to vector<1x1x128xf32>
    %142 = vector.broadcast %141 : vector<1x1x128xf32> to vector<8x8x128xf32>
    %143 = arith.mulf %138, %142 : vector<8x8x128xf32>
    %144 = arith.addf %137, %143 : vector<8x8x128xf32>
    %145 = vector.extract_strided_slice %116 {offsets = [4, 0, 0], sizes = [8, 8, 128], strides = [1, 1, 1]} : vector<14x8x128xf32> to vector<8x8x128xf32>
    %146 = vector.extract_strided_slice %9 {offsets = [30, 0], sizes = [1, 128], strides = [1, 1]} : vector<49x128xf32> to vector<1x128xf32>
    %147 = vector.shape_cast %146 : vector<1x128xf32> to vector<128xf32>
    %148 = vector.shape_cast %147 : vector<128xf32> to vector<1x1x128xf32>
    %149 = vector.broadcast %148 : vector<1x1x128xf32> to vector<8x8x128xf32>
    %150 = arith.mulf %145, %149 : vector<8x8x128xf32>
    %151 = arith.addf %144, %150 : vector<8x8x128xf32>
    %152 = vector.extract_strided_slice %116 {offsets = [5, 0, 0], sizes = [8, 8, 128], strides = [1, 1, 1]} : vector<14x8x128xf32> to vector<8x8x128xf32>
    %153 = vector.extract_strided_slice %9 {offsets = [37, 0], sizes = [1, 128], strides = [1, 1]} : vector<49x128xf32> to vector<1x128xf32>
    %154 = vector.shape_cast %153 : vector<1x128xf32> to vector<128xf32>
    %155 = vector.shape_cast %154 : vector<128xf32> to vector<1x1x128xf32>
    %156 = vector.broadcast %155 : vector<1x1x128xf32> to vector<8x8x128xf32>
    %157 = arith.mulf %152, %156 : vector<8x8x128xf32>
    %158 = arith.addf %151, %157 : vector<8x8x128xf32>
    %159 = vector.extract_strided_slice %116 {offsets = [6, 0, 0], sizes = [8, 8, 128], strides = [1, 1, 1]} : vector<14x8x128xf32> to vector<8x8x128xf32>
    %160 = vector.extract_strided_slice %9 {offsets = [44, 0], sizes = [1, 128], strides = [1, 1]} : vector<49x128xf32> to vector<1x128xf32>
    %161 = vector.shape_cast %160 : vector<1x128xf32> to vector<128xf32>
    %162 = vector.shape_cast %161 : vector<128xf32> to vector<1x1x128xf32>
    %163 = vector.broadcast %162 : vector<1x1x128xf32> to vector<8x8x128xf32>
    %164 = arith.mulf %159, %163 : vector<8x8x128xf32>
    %165 = arith.addf %158, %164 : vector<8x8x128xf32>
    %c0_21 = arith.constant 0 : index
    %c0_22 = arith.constant 0 : index
    %c8_23 = arith.constant 8 : index
    %c0_24 = arith.constant 0 : index
    %166 = vector.load %arg8[%c0_21, %c0_22, %c8_23, %c0_24] : memref<2x14x24x128xf32, #tpu.memory_space<vmem>>, vector<1x14x8x128xf32>
    %167 = vector.shape_cast %166 : vector<1x14x8x128xf32> to vector<14x8x128xf32>
    %168 = vector.extract_strided_slice %167 {offsets = [0, 0, 0], sizes = [8, 8, 128], strides = [1, 1, 1]} : vector<14x8x128xf32> to vector<8x8x128xf32>
    %169 = vector.extract_strided_slice %9 {offsets = [3, 0], sizes = [1, 128], strides = [1, 1]} : vector<49x128xf32> to vector<1x128xf32>
    %170 = vector.shape_cast %169 : vector<1x128xf32> to vector<128xf32>
    %171 = vector.shape_cast %170 : vector<128xf32> to vector<1x1x128xf32>
    %172 = vector.broadcast %171 : vector<1x1x128xf32> to vector<8x8x128xf32>
    %173 = arith.mulf %168, %172 : vector<8x8x128xf32>
    %174 = arith.addf %165, %173 : vector<8x8x128xf32>
    %175 = vector.extract_strided_slice %167 {offsets = [1, 0, 0], sizes = [8, 8, 128], strides = [1, 1, 1]} : vector<14x8x128xf32> to vector<8x8x128xf32>
    %176 = vector.extract_strided_slice %9 {offsets = [10, 0], sizes = [1, 128], strides = [1, 1]} : vector<49x128xf32> to vector<1x128xf32>
    %177 = vector.shape_cast %176 : vector<1x128xf32> to vector<128xf32>
    %178 = vector.shape_cast %177 : vector<128xf32> to vector<1x1x128xf32>
    %179 = vector.broadcast %178 : vector<1x1x128xf32> to vector<8x8x128xf32>
    %180 = arith.mulf %175, %179 : vector<8x8x128xf32>
    %181 = arith.addf %174, %180 : vector<8x8x128xf32>
    %182 = vector.extract_strided_slice %167 {offsets = [2, 0, 0], sizes = [8, 8, 128], strides = [1, 1, 1]} : vector<14x8x128xf32> to vector<8x8x128xf32>
    %183 = vector.extract_strided_slice %9 {offsets = [17, 0], sizes = [1, 128], strides = [1, 1]} : vector<49x128xf32> to vector<1x128xf32>
    %184 = vector.shape_cast %183 : vector<1x128xf32> to vector<128xf32>
    %185 = vector.shape_cast %184 : vector<128xf32> to vector<1x1x128xf32>
    %186 = vector.broadcast %185 : vector<1x1x128xf32> to vector<8x8x128xf32>
    %187 = arith.mulf %182, %186 : vector<8x8x128xf32>
    %188 = arith.addf %181, %187 : vector<8x8x128xf32>
    %189 = vector.extract_strided_slice %167 {offsets = [3, 0, 0], sizes = [8, 8, 128], strides = [1, 1, 1]} : vector<14x8x128xf32> to vector<8x8x128xf32>
    %190 = vector.extract_strided_slice %9 {offsets = [24, 0], sizes = [1, 128], strides = [1, 1]} : vector<49x128xf32> to vector<1x128xf32>
    %191 = vector.shape_cast %190 : vector<1x128xf32> to vector<128xf32>
    %192 = vector.shape_cast %191 : vector<128xf32> to vector<1x1x128xf32>
    %193 = vector.broadcast %192 : vector<1x1x128xf32> to vector<8x8x128xf32>
    %194 = arith.mulf %189, %193 : vector<8x8x128xf32>
    %195 = arith.addf %188, %194 : vector<8x8x128xf32>
    %196 = vector.extract_strided_slice %167 {offsets = [4, 0, 0], sizes = [8, 8, 128], strides = [1, 1, 1]} : vector<14x8x128xf32> to vector<8x8x128xf32>
    %197 = vector.extract_strided_slice %9 {offsets = [31, 0], sizes = [1, 128], strides = [1, 1]} : vector<49x128xf32> to vector<1x128xf32>
    %198 = vector.shape_cast %197 : vector<1x128xf32> to vector<128xf32>
    %199 = vector.shape_cast %198 : vector<128xf32> to vector<1x1x128xf32>
    %200 = vector.broadcast %199 : vector<1x1x128xf32> to vector<8x8x128xf32>
    %201 = arith.mulf %196, %200 : vector<8x8x128xf32>
    %202 = arith.addf %195, %201 : vector<8x8x128xf32>
    %203 = vector.extract_strided_slice %167 {offsets = [5, 0, 0], sizes = [8, 8, 128], strides = [1, 1, 1]} : vector<14x8x128xf32> to vector<8x8x128xf32>
    %204 = vector.extract_strided_slice %9 {offsets = [38, 0], sizes = [1, 128], strides = [1, 1]} : vector<49x128xf32> to vector<1x128xf32>
    %205 = vector.shape_cast %204 : vector<1x128xf32> to vector<128xf32>
    %206 = vector.shape_cast %205 : vector<128xf32> to vector<1x1x128xf32>
    %207 = vector.broadcast %206 : vector<1x1x128xf32> to vector<8x8x128xf32>
    %208 = arith.mulf %203, %207 : vector<8x8x128xf32>
    %209 = arith.addf %202, %208 : vector<8x8x128xf32>
    %210 = vector.extract_strided_slice %167 {offsets = [6, 0, 0], sizes = [8, 8, 128], strides = [1, 1, 1]} : vector<14x8x128xf32> to vector<8x8x128xf32>
    %211 = vector.extract_strided_slice %9 {offsets = [45, 0], sizes = [1, 128], strides = [1, 1]} : vector<49x128xf32> to vector<1x128xf32>
    %212 = vector.shape_cast %211 : vector<1x128xf32> to vector<128xf32>
    %213 = vector.shape_cast %212 : vector<128xf32> to vector<1x1x128xf32>
    %214 = vector.broadcast %213 : vector<1x1x128xf32> to vector<8x8x128xf32>
    %215 = arith.mulf %210, %214 : vector<8x8x128xf32>
    %216 = arith.addf %209, %215 : vector<8x8x128xf32>
    %c0_25 = arith.constant 0 : index
    %c0_26 = arith.constant 0 : index
    %c9 = arith.constant 9 : index
    %c0_27 = arith.constant 0 : index
    %217 = vector.load %arg8[%c0_25, %c0_26, %c9, %c0_27] : memref<2x14x24x128xf32, #tpu.memory_space<vmem>>, vector<1x14x8x128xf32>
    %218 = vector.shape_cast %217 : vector<1x14x8x128xf32> to vector<14x8x128xf32>
    %219 = vector.extract_strided_slice %218 {offsets = [0, 0, 0], sizes = [8, 8, 128], strides = [1, 1, 1]} : vector<14x8x128xf32> to vector<8x8x128xf32>
    %220 = vector.extract_strided_slice %9 {offsets = [4, 0], sizes = [1, 128], strides = [1, 1]} : vector<49x128xf32> to vector<1x128xf32>
    %221 = vector.shape_cast %220 : vector<1x128xf32> to vector<128xf32>
    %222 = vector.shape_cast %221 : vector<128xf32> to vector<1x1x128xf32>
    %223 = vector.broadcast %222 : vector<1x1x128xf32> to vector<8x8x128xf32>
    %224 = arith.mulf %219, %223 : vector<8x8x128xf32>
    %225 = arith.addf %216, %224 : vector<8x8x128xf32>
    %226 = vector.extract_strided_slice %218 {offsets = [1, 0, 0], sizes = [8, 8, 128], strides = [1, 1, 1]} : vector<14x8x128xf32> to vector<8x8x128xf32>
    %227 = vector.extract_strided_slice %9 {offsets = [11, 0], sizes = [1, 128], strides = [1, 1]} : vector<49x128xf32> to vector<1x128xf32>
    %228 = vector.shape_cast %227 : vector<1x128xf32> to vector<128xf32>
    %229 = vector.shape_cast %228 : vector<128xf32> to vector<1x1x128xf32>
    %230 = vector.broadcast %229 : vector<1x1x128xf32> to vector<8x8x128xf32>
    %231 = arith.mulf %226, %230 : vector<8x8x128xf32>
    %232 = arith.addf %225, %231 : vector<8x8x128xf32>
    %233 = vector.extract_strided_slice %218 {offsets = [2, 0, 0], sizes = [8, 8, 128], strides = [1, 1, 1]} : vector<14x8x128xf32> to vector<8x8x128xf32>
    %234 = vector.extract_strided_slice %9 {offsets = [18, 0], sizes = [1, 128], strides = [1, 1]} : vector<49x128xf32> to vector<1x128xf32>
    %235 = vector.shape_cast %234 : vector<1x128xf32> to vector<128xf32>
    %236 = vector.shape_cast %235 : vector<128xf32> to vector<1x1x128xf32>
    %237 = vector.broadcast %236 : vector<1x1x128xf32> to vector<8x8x128xf32>
    %238 = arith.mulf %233, %237 : vector<8x8x128xf32>
    %239 = arith.addf %232, %238 : vector<8x8x128xf32>
    %240 = vector.extract_strided_slice %218 {offsets = [3, 0, 0], sizes = [8, 8, 128], strides = [1, 1, 1]} : vector<14x8x128xf32> to vector<8x8x128xf32>
    %241 = vector.extract_strided_slice %9 {offsets = [25, 0], sizes = [1, 128], strides = [1, 1]} : vector<49x128xf32> to vector<1x128xf32>
    %242 = vector.shape_cast %241 : vector<1x128xf32> to vector<128xf32>
    %243 = vector.shape_cast %242 : vector<128xf32> to vector<1x1x128xf32>
    %244 = vector.broadcast %243 : vector<1x1x128xf32> to vector<8x8x128xf32>
    %245 = arith.mulf %240, %244 : vector<8x8x128xf32>
    %246 = arith.addf %239, %245 : vector<8x8x128xf32>
    %247 = vector.extract_strided_slice %218 {offsets = [4, 0, 0], sizes = [8, 8, 128], strides = [1, 1, 1]} : vector<14x8x128xf32> to vector<8x8x128xf32>
    %248 = vector.extract_strided_slice %9 {offsets = [32, 0], sizes = [1, 128], strides = [1, 1]} : vector<49x128xf32> to vector<1x128xf32>
    %249 = vector.shape_cast %248 : vector<1x128xf32> to vector<128xf32>
    %250 = vector.shape_cast %249 : vector<128xf32> to vector<1x1x128xf32>
    %251 = vector.broadcast %250 : vector<1x1x128xf32> to vector<8x8x128xf32>
    %252 = arith.mulf %247, %251 : vector<8x8x128xf32>
    %253 = arith.addf %246, %252 : vector<8x8x128xf32>
    %254 = vector.extract_strided_slice %218 {offsets = [5, 0, 0], sizes = [8, 8, 128], strides = [1, 1, 1]} : vector<14x8x128xf32> to vector<8x8x128xf32>
    %255 = vector.extract_strided_slice %9 {offsets = [39, 0], sizes = [1, 128], strides = [1, 1]} : vector<49x128xf32> to vector<1x128xf32>
    %256 = vector.shape_cast %255 : vector<1x128xf32> to vector<128xf32>
    %257 = vector.shape_cast %256 : vector<128xf32> to vector<1x1x128xf32>
    %258 = vector.broadcast %257 : vector<1x1x128xf32> to vector<8x8x128xf32>
    %259 = arith.mulf %254, %258 : vector<8x8x128xf32>
    %260 = arith.addf %253, %259 : vector<8x8x128xf32>
    %261 = vector.extract_strided_slice %218 {offsets = [6, 0, 0], sizes = [8, 8, 128], strides = [1, 1, 1]} : vector<14x8x128xf32> to vector<8x8x128xf32>
    %262 = vector.extract_strided_slice %9 {offsets = [46, 0], sizes = [1, 128], strides = [1, 1]} : vector<49x128xf32> to vector<1x128xf32>
    %263 = vector.shape_cast %262 : vector<1x128xf32> to vector<128xf32>
    %264 = vector.shape_cast %263 : vector<128xf32> to vector<1x1x128xf32>
    %265 = vector.broadcast %264 : vector<1x1x128xf32> to vector<8x8x128xf32>
    %266 = arith.mulf %261, %265 : vector<8x8x128xf32>
    %267 = arith.addf %260, %266 : vector<8x8x128xf32>
    %c0_28 = arith.constant 0 : index
    %c0_29 = arith.constant 0 : index
    %c10 = arith.constant 10 : index
    %c0_30 = arith.constant 0 : index
    %268 = vector.load %arg8[%c0_28, %c0_29, %c10, %c0_30] : memref<2x14x24x128xf32, #tpu.memory_space<vmem>>, vector<1x14x8x128xf32>
    %269 = vector.shape_cast %268 : vector<1x14x8x128xf32> to vector<14x8x128xf32>
    %270 = vector.extract_strided_slice %269 {offsets = [0, 0, 0], sizes = [8, 8, 128], strides = [1, 1, 1]} : vector<14x8x128xf32> to vector<8x8x128xf32>
    %271 = vector.extract_strided_slice %9 {offsets = [5, 0], sizes = [1, 128], strides = [1, 1]} : vector<49x128xf32> to vector<1x128xf32>
    %272 = vector.shape_cast %271 : vector<1x128xf32> to vector<128xf32>
    %273 = vector.shape_cast %272 : vector<128xf32> to vector<1x1x128xf32>
    %274 = vector.broadcast %273 : vector<1x1x128xf32> to vector<8x8x128xf32>
    %275 = arith.mulf %270, %274 : vector<8x8x128xf32>
    %276 = arith.addf %267, %275 : vector<8x8x128xf32>
    %277 = vector.extract_strided_slice %269 {offsets = [1, 0, 0], sizes = [8, 8, 128], strides = [1, 1, 1]} : vector<14x8x128xf32> to vector<8x8x128xf32>
    %278 = vector.extract_strided_slice %9 {offsets = [12, 0], sizes = [1, 128], strides = [1, 1]} : vector<49x128xf32> to vector<1x128xf32>
    %279 = vector.shape_cast %278 : vector<1x128xf32> to vector<128xf32>
    %280 = vector.shape_cast %279 : vector<128xf32> to vector<1x1x128xf32>
    %281 = vector.broadcast %280 : vector<1x1x128xf32> to vector<8x8x128xf32>
    %282 = arith.mulf %277, %281 : vector<8x8x128xf32>
    %283 = arith.addf %276, %282 : vector<8x8x128xf32>
    %284 = vector.extract_strided_slice %269 {offsets = [2, 0, 0], sizes = [8, 8, 128], strides = [1, 1, 1]} : vector<14x8x128xf32> to vector<8x8x128xf32>
    %285 = vector.extract_strided_slice %9 {offsets = [19, 0], sizes = [1, 128], strides = [1, 1]} : vector<49x128xf32> to vector<1x128xf32>
    %286 = vector.shape_cast %285 : vector<1x128xf32> to vector<128xf32>
    %287 = vector.shape_cast %286 : vector<128xf32> to vector<1x1x128xf32>
    %288 = vector.broadcast %287 : vector<1x1x128xf32> to vector<8x8x128xf32>
    %289 = arith.mulf %284, %288 : vector<8x8x128xf32>
    %290 = arith.addf %283, %289 : vector<8x8x128xf32>
    %291 = vector.extract_strided_slice %269 {offsets = [3, 0, 0], sizes = [8, 8, 128], strides = [1, 1, 1]} : vector<14x8x128xf32> to vector<8x8x128xf32>
    %292 = vector.extract_strided_slice %9 {offsets = [26, 0], sizes = [1, 128], strides = [1, 1]} : vector<49x128xf32> to vector<1x128xf32>
    %293 = vector.shape_cast %292 : vector<1x128xf32> to vector<128xf32>
    %294 = vector.shape_cast %293 : vector<128xf32> to vector<1x1x128xf32>
    %295 = vector.broadcast %294 : vector<1x1x128xf32> to vector<8x8x128xf32>
    %296 = arith.mulf %291, %295 : vector<8x8x128xf32>
    %297 = arith.addf %290, %296 : vector<8x8x128xf32>
    %298 = vector.extract_strided_slice %269 {offsets = [4, 0, 0], sizes = [8, 8, 128], strides = [1, 1, 1]} : vector<14x8x128xf32> to vector<8x8x128xf32>
    %299 = vector.extract_strided_slice %9 {offsets = [33, 0], sizes = [1, 128], strides = [1, 1]} : vector<49x128xf32> to vector<1x128xf32>
    %300 = vector.shape_cast %299 : vector<1x128xf32> to vector<128xf32>
    %301 = vector.shape_cast %300 : vector<128xf32> to vector<1x1x128xf32>
    %302 = vector.broadcast %301 : vector<1x1x128xf32> to vector<8x8x128xf32>
    %303 = arith.mulf %298, %302 : vector<8x8x128xf32>
    %304 = arith.addf %297, %303 : vector<8x8x128xf32>
    %305 = vector.extract_strided_slice %269 {offsets = [5, 0, 0], sizes = [8, 8, 128], strides = [1, 1, 1]} : vector<14x8x128xf32> to vector<8x8x128xf32>
    %306 = vector.extract_strided_slice %9 {offsets = [40, 0], sizes = [1, 128], strides = [1, 1]} : vector<49x128xf32> to vector<1x128xf32>
    %307 = vector.shape_cast %306 : vector<1x128xf32> to vector<128xf32>
    %308 = vector.shape_cast %307 : vector<128xf32> to vector<1x1x128xf32>
    %309 = vector.broadcast %308 : vector<1x1x128xf32> to vector<8x8x128xf32>
    %310 = arith.mulf %305, %309 : vector<8x8x128xf32>
    %311 = arith.addf %304, %310 : vector<8x8x128xf32>
    %312 = vector.extract_strided_slice %269 {offsets = [6, 0, 0], sizes = [8, 8, 128], strides = [1, 1, 1]} : vector<14x8x128xf32> to vector<8x8x128xf32>
    %313 = vector.extract_strided_slice %9 {offsets = [47, 0], sizes = [1, 128], strides = [1, 1]} : vector<49x128xf32> to vector<1x128xf32>
    %314 = vector.shape_cast %313 : vector<1x128xf32> to vector<128xf32>
    %315 = vector.shape_cast %314 : vector<128xf32> to vector<1x1x128xf32>
    %316 = vector.broadcast %315 : vector<1x1x128xf32> to vector<8x8x128xf32>
    %317 = arith.mulf %312, %316 : vector<8x8x128xf32>
    %318 = arith.addf %311, %317 : vector<8x8x128xf32>
    %c0_31 = arith.constant 0 : index
    %c0_32 = arith.constant 0 : index
    %c11 = arith.constant 11 : index
    %c0_33 = arith.constant 0 : index
    %319 = vector.load %arg8[%c0_31, %c0_32, %c11, %c0_33] : memref<2x14x24x128xf32, #tpu.memory_space<vmem>>, vector<1x14x8x128xf32>
    %320 = vector.shape_cast %319 : vector<1x14x8x128xf32> to vector<14x8x128xf32>
    %321 = vector.extract_strided_slice %320 {offsets = [0, 0, 0], sizes = [8, 8, 128], strides = [1, 1, 1]} : vector<14x8x128xf32> to vector<8x8x128xf32>
    %322 = vector.extract_strided_slice %9 {offsets = [6, 0], sizes = [1, 128], strides = [1, 1]} : vector<49x128xf32> to vector<1x128xf32>
    %323 = vector.shape_cast %322 : vector<1x128xf32> to vector<128xf32>
    %324 = vector.shape_cast %323 : vector<128xf32> to vector<1x1x128xf32>
    %325 = vector.broadcast %324 : vector<1x1x128xf32> to vector<8x8x128xf32>
    %326 = arith.mulf %321, %325 : vector<8x8x128xf32>
    %327 = arith.addf %318, %326 : vector<8x8x128xf32>
    %328 = vector.extract_strided_slice %320 {offsets = [1, 0, 0], sizes = [8, 8, 128], strides = [1, 1, 1]} : vector<14x8x128xf32> to vector<8x8x128xf32>
    %329 = vector.extract_strided_slice %9 {offsets = [13, 0], sizes = [1, 128], strides = [1, 1]} : vector<49x128xf32> to vector<1x128xf32>
    %330 = vector.shape_cast %329 : vector<1x128xf32> to vector<128xf32>
    %331 = vector.shape_cast %330 : vector<128xf32> to vector<1x1x128xf32>
    %332 = vector.broadcast %331 : vector<1x1x128xf32> to vector<8x8x128xf32>
    %333 = arith.mulf %328, %332 : vector<8x8x128xf32>
    %334 = arith.addf %327, %333 : vector<8x8x128xf32>
    %335 = vector.extract_strided_slice %320 {offsets = [2, 0, 0], sizes = [8, 8, 128], strides = [1, 1, 1]} : vector<14x8x128xf32> to vector<8x8x128xf32>
    %336 = vector.extract_strided_slice %9 {offsets = [20, 0], sizes = [1, 128], strides = [1, 1]} : vector<49x128xf32> to vector<1x128xf32>
    %337 = vector.shape_cast %336 : vector<1x128xf32> to vector<128xf32>
    %338 = vector.shape_cast %337 : vector<128xf32> to vector<1x1x128xf32>
    %339 = vector.broadcast %338 : vector<1x1x128xf32> to vector<8x8x128xf32>
    %340 = arith.mulf %335, %339 : vector<8x8x128xf32>
    %341 = arith.addf %334, %340 : vector<8x8x128xf32>
    %342 = vector.extract_strided_slice %320 {offsets = [3, 0, 0], sizes = [8, 8, 128], strides = [1, 1, 1]} : vector<14x8x128xf32> to vector<8x8x128xf32>
    %343 = vector.extract_strided_slice %9 {offsets = [27, 0], sizes = [1, 128], strides = [1, 1]} : vector<49x128xf32> to vector<1x128xf32>
    %344 = vector.shape_cast %343 : vector<1x128xf32> to vector<128xf32>
    %345 = vector.shape_cast %344 : vector<128xf32> to vector<1x1x128xf32>
    %346 = vector.broadcast %345 : vector<1x1x128xf32> to vector<8x8x128xf32>
    %347 = arith.mulf %342, %346 : vector<8x8x128xf32>
    %348 = arith.addf %341, %347 : vector<8x8x128xf32>
    %349 = vector.extract_strided_slice %320 {offsets = [4, 0, 0], sizes = [8, 8, 128], strides = [1, 1, 1]} : vector<14x8x128xf32> to vector<8x8x128xf32>
    %350 = vector.extract_strided_slice %9 {offsets = [34, 0], sizes = [1, 128], strides = [1, 1]} : vector<49x128xf32> to vector<1x128xf32>
    %351 = vector.shape_cast %350 : vector<1x128xf32> to vector<128xf32>
    %352 = vector.shape_cast %351 : vector<128xf32> to vector<1x1x128xf32>
    %353 = vector.broadcast %352 : vector<1x1x128xf32> to vector<8x8x128xf32>
    %354 = arith.mulf %349, %353 : vector<8x8x128xf32>
    %355 = arith.addf %348, %354 : vector<8x8x128xf32>
    %356 = vector.extract_strided_slice %320 {offsets = [5, 0, 0], sizes = [8, 8, 128], strides = [1, 1, 1]} : vector<14x8x128xf32> to vector<8x8x128xf32>
    %357 = vector.extract_strided_slice %9 {offsets = [41, 0], sizes = [1, 128], strides = [1, 1]} : vector<49x128xf32> to vector<1x128xf32>
    %358 = vector.shape_cast %357 : vector<1x128xf32> to vector<128xf32>
    %359 = vector.shape_cast %358 : vector<128xf32> to vector<1x1x128xf32>
    %360 = vector.broadcast %359 : vector<1x1x128xf32> to vector<8x8x128xf32>
    %361 = arith.mulf %356, %360 : vector<8x8x128xf32>
    %362 = arith.addf %355, %361 : vector<8x8x128xf32>
    %363 = vector.extract_strided_slice %320 {offsets = [6, 0, 0], sizes = [8, 8, 128], strides = [1, 1, 1]} : vector<14x8x128xf32> to vector<8x8x128xf32>
    %364 = vector.extract_strided_slice %9 {offsets = [48, 0], sizes = [1, 128], strides = [1, 1]} : vector<49x128xf32> to vector<1x128xf32>
    %365 = vector.shape_cast %364 : vector<1x128xf32> to vector<128xf32>
    %366 = vector.shape_cast %365 : vector<128xf32> to vector<1x1x128xf32>
    %367 = vector.broadcast %366 : vector<1x1x128xf32> to vector<8x8x128xf32>
    %368 = arith.mulf %363, %367 : vector<8x8x128xf32>
    %369 = arith.addf %362, %368 : vector<8x8x128xf32>
    %370 = vector.shape_cast %11 : vector<128xf32> to vector<1x1x128xf32>
    %371 = vector.broadcast %370 : vector<1x1x128xf32> to vector<8x8x128xf32>
    %372 = arith.addf %369, %371 : vector<8x8x128xf32>
    %cst_34 = arith.constant 0.000000e+00 : f32
    %373 = vector.broadcast %cst_34 : f32 to vector<8x8x128xf32>
    %374 = arith.maximumf %372, %373 : vector<8x8x128xf32>
    %375 = vector.shape_cast %374 : vector<8x8x128xf32> to vector<64x128xf32>
    %376 = arith.truncf %375 : vector<64x128xf32> to vector<64x128xbf16>
    %c0_35 = arith.constant 0 : index
    %c0_36 = arith.constant 0 : index
    %c0_37 = arith.constant 0 : index
    %377 = vector.load %arg9[%c0_35, %c0_36, %c0_37] : memref<2x64x128xbf16, #tpu.memory_space<vmem>>, vector<1x64x128xbf16>
    %378 = vector.shape_cast %377 : vector<1x64x128xbf16> to vector<64x128xbf16>
    %379 = vector.shape_cast %376 : vector<64x128xbf16> to vector<1x64x128xbf16>
    tpu.vector_store %arg9[%c0_35, %c0_36, %c0_37], %379 {strides = array<i32>} : memref<2x64x128xbf16, #tpu.memory_space<vmem>>, vector<1x64x128xbf16>,
    %cst_38 = arith.constant 0.000000e+00 : f32
    %380 = vector.broadcast %cst_38 : f32 to vector<8x8x128xf32>
    %c1 = arith.constant 1 : index
    %c0_39 = arith.constant 0 : index
    %c5_40 = arith.constant 5 : index
    %c0_41 = arith.constant 0 : index
    %381 = vector.load %arg8[%c1, %c0_39, %c5_40, %c0_41] : memref<2x14x24x128xf32, #tpu.memory_space<vmem>>, vector<1x14x8x128xf32>
    %382 = vector.shape_cast %381 : vector<1x14x8x128xf32> to vector<14x8x128xf32>
    %383 = vector.extract_strided_slice %382 {offsets = [0, 0, 0], sizes = [8, 8, 128], strides = [1, 1, 1]} : vector<14x8x128xf32> to vector<8x8x128xf32>
    %384 = vector.extract_strided_slice %9 {offsets = [0, 0], sizes = [1, 128], strides = [1, 1]} : vector<49x128xf32> to vector<1x128xf32>
    %385 = vector.shape_cast %384 : vector<1x128xf32> to vector<128xf32>
    %386 = vector.shape_cast %385 : vector<128xf32> to vector<1x1x128xf32>
    %387 = vector.broadcast %386 : vector<1x1x128xf32> to vector<8x8x128xf32>
    %388 = arith.mulf %383, %387 : vector<8x8x128xf32>
    %389 = arith.addf %380, %388 : vector<8x8x128xf32>
    %390 = vector.extract_strided_slice %382 {offsets = [1, 0, 0], sizes = [8, 8, 128], strides = [1, 1, 1]} : vector<14x8x128xf32> to vector<8x8x128xf32>
    %391 = vector.extract_strided_slice %9 {offsets = [7, 0], sizes = [1, 128], strides = [1, 1]} : vector<49x128xf32> to vector<1x128xf32>
    %392 = vector.shape_cast %391 : vector<1x128xf32> to vector<128xf32>
    %393 = vector.shape_cast %392 : vector<128xf32> to vector<1x1x128xf32>
    %394 = vector.broadcast %393 : vector<1x1x128xf32> to vector<8x8x128xf32>
    %395 = arith.mulf %390, %394 : vector<8x8x128xf32>
    %396 = arith.addf %389, %395 : vector<8x8x128xf32>
    %397 = vector.extract_strided_slice %382 {offsets = [2, 0, 0], sizes = [8, 8, 128], strides = [1, 1, 1]} : vector<14x8x128xf32> to vector<8x8x128xf32>
    %398 = vector.extract_strided_slice %9 {offsets = [14, 0], sizes = [1, 128], strides = [1, 1]} : vector<49x128xf32> to vector<1x128xf32>
    %399 = vector.shape_cast %398 : vector<1x128xf32> to vector<128xf32>
    %400 = vector.shape_cast %399 : vector<128xf32> to vector<1x1x128xf32>
    %401 = vector.broadcast %400 : vector<1x1x128xf32> to vector<8x8x128xf32>
    %402 = arith.mulf %397, %401 : vector<8x8x128xf32>
    %403 = arith.addf %396, %402 : vector<8x8x128xf32>
    %404 = vector.extract_strided_slice %382 {offsets = [3, 0, 0], sizes = [8, 8, 128], strides = [1, 1, 1]} : vector<14x8x128xf32> to vector<8x8x128xf32>
    %405 = vector.extract_strided_slice %9 {offsets = [21, 0], sizes = [1, 128], strides = [1, 1]} : vector<49x128xf32> to vector<1x128xf32>
    %406 = vector.shape_cast %405 : vector<1x128xf32> to vector<128xf32>
    %407 = vector.shape_cast %406 : vector<128xf32> to vector<1x1x128xf32>
    %408 = vector.broadcast %407 : vector<1x1x128xf32> to vector<8x8x128xf32>
    %409 = arith.mulf %404, %408 : vector<8x8x128xf32>
    %410 = arith.addf %403, %409 : vector<8x8x128xf32>
    %411 = vector.extract_strided_slice %382 {offsets = [4, 0, 0], sizes = [8, 8, 128], strides = [1, 1, 1]} : vector<14x8x128xf32> to vector<8x8x128xf32>
    %412 = vector.extract_strided_slice %9 {offsets = [28, 0], sizes = [1, 128], strides = [1, 1]} : vector<49x128xf32> to vector<1x128xf32>
    %413 = vector.shape_cast %412 : vector<1x128xf32> to vector<128xf32>
    %414 = vector.shape_cast %413 : vector<128xf32> to vector<1x1x128xf32>
    %415 = vector.broadcast %414 : vector<1x1x128xf32> to vector<8x8x128xf32>
    %416 = arith.mulf %411, %415 : vector<8x8x128xf32>
    %417 = arith.addf %410, %416 : vector<8x8x128xf32>
    %418 = vector.extract_strided_slice %382 {offsets = [5, 0, 0], sizes = [8, 8, 128], strides = [1, 1, 1]} : vector<14x8x128xf32> to vector<8x8x128xf32>
    %419 = vector.extract_strided_slice %9 {offsets = [35, 0], sizes = [1, 128], strides = [1, 1]} : vector<49x128xf32> to vector<1x128xf32>
    %420 = vector.shape_cast %419 : vector<1x128xf32> to vector<128xf32>
    %421 = vector.shape_cast %420 : vector<128xf32> to vector<1x1x128xf32>
    %422 = vector.broadcast %421 : vector<1x1x128xf32> to vector<8x8x128xf32>
    %423 = arith.mulf %418, %422 : vector<8x8x128xf32>
    %424 = arith.addf %417, %423 : vector<8x8x128xf32>
    %425 = vector.extract_strided_slice %382 {offsets = [6, 0, 0], sizes = [8, 8, 128], strides = [1, 1, 1]} : vector<14x8x128xf32> to vector<8x8x128xf32>
    %426 = vector.extract_strided_slice %9 {offsets = [42, 0], sizes = [1, 128], strides = [1, 1]} : vector<49x128xf32> to vector<1x128xf32>
    %427 = vector.shape_cast %426 : vector<1x128xf32> to vector<128xf32>
    %428 = vector.shape_cast %427 : vector<128xf32> to vector<1x1x128xf32>
    %429 = vector.broadcast %428 : vector<1x1x128xf32> to vector<8x8x128xf32>
    %430 = arith.mulf %425, %429 : vector<8x8x128xf32>
    %431 = arith.addf %424, %430 : vector<8x8x128xf32>
    %c1_42 = arith.constant 1 : index
    %c0_43 = arith.constant 0 : index
    %c6_44 = arith.constant 6 : index
    %c0_45 = arith.constant 0 : index
    %432 = vector.load %arg8[%c1_42, %c0_43, %c6_44, %c0_45] : memref<2x14x24x128xf32, #tpu.memory_space<vmem>>, vector<1x14x8x128xf32>
    %433 = vector.shape_cast %432 : vector<1x14x8x128xf32> to vector<14x8x128xf32>
    %434 = vector.extract_strided_slice %433 {offsets = [0, 0, 0], sizes = [8, 8, 128], strides = [1, 1, 1]} : vector<14x8x128xf32> to vector<8x8x128xf32>
    %435 = vector.extract_strided_slice %9 {offsets = [1, 0], sizes = [1, 128], strides = [1, 1]} : vector<49x128xf32> to vector<1x128xf32>
    %436 = vector.shape_cast %435 : vector<1x128xf32> to vector<128xf32>
    %437 = vector.shape_cast %436 : vector<128xf32> to vector<1x1x128xf32>
    %438 = vector.broadcast %437 : vector<1x1x128xf32> to vector<8x8x128xf32>
    %439 = arith.mulf %434, %438 : vector<8x8x128xf32>
    %440 = arith.addf %431, %439 : vector<8x8x128xf32>
    %441 = vector.extract_strided_slice %433 {offsets = [1, 0, 0], sizes = [8, 8, 128], strides = [1, 1, 1]} : vector<14x8x128xf32> to vector<8x8x128xf32>
    %442 = vector.extract_strided_slice %9 {offsets = [8, 0], sizes = [1, 128], strides = [1, 1]} : vector<49x128xf32> to vector<1x128xf32>
    %443 = vector.shape_cast %442 : vector<1x128xf32> to vector<128xf32>
    %444 = vector.shape_cast %443 : vector<128xf32> to vector<1x1x128xf32>
    %445 = vector.broadcast %444 : vector<1x1x128xf32> to vector<8x8x128xf32>
    %446 = arith.mulf %441, %445 : vector<8x8x128xf32>
    %447 = arith.addf %440, %446 : vector<8x8x128xf32>
    %448 = vector.extract_strided_slice %433 {offsets = [2, 0, 0], sizes = [8, 8, 128], strides = [1, 1, 1]} : vector<14x8x128xf32> to vector<8x8x128xf32>
    %449 = vector.extract_strided_slice %9 {offsets = [15, 0], sizes = [1, 128], strides = [1, 1]} : vector<49x128xf32> to vector<1x128xf32>
    %450 = vector.shape_cast %449 : vector<1x128xf32> to vector<128xf32>
    %451 = vector.shape_cast %450 : vector<128xf32> to vector<1x1x128xf32>
    %452 = vector.broadcast %451 : vector<1x1x128xf32> to vector<8x8x128xf32>
    %453 = arith.mulf %448, %452 : vector<8x8x128xf32>
    %454 = arith.addf %447, %453 : vector<8x8x128xf32>
    %455 = vector.extract_strided_slice %433 {offsets = [3, 0, 0], sizes = [8, 8, 128], strides = [1, 1, 1]} : vector<14x8x128xf32> to vector<8x8x128xf32>
    %456 = vector.extract_strided_slice %9 {offsets = [22, 0], sizes = [1, 128], strides = [1, 1]} : vector<49x128xf32> to vector<1x128xf32>
    %457 = vector.shape_cast %456 : vector<1x128xf32> to vector<128xf32>
    %458 = vector.shape_cast %457 : vector<128xf32> to vector<1x1x128xf32>
    %459 = vector.broadcast %458 : vector<1x1x128xf32> to vector<8x8x128xf32>
    %460 = arith.mulf %455, %459 : vector<8x8x128xf32>
    %461 = arith.addf %454, %460 : vector<8x8x128xf32>
    %462 = vector.extract_strided_slice %433 {offsets = [4, 0, 0], sizes = [8, 8, 128], strides = [1, 1, 1]} : vector<14x8x128xf32> to vector<8x8x128xf32>
    %463 = vector.extract_strided_slice %9 {offsets = [29, 0], sizes = [1, 128], strides = [1, 1]} : vector<49x128xf32> to vector<1x128xf32>
    %464 = vector.shape_cast %463 : vector<1x128xf32> to vector<128xf32>
    %465 = vector.shape_cast %464 : vector<128xf32> to vector<1x1x128xf32>
    %466 = vector.broadcast %465 : vector<1x1x128xf32> to vector<8x8x128xf32>
    %467 = arith.mulf %462, %466 : vector<8x8x128xf32>
    %468 = arith.addf %461, %467 : vector<8x8x128xf32>
    %469 = vector.extract_strided_slice %433 {offsets = [5, 0, 0], sizes = [8, 8, 128], strides = [1, 1, 1]} : vector<14x8x128xf32> to vector<8x8x128xf32>
    %470 = vector.extract_strided_slice %9 {offsets = [36, 0], sizes = [1, 128], strides = [1, 1]} : vector<49x128xf32> to vector<1x128xf32>
    %471 = vector.shape_cast %470 : vector<1x128xf32> to vector<128xf32>
    %472 = vector.shape_cast %471 : vector<128xf32> to vector<1x1x128xf32>
    %473 = vector.broadcast %472 : vector<1x1x128xf32> to vector<8x8x128xf32>
    %474 = arith.mulf %469, %473 : vector<8x8x128xf32>
    %475 = arith.addf %468, %474 : vector<8x8x128xf32>
    %476 = vector.extract_strided_slice %433 {offsets = [6, 0, 0], sizes = [8, 8, 128], strides = [1, 1, 1]} : vector<14x8x128xf32> to vector<8x8x128xf32>
    %477 = vector.extract_strided_slice %9 {offsets = [43, 0], sizes = [1, 128], strides = [1, 1]} : vector<49x128xf32> to vector<1x128xf32>
    %478 = vector.shape_cast %477 : vector<1x128xf32> to vector<128xf32>
    %479 = vector.shape_cast %478 : vector<128xf32> to vector<1x1x128xf32>
    %480 = vector.broadcast %479 : vector<1x1x128xf32> to vector<8x8x128xf32>
    %481 = arith.mulf %476, %480 : vector<8x8x128xf32>
    %482 = arith.addf %475, %481 : vector<8x8x128xf32>
    %c1_46 = arith.constant 1 : index
    %c0_47 = arith.constant 0 : index
    %c7_48 = arith.constant 7 : index
    %c0_49 = arith.constant 0 : index
    %483 = vector.load %arg8[%c1_46, %c0_47, %c7_48, %c0_49] : memref<2x14x24x128xf32, #tpu.memory_space<vmem>>, vector<1x14x8x128xf32>
    %484 = vector.shape_cast %483 : vector<1x14x8x128xf32> to vector<14x8x128xf32>
    %485 = vector.extract_strided_slice %484 {offsets = [0, 0, 0], sizes = [8, 8, 128], strides = [1, 1, 1]} : vector<14x8x128xf32> to vector<8x8x128xf32>
    %486 = vector.extract_strided_slice %9 {offsets = [2, 0], sizes = [1, 128], strides = [1, 1]} : vector<49x128xf32> to vector<1x128xf32>
    %487 = vector.shape_cast %486 : vector<1x128xf32> to vector<128xf32>
    %488 = vector.shape_cast %487 : vector<128xf32> to vector<1x1x128xf32>
    %489 = vector.broadcast %488 : vector<1x1x128xf32> to vector<8x8x128xf32>
    %490 = arith.mulf %485, %489 : vector<8x8x128xf32>
    %491 = arith.addf %482, %490 : vector<8x8x128xf32>
    %492 = vector.extract_strided_slice %484 {offsets = [1, 0, 0], sizes = [8, 8, 128], strides = [1, 1, 1]} : vector<14x8x128xf32> to vector<8x8x128xf32>
    %493 = vector.extract_strided_slice %9 {offsets = [9, 0], sizes = [1, 128], strides = [1, 1]} : vector<49x128xf32> to vector<1x128xf32>
    %494 = vector.shape_cast %493 : vector<1x128xf32> to vector<128xf32>
    %495 = vector.shape_cast %494 : vector<128xf32> to vector<1x1x128xf32>
    %496 = vector.broadcast %495 : vector<1x1x128xf32> to vector<8x8x128xf32>
    %497 = arith.mulf %492, %496 : vector<8x8x128xf32>
    %498 = arith.addf %491, %497 : vector<8x8x128xf32>
    %499 = vector.extract_strided_slice %484 {offsets = [2, 0, 0], sizes = [8, 8, 128], strides = [1, 1, 1]} : vector<14x8x128xf32> to vector<8x8x128xf32>
    %500 = vector.extract_strided_slice %9 {offsets = [16, 0], sizes = [1, 128], strides = [1, 1]} : vector<49x128xf32> to vector<1x128xf32>
    %501 = vector.shape_cast %500 : vector<1x128xf32> to vector<128xf32>
    %502 = vector.shape_cast %501 : vector<128xf32> to vector<1x1x128xf32>
    %503 = vector.broadcast %502 : vector<1x1x128xf32> to vector<8x8x128xf32>
    %504 = arith.mulf %499, %503 : vector<8x8x128xf32>
    %505 = arith.addf %498, %504 : vector<8x8x128xf32>
    %506 = vector.extract_strided_slice %484 {offsets = [3, 0, 0], sizes = [8, 8, 128], strides = [1, 1, 1]} : vector<14x8x128xf32> to vector<8x8x128xf32>
    %507 = vector.extract_strided_slice %9 {offsets = [23, 0], sizes = [1, 128], strides = [1, 1]} : vector<49x128xf32> to vector<1x128xf32>
    %508 = vector.shape_cast %507 : vector<1x128xf32> to vector<128xf32>
    %509 = vector.shape_cast %508 : vector<128xf32> to vector<1x1x128xf32>
    %510 = vector.broadcast %509 : vector<1x1x128xf32> to vector<8x8x128xf32>
    %511 = arith.mulf %506, %510 : vector<8x8x128xf32>
    %512 = arith.addf %505, %511 : vector<8x8x128xf32>
    %513 = vector.extract_strided_slice %484 {offsets = [4, 0, 0], sizes = [8, 8, 128], strides = [1, 1, 1]} : vector<14x8x128xf32> to vector<8x8x128xf32>
    %514 = vector.extract_strided_slice %9 {offsets = [30, 0], sizes = [1, 128], strides = [1, 1]} : vector<49x128xf32> to vector<1x128xf32>
    %515 = vector.shape_cast %514 : vector<1x128xf32> to vector<128xf32>
    %516 = vector.shape_cast %515 : vector<128xf32> to vector<1x1x128xf32>
    %517 = vector.broadcast %516 : vector<1x1x128xf32> to vector<8x8x128xf32>
    %518 = arith.mulf %513, %517 : vector<8x8x128xf32>
    %519 = arith.addf %512, %518 : vector<8x8x128xf32>
    %520 = vector.extract_strided_slice %484 {offsets = [5, 0, 0], sizes = [8, 8, 128], strides = [1, 1, 1]} : vector<14x8x128xf32> to vector<8x8x128xf32>
    %521 = vector.extract_strided_slice %9 {offsets = [37, 0], sizes = [1, 128], strides = [1, 1]} : vector<49x128xf32> to vector<1x128xf32>
    %522 = vector.shape_cast %521 : vector<1x128xf32> to vector<128xf32>
    %523 = vector.shape_cast %522 : vector<128xf32> to vector<1x1x128xf32>
    %524 = vector.broadcast %523 : vector<1x1x128xf32> to vector<8x8x128xf32>
    %525 = arith.mulf %520, %524 : vector<8x8x128xf32>
    %526 = arith.addf %519, %525 : vector<8x8x128xf32>
    %527 = vector.extract_strided_slice %484 {offsets = [6, 0, 0], sizes = [8, 8, 128], strides = [1, 1, 1]} : vector<14x8x128xf32> to vector<8x8x128xf32>
    %528 = vector.extract_strided_slice %9 {offsets = [44, 0], sizes = [1, 128], strides = [1, 1]} : vector<49x128xf32> to vector<1x128xf32>
    %529 = vector.shape_cast %528 : vector<1x128xf32> to vector<128xf32>
    %530 = vector.shape_cast %529 : vector<128xf32> to vector<1x1x128xf32>
    %531 = vector.broadcast %530 : vector<1x1x128xf32> to vector<8x8x128xf32>
    %532 = arith.mulf %527, %531 : vector<8x8x128xf32>
    %533 = arith.addf %526, %532 : vector<8x8x128xf32>
    %c1_50 = arith.constant 1 : index
    %c0_51 = arith.constant 0 : index
    %c8_52 = arith.constant 8 : index
    %c0_53 = arith.constant 0 : index
    %534 = vector.load %arg8[%c1_50, %c0_51, %c8_52, %c0_53] : memref<2x14x24x128xf32, #tpu.memory_space<vmem>>, vector<1x14x8x128xf32>
    %535 = vector.shape_cast %534 : vector<1x14x8x128xf32> to vector<14x8x128xf32>
    %536 = vector.extract_strided_slice %535 {offsets = [0, 0, 0], sizes = [8, 8, 128], strides = [1, 1, 1]} : vector<14x8x128xf32> to vector<8x8x128xf32>
    %537 = vector.extract_strided_slice %9 {offsets = [3, 0], sizes = [1, 128], strides = [1, 1]} : vector<49x128xf32> to vector<1x128xf32>
    %538 = vector.shape_cast %537 : vector<1x128xf32> to vector<128xf32>
    %539 = vector.shape_cast %538 : vector<128xf32> to vector<1x1x128xf32>
    %540 = vector.broadcast %539 : vector<1x1x128xf32> to vector<8x8x128xf32>
    %541 = arith.mulf %536, %540 : vector<8x8x128xf32>
    %542 = arith.addf %533, %541 : vector<8x8x128xf32>
    %543 = vector.extract_strided_slice %535 {offsets = [1, 0, 0], sizes = [8, 8, 128], strides = [1, 1, 1]} : vector<14x8x128xf32> to vector<8x8x128xf32>
    %544 = vector.extract_strided_slice %9 {offsets = [10, 0], sizes = [1, 128], strides = [1, 1]} : vector<49x128xf32> to vector<1x128xf32>
    %545 = vector.shape_cast %544 : vector<1x128xf32> to vector<128xf32>
    %546 = vector.shape_cast %545 : vector<128xf32> to vector<1x1x128xf32>
    %547 = vector.broadcast %546 : vector<1x1x128xf32> to vector<8x8x128xf32>
    %548 = arith.mulf %543, %547 : vector<8x8x128xf32>
    %549 = arith.addf %542, %548 : vector<8x8x128xf32>
    %550 = vector.extract_strided_slice %535 {offsets = [2, 0, 0], sizes = [8, 8, 128], strides = [1, 1, 1]} : vector<14x8x128xf32> to vector<8x8x128xf32>
    %551 = vector.extract_strided_slice %9 {offsets = [17, 0], sizes = [1, 128], strides = [1, 1]} : vector<49x128xf32> to vector<1x128xf32>
    %552 = vector.shape_cast %551 : vector<1x128xf32> to vector<128xf32>
    %553 = vector.shape_cast %552 : vector<128xf32> to vector<1x1x128xf32>
    %554 = vector.broadcast %553 : vector<1x1x128xf32> to vector<8x8x128xf32>
    %555 = arith.mulf %550, %554 : vector<8x8x128xf32>
    %556 = arith.addf %549, %555 : vector<8x8x128xf32>
    %557 = vector.extract_strided_slice %535 {offsets = [3, 0, 0], sizes = [8, 8, 128], strides = [1, 1, 1]} : vector<14x8x128xf32> to vector<8x8x128xf32>
    %558 = vector.extract_strided_slice %9 {offsets = [24, 0], sizes = [1, 128], strides = [1, 1]} : vector<49x128xf32> to vector<1x128xf32>
    %559 = vector.shape_cast %558 : vector<1x128xf32> to vector<128xf32>
    %560 = vector.shape_cast %559 : vector<128xf32> to vector<1x1x128xf32>
    %561 = vector.broadcast %560 : vector<1x1x128xf32> to vector<8x8x128xf32>
    %562 = arith.mulf %557, %561 : vector<8x8x128xf32>
    %563 = arith.addf %556, %562 : vector<8x8x128xf32>
    %564 = vector.extract_strided_slice %535 {offsets = [4, 0, 0], sizes = [8, 8, 128], strides = [1, 1, 1]} : vector<14x8x128xf32> to vector<8x8x128xf32>
    %565 = vector.extract_strided_slice %9 {offsets = [31, 0], sizes = [1, 128], strides = [1, 1]} : vector<49x128xf32> to vector<1x128xf32>
    %566 = vector.shape_cast %565 : vector<1x128xf32> to vector<128xf32>
    %567 = vector.shape_cast %566 : vector<128xf32> to vector<1x1x128xf32>
    %568 = vector.broadcast %567 : vector<1x1x128xf32> to vector<8x8x128xf32>
    %569 = arith.mulf %564, %568 : vector<8x8x128xf32>
    %570 = arith.addf %563, %569 : vector<8x8x128xf32>
    %571 = vector.extract_strided_slice %535 {offsets = [5, 0, 0], sizes = [8, 8, 128], strides = [1, 1, 1]} : vector<14x8x128xf32> to vector<8x8x128xf32>
    %572 = vector.extract_strided_slice %9 {offsets = [38, 0], sizes = [1, 128], strides = [1, 1]} : vector<49x128xf32> to vector<1x128xf32>
    %573 = vector.shape_cast %572 : vector<1x128xf32> to vector<128xf32>
    %574 = vector.shape_cast %573 : vector<128xf32> to vector<1x1x128xf32>
    %575 = vector.broadcast %574 : vector<1x1x128xf32> to vector<8x8x128xf32>
    %576 = arith.mulf %571, %575 : vector<8x8x128xf32>
    %577 = arith.addf %570, %576 : vector<8x8x128xf32>
    %578 = vector.extract_strided_slice %535 {offsets = [6, 0, 0], sizes = [8, 8, 128], strides = [1, 1, 1]} : vector<14x8x128xf32> to vector<8x8x128xf32>
    %579 = vector.extract_strided_slice %9 {offsets = [45, 0], sizes = [1, 128], strides = [1, 1]} : vector<49x128xf32> to vector<1x128xf32>
    %580 = vector.shape_cast %579 : vector<1x128xf32> to vector<128xf32>
    %581 = vector.shape_cast %580 : vector<128xf32> to vector<1x1x128xf32>
    %582 = vector.broadcast %581 : vector<1x1x128xf32> to vector<8x8x128xf32>
    %583 = arith.mulf %578, %582 : vector<8x8x128xf32>
    %584 = arith.addf %577, %583 : vector<8x8x128xf32>
    %c1_54 = arith.constant 1 : index
    %c0_55 = arith.constant 0 : index
    %c9_56 = arith.constant 9 : index
    %c0_57 = arith.constant 0 : index
    %585 = vector.load %arg8[%c1_54, %c0_55, %c9_56, %c0_57] : memref<2x14x24x128xf32, #tpu.memory_space<vmem>>, vector<1x14x8x128xf32>
    %586 = vector.shape_cast %585 : vector<1x14x8x128xf32> to vector<14x8x128xf32>
    %587 = vector.extract_strided_slice %586 {offsets = [0, 0, 0], sizes = [8, 8, 128], strides = [1, 1, 1]} : vector<14x8x128xf32> to vector<8x8x128xf32>
    %588 = vector.extract_strided_slice %9 {offsets = [4, 0], sizes = [1, 128], strides = [1, 1]} : vector<49x128xf32> to vector<1x128xf32>
    %589 = vector.shape_cast %588 : vector<1x128xf32> to vector<128xf32>
    %590 = vector.shape_cast %589 : vector<128xf32> to vector<1x1x128xf32>
    %591 = vector.broadcast %590 : vector<1x1x128xf32> to vector<8x8x128xf32>
    %592 = arith.mulf %587, %591 : vector<8x8x128xf32>
    %593 = arith.addf %584, %592 : vector<8x8x128xf32>
    %594 = vector.extract_strided_slice %586 {offsets = [1, 0, 0], sizes = [8, 8, 128], strides = [1, 1, 1]} : vector<14x8x128xf32> to vector<8x8x128xf32>
    %595 = vector.extract_strided_slice %9 {offsets = [11, 0], sizes = [1, 128], strides = [1, 1]} : vector<49x128xf32> to vector<1x128xf32>
    %596 = vector.shape_cast %595 : vector<1x128xf32> to vector<128xf32>
    %597 = vector.shape_cast %596 : vector<128xf32> to vector<1x1x128xf32>
    %598 = vector.broadcast %597 : vector<1x1x128xf32> to vector<8x8x128xf32>
    %599 = arith.mulf %594, %598 : vector<8x8x128xf32>
    %600 = arith.addf %593, %599 : vector<8x8x128xf32>
    %601 = vector.extract_strided_slice %586 {offsets = [2, 0, 0], sizes = [8, 8, 128], strides = [1, 1, 1]} : vector<14x8x128xf32> to vector<8x8x128xf32>
    %602 = vector.extract_strided_slice %9 {offsets = [18, 0], sizes = [1, 128], strides = [1, 1]} : vector<49x128xf32> to vector<1x128xf32>
    %603 = vector.shape_cast %602 : vector<1x128xf32> to vector<128xf32>
    %604 = vector.shape_cast %603 : vector<128xf32> to vector<1x1x128xf32>
    %605 = vector.broadcast %604 : vector<1x1x128xf32> to vector<8x8x128xf32>
    %606 = arith.mulf %601, %605 : vector<8x8x128xf32>
    %607 = arith.addf %600, %606 : vector<8x8x128xf32>
    %608 = vector.extract_strided_slice %586 {offsets = [3, 0, 0], sizes = [8, 8, 128], strides = [1, 1, 1]} : vector<14x8x128xf32> to vector<8x8x128xf32>
    %609 = vector.extract_strided_slice %9 {offsets = [25, 0], sizes = [1, 128], strides = [1, 1]} : vector<49x128xf32> to vector<1x128xf32>
    %610 = vector.shape_cast %609 : vector<1x128xf32> to vector<128xf32>
    %611 = vector.shape_cast %610 : vector<128xf32> to vector<1x1x128xf32>
    %612 = vector.broadcast %611 : vector<1x1x128xf32> to vector<8x8x128xf32>
    %613 = arith.mulf %608, %612 : vector<8x8x128xf32>
    %614 = arith.addf %607, %613 : vector<8x8x128xf32>
    %615 = vector.extract_strided_slice %586 {offsets = [4, 0, 0], sizes = [8, 8, 128], strides = [1, 1, 1]} : vector<14x8x128xf32> to vector<8x8x128xf32>
    %616 = vector.extract_strided_slice %9 {offsets = [32, 0], sizes = [1, 128], strides = [1, 1]} : vector<49x128xf32> to vector<1x128xf32>
    %617 = vector.shape_cast %616 : vector<1x128xf32> to vector<128xf32>
    %618 = vector.shape_cast %617 : vector<128xf32> to vector<1x1x128xf32>
    %619 = vector.broadcast %618 : vector<1x1x128xf32> to vector<8x8x128xf32>
    %620 = arith.mulf %615, %619 : vector<8x8x128xf32>
    %621 = arith.addf %614, %620 : vector<8x8x128xf32>
    %622 = vector.extract_strided_slice %586 {offsets = [5, 0, 0], sizes = [8, 8, 128], strides = [1, 1, 1]} : vector<14x8x128xf32> to vector<8x8x128xf32>
    %623 = vector.extract_strided_slice %9 {offsets = [39, 0], sizes = [1, 128], strides = [1, 1]} : vector<49x128xf32> to vector<1x128xf32>
    %624 = vector.shape_cast %623 : vector<1x128xf32> to vector<128xf32>
    %625 = vector.shape_cast %624 : vector<128xf32> to vector<1x1x128xf32>
    %626 = vector.broadcast %625 : vector<1x1x128xf32> to vector<8x8x128xf32>
    %627 = arith.mulf %622, %626 : vector<8x8x128xf32>
    %628 = arith.addf %621, %627 : vector<8x8x128xf32>
    %629 = vector.extract_strided_slice %586 {offsets = [6, 0, 0], sizes = [8, 8, 128], strides = [1, 1, 1]} : vector<14x8x128xf32> to vector<8x8x128xf32>
    %630 = vector.extract_strided_slice %9 {offsets = [46, 0], sizes = [1, 128], strides = [1, 1]} : vector<49x128xf32> to vector<1x128xf32>
    %631 = vector.shape_cast %630 : vector<1x128xf32> to vector<128xf32>
    %632 = vector.shape_cast %631 : vector<128xf32> to vector<1x1x128xf32>
    %633 = vector.broadcast %632 : vector<1x1x128xf32> to vector<8x8x128xf32>
    %634 = arith.mulf %629, %633 : vector<8x8x128xf32>
    %635 = arith.addf %628, %634 : vector<8x8x128xf32>
    %c1_58 = arith.constant 1 : index
    %c0_59 = arith.constant 0 : index
    %c10_60 = arith.constant 10 : index
    %c0_61 = arith.constant 0 : index
    %636 = vector.load %arg8[%c1_58, %c0_59, %c10_60, %c0_61] : memref<2x14x24x128xf32, #tpu.memory_space<vmem>>, vector<1x14x8x128xf32>
    %637 = vector.shape_cast %636 : vector<1x14x8x128xf32> to vector<14x8x128xf32>
    %638 = vector.extract_strided_slice %637 {offsets = [0, 0, 0], sizes = [8, 8, 128], strides = [1, 1, 1]} : vector<14x8x128xf32> to vector<8x8x128xf32>
    %639 = vector.extract_strided_slice %9 {offsets = [5, 0], sizes = [1, 128], strides = [1, 1]} : vector<49x128xf32> to vector<1x128xf32>
    %640 = vector.shape_cast %639 : vector<1x128xf32> to vector<128xf32>
    %641 = vector.shape_cast %640 : vector<128xf32> to vector<1x1x128xf32>
    %642 = vector.broadcast %641 : vector<1x1x128xf32> to vector<8x8x128xf32>
    %643 = arith.mulf %638, %642 : vector<8x8x128xf32>
    %644 = arith.addf %635, %643 : vector<8x8x128xf32>
    %645 = vector.extract_strided_slice %637 {offsets = [1, 0, 0], sizes = [8, 8, 128], strides = [1, 1, 1]} : vector<14x8x128xf32> to vector<8x8x128xf32>
    %646 = vector.extract_strided_slice %9 {offsets = [12, 0], sizes = [1, 128], strides = [1, 1]} : vector<49x128xf32> to vector<1x128xf32>
    %647 = vector.shape_cast %646 : vector<1x128xf32> to vector<128xf32>
    %648 = vector.shape_cast %647 : vector<128xf32> to vector<1x1x128xf32>
    %649 = vector.broadcast %648 : vector<1x1x128xf32> to vector<8x8x128xf32>
    %650 = arith.mulf %645, %649 : vector<8x8x128xf32>
    %651 = arith.addf %644, %650 : vector<8x8x128xf32>
    %652 = vector.extract_strided_slice %637 {offsets = [2, 0, 0], sizes = [8, 8, 128], strides = [1, 1, 1]} : vector<14x8x128xf32> to vector<8x8x128xf32>
    %653 = vector.extract_strided_slice %9 {offsets = [19, 0], sizes = [1, 128], strides = [1, 1]} : vector<49x128xf32> to vector<1x128xf32>
    %654 = vector.shape_cast %653 : vector<1x128xf32> to vector<128xf32>
    %655 = vector.shape_cast %654 : vector<128xf32> to vector<1x1x128xf32>
    %656 = vector.broadcast %655 : vector<1x1x128xf32> to vector<8x8x128xf32>
    %657 = arith.mulf %652, %656 : vector<8x8x128xf32>
    %658 = arith.addf %651, %657 : vector<8x8x128xf32>
    %659 = vector.extract_strided_slice %637 {offsets = [3, 0, 0], sizes = [8, 8, 128], strides = [1, 1, 1]} : vector<14x8x128xf32> to vector<8x8x128xf32>
    %660 = vector.extract_strided_slice %9 {offsets = [26, 0], sizes = [1, 128], strides = [1, 1]} : vector<49x128xf32> to vector<1x128xf32>
    %661 = vector.shape_cast %660 : vector<1x128xf32> to vector<128xf32>
    %662 = vector.shape_cast %661 : vector<128xf32> to vector<1x1x128xf32>
    %663 = vector.broadcast %662 : vector<1x1x128xf32> to vector<8x8x128xf32>
    %664 = arith.mulf %659, %663 : vector<8x8x128xf32>
    %665 = arith.addf %658, %664 : vector<8x8x128xf32>
    %666 = vector.extract_strided_slice %637 {offsets = [4, 0, 0], sizes = [8, 8, 128], strides = [1, 1, 1]} : vector<14x8x128xf32> to vector<8x8x128xf32>
    %667 = vector.extract_strided_slice %9 {offsets = [33, 0], sizes = [1, 128], strides = [1, 1]} : vector<49x128xf32> to vector<1x128xf32>
    %668 = vector.shape_cast %667 : vector<1x128xf32> to vector<128xf32>
    %669 = vector.shape_cast %668 : vector<128xf32> to vector<1x1x128xf32>
    %670 = vector.broadcast %669 : vector<1x1x128xf32> to vector<8x8x128xf32>
    %671 = arith.mulf %666, %670 : vector<8x8x128xf32>
    %672 = arith.addf %665, %671 : vector<8x8x128xf32>
    %673 = vector.extract_strided_slice %637 {offsets = [5, 0, 0], sizes = [8, 8, 128], strides = [1, 1, 1]} : vector<14x8x128xf32> to vector<8x8x128xf32>
    %674 = vector.extract_strided_slice %9 {offsets = [40, 0], sizes = [1, 128], strides = [1, 1]} : vector<49x128xf32> to vector<1x128xf32>
    %675 = vector.shape_cast %674 : vector<1x128xf32> to vector<128xf32>
    %676 = vector.shape_cast %675 : vector<128xf32> to vector<1x1x128xf32>
    %677 = vector.broadcast %676 : vector<1x1x128xf32> to vector<8x8x128xf32>
    %678 = arith.mulf %673, %677 : vector<8x8x128xf32>
    %679 = arith.addf %672, %678 : vector<8x8x128xf32>
    %680 = vector.extract_strided_slice %637 {offsets = [6, 0, 0], sizes = [8, 8, 128], strides = [1, 1, 1]} : vector<14x8x128xf32> to vector<8x8x128xf32>
    %681 = vector.extract_strided_slice %9 {offsets = [47, 0], sizes = [1, 128], strides = [1, 1]} : vector<49x128xf32> to vector<1x128xf32>
    %682 = vector.shape_cast %681 : vector<1x128xf32> to vector<128xf32>
    %683 = vector.shape_cast %682 : vector<128xf32> to vector<1x1x128xf32>
    %684 = vector.broadcast %683 : vector<1x1x128xf32> to vector<8x8x128xf32>
    %685 = arith.mulf %680, %684 : vector<8x8x128xf32>
    %686 = arith.addf %679, %685 : vector<8x8x128xf32>
    %c1_62 = arith.constant 1 : index
    %c0_63 = arith.constant 0 : index
    %c11_64 = arith.constant 11 : index
    %c0_65 = arith.constant 0 : index
    %687 = vector.load %arg8[%c1_62, %c0_63, %c11_64, %c0_65] : memref<2x14x24x128xf32, #tpu.memory_space<vmem>>, vector<1x14x8x128xf32>
    %688 = vector.shape_cast %687 : vector<1x14x8x128xf32> to vector<14x8x128xf32>
    %689 = vector.extract_strided_slice %688 {offsets = [0, 0, 0], sizes = [8, 8, 128], strides = [1, 1, 1]} : vector<14x8x128xf32> to vector<8x8x128xf32>
    %690 = vector.extract_strided_slice %9 {offsets = [6, 0], sizes = [1, 128], strides = [1, 1]} : vector<49x128xf32> to vector<1x128xf32>
    %691 = vector.shape_cast %690 : vector<1x128xf32> to vector<128xf32>
    %692 = vector.shape_cast %691 : vector<128xf32> to vector<1x1x128xf32>
    %693 = vector.broadcast %692 : vector<1x1x128xf32> to vector<8x8x128xf32>
    %694 = arith.mulf %689, %693 : vector<8x8x128xf32>
    %695 = arith.addf %686, %694 : vector<8x8x128xf32>
    %696 = vector.extract_strided_slice %688 {offsets = [1, 0, 0], sizes = [8, 8, 128], strides = [1, 1, 1]} : vector<14x8x128xf32> to vector<8x8x128xf32>
    %697 = vector.extract_strided_slice %9 {offsets = [13, 0], sizes = [1, 128], strides = [1, 1]} : vector<49x128xf32> to vector<1x128xf32>
    %698 = vector.shape_cast %697 : vector<1x128xf32> to vector<128xf32>
    %699 = vector.shape_cast %698 : vector<128xf32> to vector<1x1x128xf32>
    %700 = vector.broadcast %699 : vector<1x1x128xf32> to vector<8x8x128xf32>
    %701 = arith.mulf %696, %700 : vector<8x8x128xf32>
    %702 = arith.addf %695, %701 : vector<8x8x128xf32>
    %703 = vector.extract_strided_slice %688 {offsets = [2, 0, 0], sizes = [8, 8, 128], strides = [1, 1, 1]} : vector<14x8x128xf32> to vector<8x8x128xf32>
    %704 = vector.extract_strided_slice %9 {offsets = [20, 0], sizes = [1, 128], strides = [1, 1]} : vector<49x128xf32> to vector<1x128xf32>
    %705 = vector.shape_cast %704 : vector<1x128xf32> to vector<128xf32>
    %706 = vector.shape_cast %705 : vector<128xf32> to vector<1x1x128xf32>
    %707 = vector.broadcast %706 : vector<1x1x128xf32> to vector<8x8x128xf32>
    %708 = arith.mulf %703, %707 : vector<8x8x128xf32>
    %709 = arith.addf %702, %708 : vector<8x8x128xf32>
    %710 = vector.extract_strided_slice %688 {offsets = [3, 0, 0], sizes = [8, 8, 128], strides = [1, 1, 1]} : vector<14x8x128xf32> to vector<8x8x128xf32>
    %711 = vector.extract_strided_slice %9 {offsets = [27, 0], sizes = [1, 128], strides = [1, 1]} : vector<49x128xf32> to vector<1x128xf32>
    %712 = vector.shape_cast %711 : vector<1x128xf32> to vector<128xf32>
    %713 = vector.shape_cast %712 : vector<128xf32> to vector<1x1x128xf32>
    %714 = vector.broadcast %713 : vector<1x1x128xf32> to vector<8x8x128xf32>
    %715 = arith.mulf %710, %714 : vector<8x8x128xf32>
    %716 = arith.addf %709, %715 : vector<8x8x128xf32>
    %717 = vector.extract_strided_slice %688 {offsets = [4, 0, 0], sizes = [8, 8, 128], strides = [1, 1, 1]} : vector<14x8x128xf32> to vector<8x8x128xf32>
    %718 = vector.extract_strided_slice %9 {offsets = [34, 0], sizes = [1, 128], strides = [1, 1]} : vector<49x128xf32> to vector<1x128xf32>
    %719 = vector.shape_cast %718 : vector<1x128xf32> to vector<128xf32>
    %720 = vector.shape_cast %719 : vector<128xf32> to vector<1x1x128xf32>
    %721 = vector.broadcast %720 : vector<1x1x128xf32> to vector<8x8x128xf32>
    %722 = arith.mulf %717, %721 : vector<8x8x128xf32>
    %723 = arith.addf %716, %722 : vector<8x8x128xf32>
    %724 = vector.extract_strided_slice %688 {offsets = [5, 0, 0], sizes = [8, 8, 128], strides = [1, 1, 1]} : vector<14x8x128xf32> to vector<8x8x128xf32>
    %725 = vector.extract_strided_slice %9 {offsets = [41, 0], sizes = [1, 128], strides = [1, 1]} : vector<49x128xf32> to vector<1x128xf32>
    %726 = vector.shape_cast %725 : vector<1x128xf32> to vector<128xf32>
    %727 = vector.shape_cast %726 : vector<128xf32> to vector<1x1x128xf32>
    %728 = vector.broadcast %727 : vector<1x1x128xf32> to vector<8x8x128xf32>
    %729 = arith.mulf %724, %728 : vector<8x8x128xf32>
    %730 = arith.addf %723, %729 : vector<8x8x128xf32>
    %731 = vector.extract_strided_slice %688 {offsets = [6, 0, 0], sizes = [8, 8, 128], strides = [1, 1, 1]} : vector<14x8x128xf32> to vector<8x8x128xf32>
    %732 = vector.extract_strided_slice %9 {offsets = [48, 0], sizes = [1, 128], strides = [1, 1]} : vector<49x128xf32> to vector<1x128xf32>
    %733 = vector.shape_cast %732 : vector<1x128xf32> to vector<128xf32>
    %734 = vector.shape_cast %733 : vector<128xf32> to vector<1x1x128xf32>
    %735 = vector.broadcast %734 : vector<1x1x128xf32> to vector<8x8x128xf32>
    %736 = arith.mulf %731, %735 : vector<8x8x128xf32>
    %737 = arith.addf %730, %736 : vector<8x8x128xf32>
    %738 = vector.shape_cast %11 : vector<128xf32> to vector<1x1x128xf32>
    %739 = vector.broadcast %738 : vector<1x1x128xf32> to vector<8x8x128xf32>
    %740 = arith.addf %737, %739 : vector<8x8x128xf32>
    %cst_66 = arith.constant 0.000000e+00 : f32
    %741 = vector.broadcast %cst_66 : f32 to vector<8x8x128xf32>
    %742 = arith.maximumf %740, %741 : vector<8x8x128xf32>
    %743 = vector.shape_cast %742 : vector<8x8x128xf32> to vector<64x128xf32>
    %744 = arith.truncf %743 : vector<64x128xf32> to vector<64x128xbf16>
    %c1_67 = arith.constant 1 : index
    %c0_68 = arith.constant 0 : index
    %c0_69 = arith.constant 0 : index
    %745 = vector.load %arg9[%c1_67, %c0_68, %c0_69] : memref<2x64x128xbf16, #tpu.memory_space<vmem>>, vector<1x64x128xbf16>
    %746 = vector.shape_cast %745 : vector<1x64x128xbf16> to vector<64x128xbf16>
    %747 = vector.shape_cast %744 : vector<64x128xbf16> to vector<1x64x128xbf16>
    tpu.vector_store %arg9[%c1_67, %c0_68, %c0_69], %747 {strides = array<i32>} : memref<2x64x128xbf16, #tpu.memory_space<vmem>>, vector<1x64x128xbf16>,
    %c0_70 = arith.constant 0 : index
    %c0_71 = arith.constant 0 : index
    %c0_72 = arith.constant 0 : index
    %748 = vector.load %arg9[%c0_70, %c0_71, %c0_72] : memref<2x64x128xbf16, #tpu.memory_space<vmem>>, vector<2x64x128xbf16>
    %749 = vector.shape_cast %748 : vector<2x64x128xbf16> to vector<128x128xbf16>
    %cst_73 = arith.constant 0.000000e+00 : f32
    %750 = vector.broadcast %cst_73 : f32 to vector<128x128xf32>
    %c0_74 = arith.constant 0 : index
    %c0_75 = arith.constant 0 : index
    %751 = vector.load %arg5[%c0_74, %c0_75] : memref<128x512xbf16, #tpu.memory_space<vmem>>, vector<128x128xbf16>
    %cst_76 = arith.constant dense<0.000000e+00> : vector<128x128xf32>
    %752 = tpu.matmul %749, %751, %cst_76 {dimension_numbers = #tpu.dot_dimension_numbers<[1], [0], [0], [1], [0, 0, 1, 1], [], []>} : vector<128x128xbf16>, vector<128x128xbf16>, vector<128x128xf32> -> vector<128x128xf32>
    %cst_77 = arith.constant 0.000000e+00 : f32
    %753 = vector.broadcast %cst_77 : f32 to vector<128x128xf32>
    %754 = arith.maximumf %752, %753 : vector<128x128xf32>
    %755 = arith.truncf %754 : vector<128x128xf32> to vector<128x128xbf16>
    %c0_78 = arith.constant 0 : index
    %c0_79 = arith.constant 0 : index
    %756 = vector.load %arg6[%c0_78, %c0_79] : memref<512x128xbf16, #tpu.memory_space<vmem>>, vector<128x128xbf16>
    %cst_80 = arith.constant dense<0.000000e+00> : vector<128x128xf32>
    %757 = tpu.matmul %755, %756, %cst_80 {dimension_numbers = #tpu.dot_dimension_numbers<[1], [0], [0], [1], [0, 0, 1, 1], [], []>} : vector<128x128xbf16>, vector<128x128xbf16>, vector<128x128xf32> -> vector<128x128xf32>
    %758 = arith.addf %750, %757 : vector<128x128xf32>
    %c0_81 = arith.constant 0 : index
    %c128 = arith.constant 128 : index
    %759 = vector.load %arg5[%c0_81, %c128] : memref<128x512xbf16, #tpu.memory_space<vmem>>, vector<128x128xbf16>
    %cst_82 = arith.constant dense<0.000000e+00> : vector<128x128xf32>
    %760 = tpu.matmul %749, %759, %cst_82 {dimension_numbers = #tpu.dot_dimension_numbers<[1], [0], [0], [1], [0, 0, 1, 1], [], []>} : vector<128x128xbf16>, vector<128x128xbf16>, vector<128x128xf32> -> vector<128x128xf32>
    %cst_83 = arith.constant 0.000000e+00 : f32
    %761 = vector.broadcast %cst_83 : f32 to vector<128x128xf32>
    %762 = arith.maximumf %760, %761 : vector<128x128xf32>
    %763 = arith.truncf %762 : vector<128x128xf32> to vector<128x128xbf16>
    %c128_84 = arith.constant 128 : index
    %c0_85 = arith.constant 0 : index
    %764 = vector.load %arg6[%c128_84, %c0_85] : memref<512x128xbf16, #tpu.memory_space<vmem>>, vector<128x128xbf16>
    %cst_86 = arith.constant dense<0.000000e+00> : vector<128x128xf32>
    %765 = tpu.matmul %763, %764, %cst_86 {dimension_numbers = #tpu.dot_dimension_numbers<[1], [0], [0], [1], [0, 0, 1, 1], [], []>} : vector<128x128xbf16>, vector<128x128xbf16>, vector<128x128xf32> -> vector<128x128xf32>
    %766 = arith.addf %758, %765 : vector<128x128xf32>
    %c0_87 = arith.constant 0 : index
    %c256 = arith.constant 256 : index
    %767 = vector.load %arg5[%c0_87, %c256] : memref<128x512xbf16, #tpu.memory_space<vmem>>, vector<128x128xbf16>
    %cst_88 = arith.constant dense<0.000000e+00> : vector<128x128xf32>
    %768 = tpu.matmul %749, %767, %cst_88 {dimension_numbers = #tpu.dot_dimension_numbers<[1], [0], [0], [1], [0, 0, 1, 1], [], []>} : vector<128x128xbf16>, vector<128x128xbf16>, vector<128x128xf32> -> vector<128x128xf32>
    %cst_89 = arith.constant 0.000000e+00 : f32
    %769 = vector.broadcast %cst_89 : f32 to vector<128x128xf32>
    %770 = arith.maximumf %768, %769 : vector<128x128xf32>
    %771 = arith.truncf %770 : vector<128x128xf32> to vector<128x128xbf16>
    %c256_90 = arith.constant 256 : index
    %c0_91 = arith.constant 0 : index
    %772 = vector.load %arg6[%c256_90, %c0_91] : memref<512x128xbf16, #tpu.memory_space<vmem>>, vector<128x128xbf16>
    %cst_92 = arith.constant dense<0.000000e+00> : vector<128x128xf32>
    %773 = tpu.matmul %771, %772, %cst_92 {dimension_numbers = #tpu.dot_dimension_numbers<[1], [0], [0], [1], [0, 0, 1, 1], [], []>} : vector<128x128xbf16>, vector<128x128xbf16>, vector<128x128xf32> -> vector<128x128xf32>
    %774 = arith.addf %766, %773 : vector<128x128xf32>
    %c0_93 = arith.constant 0 : index
    %c384 = arith.constant 384 : index
    %775 = vector.load %arg5[%c0_93, %c384] : memref<128x512xbf16, #tpu.memory_space<vmem>>, vector<128x128xbf16>
    %cst_94 = arith.constant dense<0.000000e+00> : vector<128x128xf32>
    %776 = tpu.matmul %749, %775, %cst_94 {dimension_numbers = #tpu.dot_dimension_numbers<[1], [0], [0], [1], [0, 0, 1, 1], [], []>} : vector<128x128xbf16>, vector<128x128xbf16>, vector<128x128xf32> -> vector<128x128xf32>
    %cst_95 = arith.constant 0.000000e+00 : f32
    %777 = vector.broadcast %cst_95 : f32 to vector<128x128xf32>
    %778 = arith.maximumf %776, %777 : vector<128x128xf32>
    %779 = arith.truncf %778 : vector<128x128xf32> to vector<128x128xbf16>
    %c384_96 = arith.constant 384 : index
    %c0_97 = arith.constant 0 : index
    %780 = vector.load %arg6[%c384_96, %c0_97] : memref<512x128xbf16, #tpu.memory_space<vmem>>, vector<128x128xbf16>
    %cst_98 = arith.constant dense<0.000000e+00> : vector<128x128xf32>
    %781 = tpu.matmul %779, %780, %cst_98 {dimension_numbers = #tpu.dot_dimension_numbers<[1], [0], [0], [1], [0, 0, 1, 1], [], []>} : vector<128x128xbf16>, vector<128x128xbf16>, vector<128x128xf32> -> vector<128x128xf32>
    %782 = arith.addf %774, %781 : vector<128x128xf32>
    %cst_99 = arith.constant 0.000000e+00 : f32
    %783 = vector.broadcast %cst_99 : f32 to vector<128x128xf32>
    %784 = arith.maximumf %782, %783 : vector<128x128xf32>
    %785 = vector.shape_cast %784 : vector<128x128xf32> to vector<2x8x8x128xf32>
    %c0_100 = arith.constant 0 : index
    %c0_101 = arith.constant 0 : index
    %c0_102 = arith.constant 0 : index
    %c0_103 = arith.constant 0 : index
    %786 = vector.load %arg7[%c0_100, %c0_101, %c0_102, %c0_103] : memref<2x8x8x128xf32, #tpu.memory_space<vmem>>, vector<2x8x8x128xf32>
    tpu.vector_store %arg7[%c0_100, %c0_101, %c0_102, %c0_103], %785 {strides = array<i32>} : memref<2x8x8x128xf32, #tpu.memory_space<vmem>>, vector<2x8x8x128xf32>,
    return
  }
  func.func @transform_0(%arg0: i32) -> (i32, i32, i32) {
    %c0_i32 = arith.constant 0 : i32
    %c0_i32_0 = arith.constant 0 : i32
    %c0_i32_1 = arith.constant 0 : i32
    return %arg0, %c0_i32, %c0_i32_0 : i32, i32, i32
  }
  func.func @transform_1(%arg0: i32) -> (i32, i32) {
    %c0_i32 = arith.constant 0 : i32
    %c0_i32_0 = arith.constant 0 : i32
    %c0_i32_1 = arith.constant 0 : i32
    return %c0_i32, %c0_i32_0 : i32, i32
  }
  func.func @transform_2(%arg0: i32) -> (i32, i32) {
    %c0_i32 = arith.constant 0 : i32
    %c0_i32_0 = arith.constant 0 : i32
    %c0_i32_1 = arith.constant 0 : i32
    return %c0_i32, %c0_i32_0 : i32, i32
  }
  func.func @transform_3(%arg0: i32) -> (i32, i32) {
    %c0_i32 = arith.constant 0 : i32
    %c0_i32_0 = arith.constant 0 : i32
    %c0_i32_1 = arith.constant 0 : i32
    return %c0_i32, %c0_i32_0 : i32, i32
  }
  func.func @transform_4(%arg0: i32) -> (i32, i32) {
    %c0_i32 = arith.constant 0 : i32
    %c0_i32_0 = arith.constant 0 : i32
    %c0_i32_1 = arith.constant 0 : i32
    return %c0_i32, %c0_i32_0 : i32, i32
  }
  func.func @transform_5(%arg0: i32) -> (i32, i32) {
    %c0_i32 = arith.constant 0 : i32
    %c0_i32_0 = arith.constant 0 : i32
    %c0_i32_1 = arith.constant 0 : i32
    return %c0_i32, %c0_i32_0 : i32, i32
  }
  func.func @transform_6(%arg0: i32) -> (i32, i32, i32, i32) {
    %c0_i32 = arith.constant 0 : i32
    %c0_i32_0 = arith.constant 0 : i32
    %c0_i32_1 = arith.constant 0 : i32
    %c0_i32_2 = arith.constant 0 : i32
    return %arg0, %c0_i32, %c0_i32_0, %c0_i32_1 : i32, i32, i32, i32
  }
}

</mosaic_0001>

<llo_original>
// kernel: downx_forward.1
$region0: #{downx_forward.1}
  #allocation0 [shape = 'u32[]', space=smem, size = 0x4, offset = 0x4, fixed_abs, tag = 'smem constant byte address 0x4 - core index']
  #allocation1 [shape = 'u32[72,128]{1,0:T(1,128)}', space=vmem, size = 0x9000, scoped, tag = 'internal scratch']
  #allocation2 [shape = 'f32[2,14,24,128]{3,2,1,0:T(8,128)}', space=vmem, size = 0x54000, scoped, tag = 'scratch operand']
  #allocation3 [shape = 'bf16[2,64,128]{2,1,0:T(8,128)(2,1)}', space=vmem, size = 0x8000, scoped, tag = 'scratch operand']
  %s0 = inlined_call_operand.vmem [shape: bf16[2,64,256], index: 0, kind: input, shape index: {}]
  %s1 = inlined_call_operand.vmem [shape: bf16[256,128], index: 1, kind: input, shape index: {}]
  %s2 = inlined_call_operand.vmem [shape: f32[49,128], index: 2, kind: input, shape index: {}]
  %s3 = inlined_call_operand.vmem [shape: f32[1,128], index: 3, kind: input, shape index: {}]
  %s4 = inlined_call_operand.vmem [shape: bf16[128,512], index: 4, kind: input, shape index: {}]
  %s5 = inlined_call_operand.vmem [shape: bf16[512,128], index: 5, kind: input, shape index: {}]
  %s6 = inlined_call_operand.hbm [shape: f32[2,8,8,128], index: 6, kind: output, shape index: {}]
  %s7 = sld [smem:[#allocation0]]
  $region38: #{downx_forward.1} parent=0
    _
  %s9 = ssub.s32 1, %s7
  %s10 = scalar_select 0, %s9, %s7
  $region1: #{downx_forward.1} parent=0
    #allocation4 [shape = 'u8[65536]{0}', space=vmem, size = 0x10000, scoped, tag = 'output window, operand 0, single buffered']
    #allocation5 [shape = 's32[1]{0}', space=sflag, size = 0x4, scoped, tag = 'scoped memory for downx_forward.1']
    %11 = vsyncpa [#allocation5], 0
    // Predicated region
    $region2: #{downx_forward.1} parent=1 // pred_check
      _
    $region3: #{downx_forward.1} parent=1 // pred_check_branch
      %13 = sbr.rel (0) target = $region5
    $region4: #{downx_forward.1} parent=1 // pred_region
      _
    $region5: #{downx_forward.1} parent=1 // pred_fallthru
      _
    // Predicated region
    $region6: #{downx_forward.1} parent=1 // pred_check
      _
    $region7: #{downx_forward.1} parent=1 // pred_check_branch
      %15 = sbr.rel (0) target = $region9
    $region8: #{downx_forward.1} parent=1 // pred_region
      _
    $region9: #{downx_forward.1} parent=1 // pred_fallthru
      _
    // Predicated region
    $region10: #{downx_forward.1} parent=1 // pred_check
      _
    $region11: #{downx_forward.1} parent=1 // pred_check_branch
      %17 = sbr.rel (0) target = $region13
    $region12: #{downx_forward.1} parent=1 // pred_region
      _
    $region13: #{downx_forward.1} parent=1 // pred_fallthru
      _
    // Predicated region
    $region14: #{downx_forward.1} parent=1 // pred_check
      _
    $region15: #{downx_forward.1} parent=1 // pred_check_branch
      %19 = sbr.rel (0) target = $region17
    $region16: #{downx_forward.1} parent=1 // pred_region
      _
    $region17: #{downx_forward.1} parent=1 // pred_fallthru
      _
    // Predicated region
    $region18: #{downx_forward.1} parent=1 // pred_check
      _
    $region19: #{downx_forward.1} parent=1 // pred_check_branch
      %21 = sbr.rel (0) target = $region21
    $region20: #{downx_forward.1} parent=1 // pred_region
      _
    $region21: #{downx_forward.1} parent=1 // pred_fallthru
      _
    // Predicated region
    $region22: #{downx_forward.1} parent=1 // pred_check
      _
    $region23: #{downx_forward.1} parent=1 // pred_check_branch
      %23 = sbr.rel (0) target = $region25
    $region24: #{downx_forward.1} parent=1 // pred_region
      _
    $region25: #{downx_forward.1} parent=1 // pred_fallthru
      _
    %p24 = scmp.eq.s32.totalorder 0, 0
    // Predicated region
    $region26: #{downx_forward.1} parent=1 // pred_check
      %p25 = pneg %p24
    $region27: #{downx_forward.1} parent=1 // pred_check_branch
      %27 = sbr.rel (%p25) target = $region29
    $region28: #{downx_forward.1} parent=1 // pred_region
      %28 = vst [vmem:[#allocation2] sm:$0xff] 0.0
      %29 = vst [vmem:[#allocation2 + $0x8] sm:$0xff] 0.0
      %30 = vst [vmem:[#allocation2 + $0x10] sm:$0xff] 0.0
      %31 = vst [vmem:[#allocation2 + $0x18] sm:$0xff] 0.0
      %32 = vst [vmem:[#allocation2 + $0x20] sm:$0xff] 0.0
      %33 = vst [vmem:[#allocation2 + $0x28] sm:$0xff] 0.0
      %34 = vst [vmem:[#allocation2 + $0x30] sm:$0xff] 0.0
      %35 = vst [vmem:[#allocation2 + $0x38] sm:$0xff] 0.0
      %36 = vst [vmem:[#allocation2 + $0x40] sm:$0xff] 0.0
      %37 = vst [vmem:[#allocation2 + $0x48] sm:$0xff] 0.0
      %38 = vst [vmem:[#allocation2 + $0x50] sm:$0xff] 0.0
      %39 = vst [vmem:[#allocation2 + $0x58] sm:$0xff] 0.0
      %40 = vst [vmem:[#allocation2 + $0x60] sm:$0xff] 0.0
      %41 = vst [vmem:[#allocation2 + $0x68] sm:$0xff] 0.0
      %42 = vst [vmem:[#allocation2 + $0x70] sm:$0xff] 0.0
      %43 = vst [vmem:[#allocation2 + $0x78] sm:$0xff] 0.0
      %44 = vst [vmem:[#allocation2 + $0x80] sm:$0xff] 0.0
      %45 = vst [vmem:[#allocation2 + $0x88] sm:$0xff] 0.0
      %46 = vst [vmem:[#allocation2 + $0x90] sm:$0xff] 0.0
      %47 = vst [vmem:[#allocation2 + $0x98] sm:$0xff] 0.0
      %48 = vst [vmem:[#allocation2 + $0xa0] sm:$0xff] 0.0
      %49 = vst [vmem:[#allocation2 + $0xa8] sm:$0xff] 0.0
      %50 = vst [vmem:[#allocation2 + $0xb0] sm:$0xff] 0.0
      %51 = vst [vmem:[#allocation2 + $0xb8] sm:$0xff] 0.0
      %52 = vst [vmem:[#allocation2 + $0xc0] sm:$0xff] 0.0
      %53 = vst [vmem:[#allocation2 + $0xc8] sm:$0xff] 0.0
      %54 = vst [vmem:[#allocation2 + $0xd0] sm:$0xff] 0.0
      %55 = vst [vmem:[#allocation2 + $0xd8] sm:$0xff] 0.0
      %56 = vst [vmem:[#allocation2 + $0xe0] sm:$0xff] 0.0
      %57 = vst [vmem:[#allocation2 + $0xe8] sm:$0xff] 0.0
      %58 = vst [vmem:[#allocation2 + $0xf0] sm:$0xff] 0.0
      %59 = vst [vmem:[#allocation2 + $0xf8] sm:$0xff] 0.0
      %60 = vst [vmem:[#allocation2 + $0x100] sm:$0xff] 0.0
      %61 = vst [vmem:[#allocation2 + $0x108] sm:$0xff] 0.0
      %62 = vst [vmem:[#allocation2 + $0x110] sm:$0xff] 0.0
      %63 = vst [vmem:[#allocation2 + $0x118] sm:$0xff] 0.0
      %64 = vst [vmem:[#allocation2 + $0x120] sm:$0xff] 0.0
      %65 = vst [vmem:[#allocation2 + $0x128] sm:$0xff] 0.0
      %66 = vst [vmem:[#allocation2 + $0x130] sm:$0xff] 0.0
      %67 = vst [vmem:[#allocation2 + $0x138] sm:$0xff] 0.0
      %68 = vst [vmem:[#allocation2 + $0x140] sm:$0xff] 0.0
      %69 = vst [vmem:[#allocation2 + $0x148] sm:$0xff] 0.0
      %70 = vst [vmem:[#allocation2 + $0x150] sm:$0xff] 0.0
      %71 = vst [vmem:[#allocation2 + $0x158] sm:$0xff] 0.0
      %72 = vst [vmem:[#allocation2 + $0x160] sm:$0xff] 0.0
      %73 = vst [vmem:[#allocation2 + $0x168] sm:$0xff] 0.0
      %74 = vst [vmem:[#allocation2 + $0x170] sm:$0xff] 0.0
      %75 = vst [vmem:[#allocation2 + $0x178] sm:$0xff] 0.0
      %76 = vst [vmem:[#allocation2 + $0x180] sm:$0xff] 0.0
      %77 = vst [vmem:[#allocation2 + $0x188] sm:$0xff] 0.0
      %78 = vst [vmem:[#allocation2 + $0x190] sm:$0xff] 0.0
      %79 = vst [vmem:[#allocation2 + $0x198] sm:$0xff] 0.0
      %80 = vst [vmem:[#allocation2 + $0x1a0] sm:$0xff] 0.0
      %81 = vst [vmem:[#allocation2 + $0x1a8] sm:$0xff] 0.0
      %82 = vst [vmem:[#allocation2 + $0x1b0] sm:$0xff] 0.0
      %83 = vst [vmem:[#allocation2 + $0x1b8] sm:$0xff] 0.0
      %84 = vst [vmem:[#allocation2 + $0x1c0] sm:$0xff] 0.0
      %85 = vst [vmem:[#allocation2 + $0x1c8] sm:$0xff] 0.0
      %86 = vst [vmem:[#allocation2 + $0x1d0] sm:$0xff] 0.0
      %87 = vst [vmem:[#allocation2 + $0x1d8] sm:$0xff] 0.0
      %88 = vst [vmem:[#allocation2 + $0x1e0] sm:$0xff] 0.0
      %89 = vst [vmem:[#allocation2 + $0x1e8] sm:$0xff] 0.0
      %90 = vst [vmem:[#allocation2 + $0x1f0] sm:$0xff] 0.0
      %91 = vst [vmem:[#allocation2 + $0x1f8] sm:$0xff] 0.0
      %92 = vst [vmem:[#allocation2 + $0x200] sm:$0xff] 0.0
      %93 = vst [vmem:[#allocation2 + $0x208] sm:$0xff] 0.0
      %94 = vst [vmem:[#allocation2 + $0x210] sm:$0xff] 0.0
      %95 = vst [vmem:[#allocation2 + $0x218] sm:$0xff] 0.0
      %96 = vst [vmem:[#allocation2 + $0x220] sm:$0xff] 0.0
      %97 = vst [vmem:[#allocation2 + $0x228] sm:$0xff] 0.0
      %98 = vst [vmem:[#allocation2 + $0x230] sm:$0xff] 0.0
      %99 = vst [vmem:[#allocation2 + $0x238] sm:$0xff] 0.0
      %100 = vst [vmem:[#allocation2 + $0x240] sm:$0xff] 0.0
      %101 = vst [vmem:[#allocation2 + $0x248] sm:$0xff] 0.0
      %102 = vst [vmem:[#allocation2 + $0x250] sm:$0xff] 0.0
      %103 = vst [vmem:[#allocation2 + $0x258] sm:$0xff] 0.0
      %104 = vst [vmem:[#allocation2 + $0x260] sm:$0xff] 0.0
      %105 = vst [vmem:[#allocation2 + $0x268] sm:$0xff] 0.0
      %106 = vst [vmem:[#allocation2 + $0x270] sm:$0xff] 0.0
      %107 = vst [vmem:[#allocation2 + $0x278] sm:$0xff] 0.0
      %108 = vst [vmem:[#allocation2 + $0x280] sm:$0xff] 0.0
      %109 = vst [vmem:[#allocation2 + $0x288] sm:$0xff] 0.0
      %110 = vst [vmem:[#allocation2 + $0x290] sm:$0xff] 0.0
      %111 = vst [vmem:[#allocation2 + $0x298] sm:$0xff] 0.0
    $region29: #{downx_forward.1} parent=1 // pred_fallthru
      _
    %v112 = vld [vmem:[%s0] sm:$0xff]
    %v113 = vld [vmem:[%s0 + $0x8] sm:$0xff]
    %v114 = vld [vmem:[%s0 + $0x10] sm:$0xff]
    %v115 = vld [vmem:[%s0 + $0x18] sm:$0xff]
    %v116 = vld [vmem:[%s0 + $0x20] sm:$0xff]
    %v117 = vld [vmem:[%s0 + $0x28] sm:$0xff]
    %v118 = vld [vmem:[%s0 + $0x30] sm:$0xff]
    %v119 = vld [vmem:[%s0 + $0x38] sm:$0xff]
    %v120 = vld [vmem:[%s0 + $0x40] sm:$0xff]
    %v121 = vld [vmem:[%s0 + $0x48] sm:$0xff]
    %v122 = vld [vmem:[%s0 + $0x50] sm:$0xff]
    %v123 = vld [vmem:[%s0 + $0x58] sm:$0xff]
    %v124 = vld [vmem:[%s0 + $0x60] sm:$0xff]
    %v125 = vld [vmem:[%s0 + $0x68] sm:$0xff]
    %v126 = vld [vmem:[%s0 + $0x70] sm:$0xff]
    %v127 = vld [vmem:[%s0 + $0x78] sm:$0xff]
    %v128 = vld [vmem:[%s1] sm:$0xf]
    %v129 = vld [vmem:[%s1 + $0x4] sm:$0xf]
    %v130 = vld [vmem:[%s1 + $0x8] sm:$0xf]
    %v131 = vld [vmem:[%s1 + $0xc] sm:$0xf]
    %v132 = vld [vmem:[%s1 + $0x10] sm:$0xf]
    %v133 = vld [vmem:[%s1 + $0x14] sm:$0xf]
    %v134 = vld [vmem:[%s1 + $0x18] sm:$0xf]
    %v135 = vld [vmem:[%s1 + $0x1c] sm:$0xf]
    %v136 = vld [vmem:[%s1 + $0x20] sm:$0xf]
    %v137 = vld [vmem:[%s1 + $0x24] sm:$0xf]
    %v138 = vld [vmem:[%s1 + $0x28] sm:$0xf]
    %v139 = vld [vmem:[%s1 + $0x2c] sm:$0xf]
    %v140 = vld [vmem:[%s1 + $0x30] sm:$0xf]
    %v141 = vld [vmem:[%s1 + $0x34] sm:$0xf]
    %v142 = vld [vmem:[%s1 + $0x38] sm:$0xf]
    %v143 = vld [vmem:[%s1 + $0x3c] sm:$0xf]
    %v144 = vld [vmem:[%s1 + $0x40] sm:$0xf]
    %v145 = vld [vmem:[%s1 + $0x44] sm:$0xf]
    %v146 = vld [vmem:[%s1 + $0x48] sm:$0xf]
    %v147 = vld [vmem:[%s1 + $0x4c] sm:$0xf]
    %v148 = vld [vmem:[%s1 + $0x50] sm:$0xf]
    %v149 = vld [vmem:[%s1 + $0x54] sm:$0xf]
    %v150 = vld [vmem:[%s1 + $0x58] sm:$0xf]
    %v151 = vld [vmem:[%s1 + $0x5c] sm:$0xf]
    %v152 = vld [vmem:[%s1 + $0x60] sm:$0xf]
    %v153 = vld [vmem:[%s1 + $0x64] sm:$0xf]
    %v154 = vld [vmem:[%s1 + $0x68] sm:$0xf]
    %v155 = vld [vmem:[%s1 + $0x6c] sm:$0xf]
    %v156 = vld [vmem:[%s1 + $0x70] sm:$0xf]
    %v157 = vld [vmem:[%s1 + $0x74] sm:$0xf]
    %v158 = vld [vmem:[%s1 + $0x78] sm:$0xf]
    %v159 = vld [vmem:[%s1 + $0x7c] sm:$0xf]
    %v176 = vunpack.c.l.b16 %v112
    %v177 = vunpack.c.h.b16 %v112
    %v178 = vunpack.c.l.b16 %v113
    %v179 = vunpack.c.h.b16 %v113
    %v180 = vunpack.c.l.b16 %v114
    %v181 = vunpack.c.h.b16 %v114
    %v182 = vunpack.c.l.b16 %v115
    %v183 = vunpack.c.h.b16 %v115
    %v184 = vunpack.c.l.b16 %v116
    %v185 = vunpack.c.h.b16 %v116
    %v186 = vunpack.c.l.b16 %v117
    %v187 = vunpack.c.h.b16 %v117
    %v188 = vunpack.c.l.b16 %v118
    %v189 = vunpack.c.h.b16 %v118
    %v190 = vunpack.c.l.b16 %v119
    %v191 = vunpack.c.h.b16 %v119
    %v192 = vunpack.c.l.b16 %v120
    %v193 = vunpack.c.h.b16 %v120
    %v194 = vunpack.c.l.b16 %v121
    %v195 = vunpack.c.h.b16 %v121
    %v196 = vunpack.c.l.b16 %v122
    %v197 = vunpack.c.h.b16 %v122
    %v198 = vunpack.c.l.b16 %v123
    %v199 = vunpack.c.h.b16 %v123
    %v200 = vunpack.c.l.b16 %v124
    %v201 = vunpack.c.h.b16 %v124
    %v202 = vunpack.c.l.b16 %v125
    %v203 = vunpack.c.h.b16 %v125
    %v204 = vunpack.c.l.b16 %v126
    %v205 = vunpack.c.h.b16 %v126
    %v206 = vunpack.c.l.b16 %v127
    %v207 = vunpack.c.h.b16 %v127
    %v208 = vpack.c.b16 %v178, %v176
    %v209 = vpack.c.b16 %v179, %v177
    %v210 = vpack.c.b16 %v182, %v180
    %v211 = vpack.c.b16 %v183, %v181
    %v212 = vpack.c.b16 %v186, %v184
    %v213 = vpack.c.b16 %v187, %v185
    %v214 = vpack.c.b16 %v190, %v188
    %v215 = vpack.c.b16 %v191, %v189
    %v216 = vpack.c.b16 %v194, %v192
    %v217 = vpack.c.b16 %v195, %v193
    %v218 = vpack.c.b16 %v198, %v196
    %v219 = vpack.c.b16 %v199, %v197
    %v220 = vpack.c.b16 %v202, %v200
    %v221 = vpack.c.b16 %v203, %v201
    %v222 = vpack.c.b16 %v206, %v204
    %v223 = vpack.c.b16 %v207, %v205
    %v272 = vunpack.c.l.b16 %v128
    %v273 = vunpack.c.l.b16 %v129
    %v274 = vunpack.c.l.b16 %v130
    %v275 = vunpack.c.l.b16 %v131
    %v276 = vunpack.c.l.b16 %v132
    %v277 = vunpack.c.l.b16 %v133
    %v278 = vunpack.c.l.b16 %v134
    %v279 = vunpack.c.l.b16 %v135
    %v280 = vunpack.c.l.b16 %v136
    %v281 = vunpack.c.l.b16 %v137
    %v282 = vunpack.c.l.b16 %v138
    %v283 = vunpack.c.l.b16 %v139
    %v284 = vunpack.c.l.b16 %v140
    %v285 = vunpack.c.l.b16 %v141
    %v286 = vunpack.c.l.b16 %v142
    %v287 = vunpack.c.l.b16 %v143
    %v288 = vunpack.c.l.b16 %v144
    %v289 = vunpack.c.l.b16 %v145
    %v290 = vunpack.c.l.b16 %v146
    %v291 = vunpack.c.l.b16 %v147
    %v292 = vunpack.c.l.b16 %v148
    %v293 = vunpack.c.l.b16 %v149
    %v294 = vunpack.c.l.b16 %v150
    %v295 = vunpack.c.l.b16 %v151
    %v296 = vunpack.c.l.b16 %v152
    %v297 = vunpack.c.l.b16 %v153
    %v298 = vunpack.c.l.b16 %v154
    %v299 = vunpack.c.l.b16 %v155
    %v300 = vunpack.c.l.b16 %v156
    %v301 = vunpack.c.l.b16 %v157
    %v302 = vunpack.c.l.b16 %v158
    %v303 = vunpack.c.l.b16 %v159
    %v304 = vpack.c.b16 %v273, %v272
    %v305 = vpack.c.b16 %v275, %v274
    %v306 = vpack.c.b16 %v277, %v276
    %v307 = vpack.c.b16 %v279, %v278
    %v308 = vpack.c.b16 %v281, %v280
    %v309 = vpack.c.b16 %v283, %v282
    %v310 = vpack.c.b16 %v285, %v284
    %v311 = vpack.c.b16 %v287, %v286
    %v312 = vpack.c.b16 %v289, %v288
    %v313 = vpack.c.b16 %v291, %v290
    %v314 = vpack.c.b16 %v293, %v292
    %v315 = vpack.c.b16 %v295, %v294
    %v316 = vpack.c.b16 %v297, %v296
    %v317 = vpack.c.b16 %v299, %v298
    %v318 = vpack.c.b16 %v301, %v300
    %v319 = vpack.c.b16 %v303, %v302
    %336 = vmatpush.bf16.msra.mxu0 %v311
    %337 = vmatpush.bf16.msra.mxu0 %v310
    %338 = vmatpush.bf16.msra.mxu0 %v309
    %339 = vmatpush.bf16.msra.mxu0 %v308
    %340 = vmatpush.bf16.msra.mxu0 %v307
    %341 = vmatpush.bf16.msra.mxu0 %v306
    %342 = vmatpush.bf16.msra.mxu0 %v305
    %343 = vmatpush.bf16.msra.mxu0 %v304
    %344 = vmatmul.bf16.gmra.mxu0 %v208
    %v345 = vpop.f32.mrf.mxu0
    %v346 = vadd.f32 0.0, %v345
    %v347 = vpop.f32.mrf.mxu0
    %v348 = vadd.f32 0.0, %v347
    %349 = vmatmul.bf16.gmra.mxu0 %v210
    %v350 = vpop.f32.mrf.mxu0
    %v351 = vadd.f32 0.0, %v350
    %v352 = vpop.f32.mrf.mxu0
    %v353 = vadd.f32 0.0, %v352
    %354 = vmatmul.bf16.gmra.mxu0 %v212
    %v355 = vpop.f32.mrf.mxu0
    %v356 = vadd.f32 0.0, %v355
    %v357 = vpop.f32.mrf.mxu0
    %v358 = vadd.f32 0.0, %v357
    %359 = vmatmul.bf16.gmra.mxu0 %v214
    %v360 = vpop.f32.mrf.mxu0
    %v361 = vadd.f32 0.0, %v360
    %v362 = vpop.f32.mrf.mxu0
    %v363 = vadd.f32 0.0, %v362
    %364 = vmatmul.bf16.gmra.mxu0 %v216
    %v365 = vpop.f32.mrf.mxu0
    %v366 = vadd.f32 0.0, %v365
    %v367 = vpop.f32.mrf.mxu0
    %v368 = vadd.f32 0.0, %v367
    %369 = vmatmul.bf16.gmra.mxu0 %v218
    %v370 = vpop.f32.mrf.mxu0
    %v371 = vadd.f32 0.0, %v370
    %v372 = vpop.f32.mrf.mxu0
    %v373 = vadd.f32 0.0, %v372
    %374 = vmatmul.bf16.gmra.mxu0 %v220
    %v375 = vpop.f32.mrf.mxu0
    %v376 = vadd.f32 0.0, %v375
    %v377 = vpop.f32.mrf.mxu0
    %v378 = vadd.f32 0.0, %v377
    %379 = vmatmul.bf16.gmra.mxu0 %v222
    %v380 = vpop.f32.mrf.mxu0
    %v381 = vadd.f32 0.0, %v380
    %v382 = vpop.f32.mrf.mxu0
    %v383 = vadd.f32 0.0, %v382
    %384 = vdwg.mxu0
    %385 = vmatpush.bf16.msra.mxu0 %v319
    %386 = vmatpush.bf16.msra.mxu0 %v318
    %387 = vmatpush.bf16.msra.mxu0 %v317
    %388 = vmatpush.bf16.msra.mxu0 %v316
    %389 = vmatpush.bf16.msra.mxu0 %v315
    %390 = vmatpush.bf16.msra.mxu0 %v314
    %391 = vmatpush.bf16.msra.mxu0 %v313
    %392 = vmatpush.bf16.msra.mxu0 %v312
    %393 = vmatmul.bf16.gmra.mxu0 %v209
    %v394 = vpop.f32.mrf.mxu0
    %v395 = vadd.f32 %v346, %v394
    %v396 = vpop.f32.mrf.mxu0
    %v397 = vadd.f32 %v348, %v396
    %398 = vmatmul.bf16.gmra.mxu0 %v211
    %v399 = vpop.f32.mrf.mxu0
    %v400 = vadd.f32 %v351, %v399
    %v401 = vpop.f32.mrf.mxu0
    %v402 = vadd.f32 %v353, %v401
    %403 = vmatmul.bf16.gmra.mxu0 %v213
    %v404 = vpop.f32.mrf.mxu0
    %v405 = vadd.f32 %v356, %v404
    %v406 = vpop.f32.mrf.mxu0
    %v407 = vadd.f32 %v358, %v406
    %408 = vmatmul.bf16.gmra.mxu0 %v215
    %v409 = vpop.f32.mrf.mxu0
    %v410 = vadd.f32 %v361, %v409
    %v411 = vpop.f32.mrf.mxu0
    %v412 = vadd.f32 %v363, %v411
    %413 = vmatmul.bf16.gmra.mxu0 %v217
    %v414 = vpop.f32.mrf.mxu0
    %v415 = vadd.f32 %v366, %v414
    %v416 = vpop.f32.mrf.mxu0
    %v417 = vadd.f32 %v368, %v416
    %418 = vmatmul.bf16.gmra.mxu0 %v219
    %v419 = vpop.f32.mrf.mxu0
    %v420 = vadd.f32 %v371, %v419
    %v421 = vpop.f32.mrf.mxu0
    %v422 = vadd.f32 %v373, %v421
    %423 = vmatmul.bf16.gmra.mxu0 %v221
    %v424 = vpop.f32.mrf.mxu0
    %v425 = vadd.f32 %v376, %v424
    %v426 = vpop.f32.mrf.mxu0
    %v427 = vadd.f32 %v378, %v426
    %428 = vmatmul.bf16.gmra.mxu0 %v223
    %v429 = vpop.f32.mrf.mxu0
    %v430 = vadd.f32 %v381, %v429
    %v431 = vpop.f32.mrf.mxu0
    %v432 = vadd.f32 %v383, %v431
    %433 = vdwg.mxu0
    %s434 = scalar_lea.vmem [#allocation2], 72
    %435 = vst [vmem:[%s434 + $0x8] sm:$0xff] %v395
    %436 = vst [vmem:[%s434 + $0x20] sm:$0xff] %v397
    %437 = vst [vmem:[%s434 + $0x38] sm:$0xff] %v400
    %438 = vst [vmem:[%s434 + $0x50] sm:$0xff] %v402
    %439 = vst [vmem:[%s434 + $0x68] sm:$0xff] %v405
    %440 = vst [vmem:[%s434 + $0x80] sm:$0xff] %v407
    %441 = vst [vmem:[%s434 + $0x98] sm:$0xff] %v410
    %442 = vst [vmem:[%s434 + $0xb0] sm:$0xff] %v412
    %443 = vst [vmem:[%s434 + $0x158] sm:$0xff] %v415
    %444 = vst [vmem:[%s434 + $0x170] sm:$0xff] %v417
    %445 = vst [vmem:[%s434 + $0x188] sm:$0xff] %v420
    %446 = vst [vmem:[%s434 + $0x1a0] sm:$0xff] %v422
    %447 = vst [vmem:[%s434 + $0x1b8] sm:$0xff] %v425
    %448 = vst [vmem:[%s434 + $0x1d0] sm:$0xff] %v427
    %449 = vst [vmem:[%s434 + $0x1e8] sm:$0xff] %v430
    %450 = vst [vmem:[%s434 + $0x200] sm:$0xff] %v432
    %v451 = vld [vmem:[%s2] sm:$0xff]
    %v452 = vld [vmem:[%s2 + $0x8] sm:$0xff]
    %v453 = vld [vmem:[%s2 + $0x10] sm:$0xff]
    %v454 = vld [vmem:[%s2 + $0x18] sm:$0xff]
    %v455 = vld [vmem:[%s2 + $0x20] sm:$0xff]
    %v456 = vld [vmem:[%s2 + $0x28] sm:$0xff]
    %v457 = vld [vmem:[%s2 + $0x30] sm:$0x1]
    %v458 = vld [vmem:[%s3] sm:$0x1]
    %v459 = vld [vmem:[#allocation2 + $0x5] sm:$0xff]
    %v460 = vld [vmem:[#allocation2 + $0x1d] sm:$0xff]
    %v461 = vld [vmem:[#allocation2 + $0x35] sm:$0xff]
    %v462 = vld [vmem:[#allocation2 + $0x4d] sm:$0xff]
    %v463 = vld [vmem:[#allocation2 + $0x65] sm:$0xff]
    %v464 = vld [vmem:[#allocation2 + $0x7d] sm:$0xff]
    %v465 = vld [vmem:[#allocation2 + $0x95] sm:$0xff]
    %v466 = vld [vmem:[#allocation2 + $0xad] sm:$0xff]
    %v467 = vld [vmem:[#allocation2 + $0xc5] sm:$0xff]
    %v468 = vld [vmem:[#allocation2 + $0xdd] sm:$0xff]
    %v469 = vld [vmem:[#allocation2 + $0xf5] sm:$0xff]
    %v470 = vld [vmem:[#allocation2 + $0x10d] sm:$0xff]
    %v471 = vld [vmem:[#allocation2 + $0x125] sm:$0xff]
    %v472 = vld [vmem:[#allocation2 + $0x13d] sm:$0xff]
    %v473 = vperm.slane %v451, 0
    %v474 = vmul.f32 %v459, %v473
    %v475 = vmul.f32 %v460, %v473
    %v476 = vmul.f32 %v461, %v473
    %v477 = vmul.f32 %v462, %v473
    %v478 = vmul.f32 %v463, %v473
    %v479 = vmul.f32 %v464, %v473
    %v480 = vmul.f32 %v465, %v473
    %v481 = vmul.f32 %v466, %v473
    %v482 = vadd.f32 %v474, 0.0
    %v483 = vadd.f32 %v475, 0.0
    %v484 = vadd.f32 %v476, 0.0
    %v485 = vadd.f32 %v477, 0.0
    %v486 = vadd.f32 %v478, 0.0
    %v487 = vadd.f32 %v479, 0.0
    %v488 = vadd.f32 %v480, 0.0
    %v489 = vadd.f32 %v481, 0.0
    %v490 = vperm.slane %v451, 7
    %v491 = vmul.f32 %v460, %v490
    %v492 = vmul.f32 %v461, %v490
    %v493 = vmul.f32 %v462, %v490
    %v494 = vmul.f32 %v463, %v490
    %v495 = vmul.f32 %v464, %v490
    %v496 = vmul.f32 %v465, %v490
    %v497 = vmul.f32 %v466, %v490
    %v498 = vmul.f32 %v467, %v490
    %v499 = vadd.f32 %v482, %v491
    %v500 = vadd.f32 %v483, %v492
    %v501 = vadd.f32 %v484, %v493
    %v502 = vadd.f32 %v485, %v494
    %v503 = vadd.f32 %v486, %v495
    %v504 = vadd.f32 %v487, %v496
    %v505 = vadd.f32 %v488, %v497
    %v506 = vadd.f32 %v489, %v498
    %v507 = vperm.slane %v452, 6
    %v508 = vmul.f32 %v461, %v507
    %v509 = vmul.f32 %v462, %v507
    %v510 = vmul.f32 %v463, %v507
    %v511 = vmul.f32 %v464, %v507
    %v512 = vmul.f32 %v465, %v507
    %v513 = vmul.f32 %v466, %v507
    %v514 = vmul.f32 %v467, %v507
    %v515 = vmul.f32 %v468, %v507
    %v516 = vadd.f32 %v499, %v508
    %v517 = vadd.f32 %v500, %v509
    %v518 = vadd.f32 %v501, %v510
    %v519 = vadd.f32 %v502, %v511
    %v520 = vadd.f32 %v503, %v512
    %v521 = vadd.f32 %v504, %v513
    %v522 = vadd.f32 %v505, %v514
    %v523 = vadd.f32 %v506, %v515
    %v524 = vperm.slane %v453, 5
    %v525 = vmul.f32 %v462, %v524
    %v526 = vmul.f32 %v463, %v524
    %v527 = vmul.f32 %v464, %v524
    %v528 = vmul.f32 %v465, %v524
    %v529 = vmul.f32 %v466, %v524
    %v530 = vmul.f32 %v467, %v524
    %v531 = vmul.f32 %v468, %v524
    %v532 = vmul.f32 %v469, %v524
    %v533 = vadd.f32 %v516, %v525
    %v534 = vadd.f32 %v517, %v526
    %v535 = vadd.f32 %v518, %v527
    %v536 = vadd.f32 %v519, %v528
    %v537 = vadd.f32 %v520, %v529
    %v538 = vadd.f32 %v521, %v530
    %v539 = vadd.f32 %v522, %v531
    %v540 = vadd.f32 %v523, %v532
    %v541 = vperm.slane %v454, 4
    %v542 = vmul.f32 %v463, %v541
    %v543 = vmul.f32 %v464, %v541
    %v544 = vmul.f32 %v465, %v541
    %v545 = vmul.f32 %v466, %v541
    %v546 = vmul.f32 %v467, %v541
    %v547 = vmul.f32 %v468, %v541
    %v548 = vmul.f32 %v469, %v541
    %v549 = vmul.f32 %v470, %v541
    %v550 = vadd.f32 %v533, %v542
    %v551 = vadd.f32 %v534, %v543
    %v552 = vadd.f32 %v535, %v544
    %v553 = vadd.f32 %v536, %v545
    %v554 = vadd.f32 %v537, %v546
    %v555 = vadd.f32 %v538, %v547
    %v556 = vadd.f32 %v539, %v548
    %v557 = vadd.f32 %v540, %v549
    %v558 = vperm.slane %v455, 3
    %v559 = vmul.f32 %v464, %v558
    %v560 = vmul.f32 %v465, %v558
    %v561 = vmul.f32 %v466, %v558
    %v562 = vmul.f32 %v467, %v558
    %v563 = vmul.f32 %v468, %v558
    %v564 = vmul.f32 %v469, %v558
    %v565 = vmul.f32 %v470, %v558
    %v566 = vmul.f32 %v471, %v558
    %v567 = vadd.f32 %v550, %v559
    %v568 = vadd.f32 %v551, %v560
    %v569 = vadd.f32 %v552, %v561
    %v570 = vadd.f32 %v553, %v562
    %v571 = vadd.f32 %v554, %v563
    %v572 = vadd.f32 %v555, %v564
    %v573 = vadd.f32 %v556, %v565
    %v574 = vadd.f32 %v557, %v566
    %v575 = vperm.slane %v456, 2
    %v576 = vmul.f32 %v465, %v575
    %v577 = vmul.f32 %v466, %v575
    %v578 = vmul.f32 %v467, %v575
    %v579 = vmul.f32 %v468, %v575
    %v580 = vmul.f32 %v469, %v575
    %v581 = vmul.f32 %v470, %v575
    %v582 = vmul.f32 %v471, %v575
    %v583 = vmul.f32 %v472, %v575
    %v584 = vadd.f32 %v567, %v576
    %v585 = vadd.f32 %v568, %v577
    %v586 = vadd.f32 %v569, %v578
    %v587 = vadd.f32 %v570, %v579
    %v588 = vadd.f32 %v571, %v580
    %v589 = vadd.f32 %v572, %v581
    %v590 = vadd.f32 %v573, %v582
    %v591 = vadd.f32 %v574, %v583
    %v592 = vld [vmem:[#allocation2 + $0x6] sm:$0xff]
    %v593 = vld [vmem:[#allocation2 + $0x1e] sm:$0xff]
    %v594 = vld [vmem:[#allocation2 + $0x36] sm:$0xff]
    %v595 = vld [vmem:[#allocation2 + $0x4e] sm:$0xff]
    %v596 = vld [vmem:[#allocation2 + $0x66] sm:$0xff]
    %v597 = vld [vmem:[#allocation2 + $0x7e] sm:$0xff]
    %v598 = vld [vmem:[#allocation2 + $0x96] sm:$0xff]
    %v599 = vld [vmem:[#allocation2 + $0xae] sm:$0xff]
    %v600 = vld [vmem:[#allocation2 + $0xc6] sm:$0xff]
    %v601 = vld [vmem:[#allocation2 + $0xde] sm:$0xff]
    %v602 = vld [vmem:[#allocation2 + $0xf6] sm:$0xff]
    %v603 = vld [vmem:[#allocation2 + $0x10e] sm:$0xff]
    %v604 = vld [vmem:[#allocation2 + $0x126] sm:$0xff]
    %v605 = vld [vmem:[#allocation2 + $0x13e] sm:$0xff]
    %v606 = vperm.slane %v451, 1
    %v607 = vmul.f32 %v592, %v606
    %v608 = vmul.f32 %v593, %v606
    %v609 = vmul.f32 %v594, %v606
    %v610 = vmul.f32 %v595, %v606
    %v611 = vmul.f32 %v596, %v606
    %v612 = vmul.f32 %v597, %v606
    %v613 = vmul.f32 %v598, %v606
    %v614 = vmul.f32 %v599, %v606
    %v615 = vadd.f32 %v584, %v607
    %v616 = vadd.f32 %v585, %v608
    %v617 = vadd.f32 %v586, %v609
    %v618 = vadd.f32 %v587, %v610
    %v619 = vadd.f32 %v588, %v611
    %v620 = vadd.f32 %v589, %v612
    %v621 = vadd.f32 %v590, %v613
    %v622 = vadd.f32 %v591, %v614
    %v623 = vperm.slane %v452, 0
    %v624 = vmul.f32 %v593, %v623
    %v625 = vmul.f32 %v594, %v623
    %v626 = vmul.f32 %v595, %v623
    %v627 = vmul.f32 %v596, %v623
    %v628 = vmul.f32 %v597, %v623
    %v629 = vmul.f32 %v598, %v623
    %v630 = vmul.f32 %v599, %v623
    %v631 = vmul.f32 %v600, %v623
    %v632 = vadd.f32 %v615, %v624
    %v633 = vadd.f32 %v616, %v625
    %v634 = vadd.f32 %v617, %v626
    %v635 = vadd.f32 %v618, %v627
    %v636 = vadd.f32 %v619, %v628
    %v637 = vadd.f32 %v620, %v629
    %v638 = vadd.f32 %v621, %v630
    %v639 = vadd.f32 %v622, %v631
    %v640 = vperm.slane %v452, 7
    %v641 = vmul.f32 %v594, %v640
    %v642 = vmul.f32 %v595, %v640
    %v643 = vmul.f32 %v596, %v640
    %v644 = vmul.f32 %v597, %v640
    %v645 = vmul.f32 %v598, %v640
    %v646 = vmul.f32 %v599, %v640
    %v647 = vmul.f32 %v600, %v640
    %v648 = vmul.f32 %v601, %v640
    %v649 = vadd.f32 %v632, %v641
    %v650 = vadd.f32 %v633, %v642
    %v651 = vadd.f32 %v634, %v643
    %v652 = vadd.f32 %v635, %v644
    %v653 = vadd.f32 %v636, %v645
    %v654 = vadd.f32 %v637, %v646
    %v655 = vadd.f32 %v638, %v647
    %v656 = vadd.f32 %v639, %v648
    %v657 = vperm.slane %v453, 6
    %v658 = vmul.f32 %v595, %v657
    %v659 = vmul.f32 %v596, %v657
    %v660 = vmul.f32 %v597, %v657
    %v661 = vmul.f32 %v598, %v657
    %v662 = vmul.f32 %v599, %v657
    %v663 = vmul.f32 %v600, %v657
    %v664 = vmul.f32 %v601, %v657
    %v665 = vmul.f32 %v602, %v657
    %v666 = vadd.f32 %v649, %v658
    %v667 = vadd.f32 %v650, %v659
    %v668 = vadd.f32 %v651, %v660
    %v669 = vadd.f32 %v652, %v661
    %v670 = vadd.f32 %v653, %v662
    %v671 = vadd.f32 %v654, %v663
    %v672 = vadd.f32 %v655, %v664
    %v673 = vadd.f32 %v656, %v665
    %v674 = vperm.slane %v454, 5
    %v675 = vmul.f32 %v596, %v674
    %v676 = vmul.f32 %v597, %v674
    %v677 = vmul.f32 %v598, %v674
    %v678 = vmul.f32 %v599, %v674
    %v679 = vmul.f32 %v600, %v674
    %v680 = vmul.f32 %v601, %v674
    %v681 = vmul.f32 %v602, %v674
    %v682 = vmul.f32 %v603, %v674
    %v683 = vadd.f32 %v666, %v675
    %v684 = vadd.f32 %v667, %v676
    %v685 = vadd.f32 %v668, %v677
    %v686 = vadd.f32 %v669, %v678
    %v687 = vadd.f32 %v670, %v679
    %v688 = vadd.f32 %v671, %v680
    %v689 = vadd.f32 %v672, %v681
    %v690 = vadd.f32 %v673, %v682
    %v691 = vperm.slane %v455, 4
    %v692 = vmul.f32 %v597, %v691
    %v693 = vmul.f32 %v598, %v691
    %v694 = vmul.f32 %v599, %v691
    %v695 = vmul.f32 %v600, %v691
    %v696 = vmul.f32 %v601, %v691
    %v697 = vmul.f32 %v602, %v691
    %v698 = vmul.f32 %v603, %v691
    %v699 = vmul.f32 %v604, %v691
    %v700 = vadd.f32 %v683, %v692
    %v701 = vadd.f32 %v684, %v693
    %v702 = vadd.f32 %v685, %v694
    %v703 = vadd.f32 %v686, %v695
    %v704 = vadd.f32 %v687, %v696
    %v705 = vadd.f32 %v688, %v697
    %v706 = vadd.f32 %v689, %v698
    %v707 = vadd.f32 %v690, %v699
    %v708 = vperm.slane %v456, 3
    %v709 = vmul.f32 %v598, %v708
    %v710 = vmul.f32 %v599, %v708
    %v711 = vmul.f32 %v600, %v708
    %v712 = vmul.f32 %v601, %v708
    %v713 = vmul.f32 %v602, %v708
    %v714 = vmul.f32 %v603, %v708
    %v715 = vmul.f32 %v604, %v708
    %v716 = vmul.f32 %v605, %v708
    %v717 = vadd.f32 %v700, %v709
    %v718 = vadd.f32 %v701, %v710
    %v719 = vadd.f32 %v702, %v711
    %v720 = vadd.f32 %v703, %v712
    %v721 = vadd.f32 %v704, %v713
    %v722 = vadd.f32 %v705, %v714
    %v723 = vadd.f32 %v706, %v715
    %v724 = vadd.f32 %v707, %v716
    %v725 = vld [vmem:[#allocation2 + $0x7] sm:$0xff]
    %v726 = vld [vmem:[#allocation2 + $0x1f] sm:$0xff]
    %v727 = vld [vmem:[#allocation2 + $0x37] sm:$0xff]
    %v728 = vld [vmem:[#allocation2 + $0x4f] sm:$0xff]
    %v729 = vld [vmem:[#allocation2 + $0x67] sm:$0xff]
    %v730 = vld [vmem:[#allocation2 + $0x7f] sm:$0xff]
    %v731 = vld [vmem:[#allocation2 + $0x97] sm:$0xff]
    %v732 = vld [vmem:[#allocation2 + $0xaf] sm:$0xff]
    %v733 = vld [vmem:[#allocation2 + $0xc7] sm:$0xff]
    %v734 = vld [vmem:[#allocation2 + $0xdf] sm:$0xff]
    %v735 = vld [vmem:[#allocation2 + $0xf7] sm:$0xff]
    %v736 = vld [vmem:[#allocation2 + $0x10f] sm:$0xff]
    %v737 = vld [vmem:[#allocation2 + $0x127] sm:$0xff]
    %v738 = vld [vmem:[#allocation2 + $0x13f] sm:$0xff]
    %v739 = vperm.slane %v451, 2
    %v740 = vmul.f32 %v725, %v739
    %v741 = vmul.f32 %v726, %v739
    %v742 = vmul.f32 %v727, %v739
    %v743 = vmul.f32 %v728, %v739
    %v744 = vmul.f32 %v729, %v739
    %v745 = vmul.f32 %v730, %v739
    %v746 = vmul.f32 %v731, %v739
    %v747 = vmul.f32 %v732, %v739
    %v748 = vadd.f32 %v717, %v740
    %v749 = vadd.f32 %v718, %v741
    %v750 = vadd.f32 %v719, %v742
    %v751 = vadd.f32 %v720, %v743
    %v752 = vadd.f32 %v721, %v744
    %v753 = vadd.f32 %v722, %v745
    %v754 = vadd.f32 %v723, %v746
    %v755 = vadd.f32 %v724, %v747
    %v756 = vperm.slane %v452, 1
    %v757 = vmul.f32 %v726, %v756
    %v758 = vmul.f32 %v727, %v756
    %v759 = vmul.f32 %v728, %v756
    %v760 = vmul.f32 %v729, %v756
    %v761 = vmul.f32 %v730, %v756
    %v762 = vmul.f32 %v731, %v756
    %v763 = vmul.f32 %v732, %v756
    %v764 = vmul.f32 %v733, %v756
    %v765 = vadd.f32 %v748, %v757
    %v766 = vadd.f32 %v749, %v758
    %v767 = vadd.f32 %v750, %v759
    %v768 = vadd.f32 %v751, %v760
    %v769 = vadd.f32 %v752, %v761
    %v770 = vadd.f32 %v753, %v762
    %v771 = vadd.f32 %v754, %v763
    %v772 = vadd.f32 %v755, %v764
    %v773 = vperm.slane %v453, 0
    %v774 = vmul.f32 %v727, %v773
    %v775 = vmul.f32 %v728, %v773
    %v776 = vmul.f32 %v729, %v773
    %v777 = vmul.f32 %v730, %v773
    %v778 = vmul.f32 %v731, %v773
    %v779 = vmul.f32 %v732, %v773
    %v780 = vmul.f32 %v733, %v773
    %v781 = vmul.f32 %v734, %v773
    %v782 = vadd.f32 %v765, %v774
    %v783 = vadd.f32 %v766, %v775
    %v784 = vadd.f32 %v767, %v776
    %v785 = vadd.f32 %v768, %v777
    %v786 = vadd.f32 %v769, %v778
    %v787 = vadd.f32 %v770, %v779
    %v788 = vadd.f32 %v771, %v780
    %v789 = vadd.f32 %v772, %v781
    %v790 = vperm.slane %v453, 7
    %v791 = vmul.f32 %v728, %v790
    %v792 = vmul.f32 %v729, %v790
    %v793 = vmul.f32 %v730, %v790
    %v794 = vmul.f32 %v731, %v790
    %v795 = vmul.f32 %v732, %v790
    %v796 = vmul.f32 %v733, %v790
    %v797 = vmul.f32 %v734, %v790
    %v798 = vmul.f32 %v735, %v790
    %v799 = vadd.f32 %v782, %v791
    %v800 = vadd.f32 %v783, %v792
    %v801 = vadd.f32 %v784, %v793
    %v802 = vadd.f32 %v785, %v794
    %v803 = vadd.f32 %v786, %v795
    %v804 = vadd.f32 %v787, %v796
    %v805 = vadd.f32 %v788, %v797
    %v806 = vadd.f32 %v789, %v798
    %v807 = vperm.slane %v454, 6
    %v808 = vmul.f32 %v729, %v807
    %v809 = vmul.f32 %v730, %v807
    %v810 = vmul.f32 %v731, %v807
    %v811 = vmul.f32 %v732, %v807
    %v812 = vmul.f32 %v733, %v807
    %v813 = vmul.f32 %v734, %v807
    %v814 = vmul.f32 %v735, %v807
    %v815 = vmul.f32 %v736, %v807
    %v816 = vadd.f32 %v799, %v808
    %v817 = vadd.f32 %v800, %v809
    %v818 = vadd.f32 %v801, %v810
    %v819 = vadd.f32 %v802, %v811
    %v820 = vadd.f32 %v803, %v812
    %v821 = vadd.f32 %v804, %v813
    %v822 = vadd.f32 %v805, %v814
    %v823 = vadd.f32 %v806, %v815
    %v824 = vperm.slane %v455, 5
    %v825 = vmul.f32 %v730, %v824
    %v826 = vmul.f32 %v731, %v824
    %v827 = vmul.f32 %v732, %v824
    %v828 = vmul.f32 %v733, %v824
    %v829 = vmul.f32 %v734, %v824
    %v830 = vmul.f32 %v735, %v824
    %v831 = vmul.f32 %v736, %v824
    %v832 = vmul.f32 %v737, %v824
    %v833 = vadd.f32 %v816, %v825
    %v834 = vadd.f32 %v817, %v826
    %v835 = vadd.f32 %v818, %v827
    %v836 = vadd.f32 %v819, %v828
    %v837 = vadd.f32 %v820, %v829
    %v838 = vadd.f32 %v821, %v830
    %v839 = vadd.f32 %v822, %v831
    %v840 = vadd.f32 %v823, %v832
    %v841 = vperm.slane %v456, 4
    %v842 = vmul.f32 %v731, %v841
    %v843 = vmul.f32 %v732, %v841
    %v844 = vmul.f32 %v733, %v841
    %v845 = vmul.f32 %v734, %v841
    %v846 = vmul.f32 %v735, %v841
    %v847 = vmul.f32 %v736, %v841
    %v848 = vmul.f32 %v737, %v841
    %v849 = vmul.f32 %v738, %v841
    %v850 = vadd.f32 %v833, %v842
    %v851 = vadd.f32 %v834, %v843
    %v852 = vadd.f32 %v835, %v844
    %v853 = vadd.f32 %v836, %v845
    %v854 = vadd.f32 %v837, %v846
    %v855 = vadd.f32 %v838, %v847
    %v856 = vadd.f32 %v839, %v848
    %v857 = vadd.f32 %v840, %v849
    %v858 = vld [vmem:[#allocation2 + $0x8] sm:$0xff]
    %v859 = vld [vmem:[#allocation2 + $0x20] sm:$0xff]
    %v860 = vld [vmem:[#allocation2 + $0x38] sm:$0xff]
    %v861 = vld [vmem:[#allocation2 + $0x50] sm:$0xff]
    %v862 = vld [vmem:[#allocation2 + $0x68] sm:$0xff]
    %v863 = vld [vmem:[#allocation2 + $0x80] sm:$0xff]
    %v864 = vld [vmem:[#allocation2 + $0x98] sm:$0xff]
    %v865 = vld [vmem:[#allocation2 + $0xb0] sm:$0xff]
    %v866 = vld [vmem:[#allocation2 + $0xc8] sm:$0xff]
    %v867 = vld [vmem:[#allocation2 + $0xe0] sm:$0xff]
    %v868 = vld [vmem:[#allocation2 + $0xf8] sm:$0xff]
    %v869 = vld [vmem:[#allocation2 + $0x110] sm:$0xff]
    %v870 = vld [vmem:[#allocation2 + $0x128] sm:$0xff]
    %v871 = vld [vmem:[#allocation2 + $0x140] sm:$0xff]
    %v872 = vperm.slane %v451, 3
    %v873 = vmul.f32 %v858, %v872
    %v874 = vmul.f32 %v859, %v872
    %v875 = vmul.f32 %v860, %v872
    %v876 = vmul.f32 %v861, %v872
    %v877 = vmul.f32 %v862, %v872
    %v878 = vmul.f32 %v863, %v872
    %v879 = vmul.f32 %v864, %v872
    %v880 = vmul.f32 %v865, %v872
    %v881 = vadd.f32 %v850, %v873
    %v882 = vadd.f32 %v851, %v874
    %v883 = vadd.f32 %v852, %v875
    %v884 = vadd.f32 %v853, %v876
    %v885 = vadd.f32 %v854, %v877
    %v886 = vadd.f32 %v855, %v878
    %v887 = vadd.f32 %v856, %v879
    %v888 = vadd.f32 %v857, %v880
    %v889 = vperm.slane %v452, 2
    %v890 = vmul.f32 %v859, %v889
    %v891 = vmul.f32 %v860, %v889
    %v892 = vmul.f32 %v861, %v889
    %v893 = vmul.f32 %v862, %v889
    %v894 = vmul.f32 %v863, %v889
    %v895 = vmul.f32 %v864, %v889
    %v896 = vmul.f32 %v865, %v889
    %v897 = vmul.f32 %v866, %v889
    %v898 = vadd.f32 %v881, %v890
    %v899 = vadd.f32 %v882, %v891
    %v900 = vadd.f32 %v883, %v892
    %v901 = vadd.f32 %v884, %v893
    %v902 = vadd.f32 %v885, %v894
    %v903 = vadd.f32 %v886, %v895
    %v904 = vadd.f32 %v887, %v896
    %v905 = vadd.f32 %v888, %v897
    %v906 = vperm.slane %v453, 1
    %v907 = vmul.f32 %v860, %v906
    %v908 = vmul.f32 %v861, %v906
    %v909 = vmul.f32 %v862, %v906
    %v910 = vmul.f32 %v863, %v906
    %v911 = vmul.f32 %v864, %v906
    %v912 = vmul.f32 %v865, %v906
    %v913 = vmul.f32 %v866, %v906
    %v914 = vmul.f32 %v867, %v906
    %v915 = vadd.f32 %v898, %v907
    %v916 = vadd.f32 %v899, %v908
    %v917 = vadd.f32 %v900, %v909
    %v918 = vadd.f32 %v901, %v910
    %v919 = vadd.f32 %v902, %v911
    %v920 = vadd.f32 %v903, %v912
    %v921 = vadd.f32 %v904, %v913
    %v922 = vadd.f32 %v905, %v914
    %v923 = vperm.slane %v454, 0
    %v924 = vmul.f32 %v861, %v923
    %v925 = vmul.f32 %v862, %v923
    %v926 = vmul.f32 %v863, %v923
    %v927 = vmul.f32 %v864, %v923
    %v928 = vmul.f32 %v865, %v923
    %v929 = vmul.f32 %v866, %v923
    %v930 = vmul.f32 %v867, %v923
    %v931 = vmul.f32 %v868, %v923
    %v932 = vadd.f32 %v915, %v924
    %v933 = vadd.f32 %v916, %v925
    %v934 = vadd.f32 %v917, %v926
    %v935 = vadd.f32 %v918, %v927
    %v936 = vadd.f32 %v919, %v928
    %v937 = vadd.f32 %v920, %v929
    %v938 = vadd.f32 %v921, %v930
    %v939 = vadd.f32 %v922, %v931
    %v940 = vperm.slane %v454, 7
    %v941 = vmul.f32 %v862, %v940
    %v942 = vmul.f32 %v863, %v940
    %v943 = vmul.f32 %v864, %v940
    %v944 = vmul.f32 %v865, %v940
    %v945 = vmul.f32 %v866, %v940
    %v946 = vmul.f32 %v867, %v940
    %v947 = vmul.f32 %v868, %v940
    %v948 = vmul.f32 %v869, %v940
    %v949 = vadd.f32 %v932, %v941
    %v950 = vadd.f32 %v933, %v942
    %v951 = vadd.f32 %v934, %v943
    %v952 = vadd.f32 %v935, %v944
    %v953 = vadd.f32 %v936, %v945
    %v954 = vadd.f32 %v937, %v946
    %v955 = vadd.f32 %v938, %v947
    %v956 = vadd.f32 %v939, %v948
    %v957 = vperm.slane %v455, 6
    %v958 = vmul.f32 %v863, %v957
    %v959 = vmul.f32 %v864, %v957
    %v960 = vmul.f32 %v865, %v957
    %v961 = vmul.f32 %v866, %v957
    %v962 = vmul.f32 %v867, %v957
    %v963 = vmul.f32 %v868, %v957
    %v964 = vmul.f32 %v869, %v957
    %v965 = vmul.f32 %v870, %v957
    %v966 = vadd.f32 %v949, %v958
    %v967 = vadd.f32 %v950, %v959
    %v968 = vadd.f32 %v951, %v960
    %v969 = vadd.f32 %v952, %v961
    %v970 = vadd.f32 %v953, %v962
    %v971 = vadd.f32 %v954, %v963
    %v972 = vadd.f32 %v955, %v964
    %v973 = vadd.f32 %v956, %v965
    %v974 = vperm.slane %v456, 5
    %v975 = vmul.f32 %v864, %v974
    %v976 = vmul.f32 %v865, %v974
    %v977 = vmul.f32 %v866, %v974
    %v978 = vmul.f32 %v867, %v974
    %v979 = vmul.f32 %v868, %v974
    %v980 = vmul.f32 %v869, %v974
    %v981 = vmul.f32 %v870, %v974
    %v982 = vmul.f32 %v871, %v974
    %v983 = vadd.f32 %v966, %v975
    %v984 = vadd.f32 %v967, %v976
    %v985 = vadd.f32 %v968, %v977
    %v986 = vadd.f32 %v969, %v978
    %v987 = vadd.f32 %v970, %v979
    %v988 = vadd.f32 %v971, %v980
    %v989 = vadd.f32 %v972, %v981
    %v990 = vadd.f32 %v973, %v982
    %v991 = vld [vmem:[#allocation2 + $0x9] sm:$0xff]
    %v992 = vld [vmem:[#allocation2 + $0x21] sm:$0xff]
    %v993 = vld [vmem:[#allocation2 + $0x39] sm:$0xff]
    %v994 = vld [vmem:[#allocation2 + $0x51] sm:$0xff]
    %v995 = vld [vmem:[#allocation2 + $0x69] sm:$0xff]
    %v996 = vld [vmem:[#allocation2 + $0x81] sm:$0xff]
    %v997 = vld [vmem:[#allocation2 + $0x99] sm:$0xff]
    %v998 = vld [vmem:[#allocation2 + $0xb1] sm:$0xff]
    %v999 = vld [vmem:[#allocation2 + $0xc9] sm:$0xff]
    %v1000 = vld [vmem:[#allocation2 + $0xe1] sm:$0xff]
    %v1001 = vld [vmem:[#allocation2 + $0xf9] sm:$0xff]
    %v1002 = vld [vmem:[#allocation2 + $0x111] sm:$0xff]
    %v1003 = vld [vmem:[#allocation2 + $0x129] sm:$0xff]
    %v1004 = vld [vmem:[#allocation2 + $0x141] sm:$0xff]
    %v1005 = vperm.slane %v451, 4
    %v1006 = vmul.f32 %v991, %v1005
    %v1007 = vmul.f32 %v992, %v1005
    %v1008 = vmul.f32 %v993, %v1005
    %v1009 = vmul.f32 %v994, %v1005
    %v1010 = vmul.f32 %v995, %v1005
    %v1011 = vmul.f32 %v996, %v1005
    %v1012 = vmul.f32 %v997, %v1005
    %v1013 = vmul.f32 %v998, %v1005
    %v1014 = vadd.f32 %v983, %v1006
    %v1015 = vadd.f32 %v984, %v1007
    %v1016 = vadd.f32 %v985, %v1008
    %v1017 = vadd.f32 %v986, %v1009
    %v1018 = vadd.f32 %v987, %v1010
    %v1019 = vadd.f32 %v988, %v1011
    %v1020 = vadd.f32 %v989, %v1012
    %v1021 = vadd.f32 %v990, %v1013
    %v1022 = vperm.slane %v452, 3
    %v1023 = vmul.f32 %v992, %v1022
    %v1024 = vmul.f32 %v993, %v1022
    %v1025 = vmul.f32 %v994, %v1022
    %v1026 = vmul.f32 %v995, %v1022
    %v1027 = vmul.f32 %v996, %v1022
    %v1028 = vmul.f32 %v997, %v1022
    %v1029 = vmul.f32 %v998, %v1022
    %v1030 = vmul.f32 %v999, %v1022
    %v1031 = vadd.f32 %v1014, %v1023
    %v1032 = vadd.f32 %v1015, %v1024
    %v1033 = vadd.f32 %v1016, %v1025
    %v1034 = vadd.f32 %v1017, %v1026
    %v1035 = vadd.f32 %v1018, %v1027
    %v1036 = vadd.f32 %v1019, %v1028
    %v1037 = vadd.f32 %v1020, %v1029
    %v1038 = vadd.f32 %v1021, %v1030
    %v1039 = vperm.slane %v453, 2
    %v1040 = vmul.f32 %v993, %v1039
    %v1041 = vmul.f32 %v994, %v1039
    %v1042 = vmul.f32 %v995, %v1039
    %v1043 = vmul.f32 %v996, %v1039
    %v1044 = vmul.f32 %v997, %v1039
    %v1045 = vmul.f32 %v998, %v1039
    %v1046 = vmul.f32 %v999, %v1039
    %v1047 = vmul.f32 %v1000, %v1039
    %v1048 = vadd.f32 %v1031, %v1040
    %v1049 = vadd.f32 %v1032, %v1041
    %v1050 = vadd.f32 %v1033, %v1042
    %v1051 = vadd.f32 %v1034, %v1043
    %v1052 = vadd.f32 %v1035, %v1044
    %v1053 = vadd.f32 %v1036, %v1045
    %v1054 = vadd.f32 %v1037, %v1046
    %v1055 = vadd.f32 %v1038, %v1047
    %v1056 = vperm.slane %v454, 1
    %v1057 = vmul.f32 %v994, %v1056
    %v1058 = vmul.f32 %v995, %v1056
    %v1059 = vmul.f32 %v996, %v1056
    %v1060 = vmul.f32 %v997, %v1056
    %v1061 = vmul.f32 %v998, %v1056
    %v1062 = vmul.f32 %v999, %v1056
    %v1063 = vmul.f32 %v1000, %v1056
    %v1064 = vmul.f32 %v1001, %v1056
    %v1065 = vadd.f32 %v1048, %v1057
    %v1066 = vadd.f32 %v1049, %v1058
    %v1067 = vadd.f32 %v1050, %v1059
    %v1068 = vadd.f32 %v1051, %v1060
    %v1069 = vadd.f32 %v1052, %v1061
    %v1070 = vadd.f32 %v1053, %v1062
    %v1071 = vadd.f32 %v1054, %v1063
    %v1072 = vadd.f32 %v1055, %v1064
    %v1073 = vperm.slane %v455, 0
    %v1074 = vmul.f32 %v995, %v1073
    %v1075 = vmul.f32 %v996, %v1073
    %v1076 = vmul.f32 %v997, %v1073
    %v1077 = vmul.f32 %v998, %v1073
    %v1078 = vmul.f32 %v999, %v1073
    %v1079 = vmul.f32 %v1000, %v1073
    %v1080 = vmul.f32 %v1001, %v1073
    %v1081 = vmul.f32 %v1002, %v1073
    %v1082 = vadd.f32 %v1065, %v1074
    %v1083 = vadd.f32 %v1066, %v1075
    %v1084 = vadd.f32 %v1067, %v1076
    %v1085 = vadd.f32 %v1068, %v1077
    %v1086 = vadd.f32 %v1069, %v1078
    %v1087 = vadd.f32 %v1070, %v1079
    %v1088 = vadd.f32 %v1071, %v1080
    %v1089 = vadd.f32 %v1072, %v1081
    %v1090 = vperm.slane %v455, 7
    %v1091 = vmul.f32 %v996, %v1090
    %v1092 = vmul.f32 %v997, %v1090
    %v1093 = vmul.f32 %v998, %v1090
    %v1094 = vmul.f32 %v999, %v1090
    %v1095 = vmul.f32 %v1000, %v1090
    %v1096 = vmul.f32 %v1001, %v1090
    %v1097 = vmul.f32 %v1002, %v1090
    %v1098 = vmul.f32 %v1003, %v1090
    %v1099 = vadd.f32 %v1082, %v1091
    %v1100 = vadd.f32 %v1083, %v1092
    %v1101 = vadd.f32 %v1084, %v1093
    %v1102 = vadd.f32 %v1085, %v1094
    %v1103 = vadd.f32 %v1086, %v1095
    %v1104 = vadd.f32 %v1087, %v1096
    %v1105 = vadd.f32 %v1088, %v1097
    %v1106 = vadd.f32 %v1089, %v1098
    %v1107 = vperm.slane %v456, 6
    %v1108 = vmul.f32 %v997, %v1107
    %v1109 = vmul.f32 %v998, %v1107
    %v1110 = vmul.f32 %v999, %v1107
    %v1111 = vmul.f32 %v1000, %v1107
    %v1112 = vmul.f32 %v1001, %v1107
    %v1113 = vmul.f32 %v1002, %v1107
    %v1114 = vmul.f32 %v1003, %v1107
    %v1115 = vmul.f32 %v1004, %v1107
    %v1116 = vadd.f32 %v1099, %v1108
    %v1117 = vadd.f32 %v1100, %v1109
    %v1118 = vadd.f32 %v1101, %v1110
    %v1119 = vadd.f32 %v1102, %v1111
    %v1120 = vadd.f32 %v1103, %v1112
    %v1121 = vadd.f32 %v1104, %v1113
    %v1122 = vadd.f32 %v1105, %v1114
    %v1123 = vadd.f32 %v1106, %v1115
    %v1124 = vld [vmem:[#allocation2 + $0xa] sm:$0xff]
    %v1125 = vld [vmem:[#allocation2 + $0x22] sm:$0xff]
    %v1126 = vld [vmem:[#allocation2 + $0x3a] sm:$0xff]
    %v1127 = vld [vmem:[#allocation2 + $0x52] sm:$0xff]
    %v1128 = vld [vmem:[#allocation2 + $0x6a] sm:$0xff]
    %v1129 = vld [vmem:[#allocation2 + $0x82] sm:$0xff]
    %v1130 = vld [vmem:[#allocation2 + $0x9a] sm:$0xff]
    %v1131 = vld [vmem:[#allocation2 + $0xb2] sm:$0xff]
    %v1132 = vld [vmem:[#allocation2 + $0xca] sm:$0xff]
    %v1133 = vld [vmem:[#allocation2 + $0xe2] sm:$0xff]
    %v1134 = vld [vmem:[#allocation2 + $0xfa] sm:$0xff]
    %v1135 = vld [vmem:[#allocation2 + $0x112] sm:$0xff]
    %v1136 = vld [vmem:[#allocation2 + $0x12a] sm:$0xff]
    %v1137 = vld [vmem:[#allocation2 + $0x142] sm:$0xff]
    %v1138 = vperm.slane %v451, 5
    %v1139 = vmul.f32 %v1124, %v1138
    %v1140 = vmul.f32 %v1125, %v1138
    %v1141 = vmul.f32 %v1126, %v1138
    %v1142 = vmul.f32 %v1127, %v1138
    %v1143 = vmul.f32 %v1128, %v1138
    %v1144 = vmul.f32 %v1129, %v1138
    %v1145 = vmul.f32 %v1130, %v1138
    %v1146 = vmul.f32 %v1131, %v1138
    %v1147 = vadd.f32 %v1116, %v1139
    %v1148 = vadd.f32 %v1117, %v1140
    %v1149 = vadd.f32 %v1118, %v1141
    %v1150 = vadd.f32 %v1119, %v1142
    %v1151 = vadd.f32 %v1120, %v1143
    %v1152 = vadd.f32 %v1121, %v1144
    %v1153 = vadd.f32 %v1122, %v1145
    %v1154 = vadd.f32 %v1123, %v1146
    %v1155 = vperm.slane %v452, 4
    %v1156 = vmul.f32 %v1125, %v1155
    %v1157 = vmul.f32 %v1126, %v1155
    %v1158 = vmul.f32 %v1127, %v1155
    %v1159 = vmul.f32 %v1128, %v1155
    %v1160 = vmul.f32 %v1129, %v1155
    %v1161 = vmul.f32 %v1130, %v1155
    %v1162 = vmul.f32 %v1131, %v1155
    %v1163 = vmul.f32 %v1132, %v1155
    %v1164 = vadd.f32 %v1147, %v1156
    %v1165 = vadd.f32 %v1148, %v1157
    %v1166 = vadd.f32 %v1149, %v1158
    %v1167 = vadd.f32 %v1150, %v1159
    %v1168 = vadd.f32 %v1151, %v1160
    %v1169 = vadd.f32 %v1152, %v1161
    %v1170 = vadd.f32 %v1153, %v1162
    %v1171 = vadd.f32 %v1154, %v1163
    %v1172 = vperm.slane %v453, 3
    %v1173 = vmul.f32 %v1126, %v1172
    %v1174 = vmul.f32 %v1127, %v1172
    %v1175 = vmul.f32 %v1128, %v1172
    %v1176 = vmul.f32 %v1129, %v1172
    %v1177 = vmul.f32 %v1130, %v1172
    %v1178 = vmul.f32 %v1131, %v1172
    %v1179 = vmul.f32 %v1132, %v1172
    %v1180 = vmul.f32 %v1133, %v1172
    %v1181 = vadd.f32 %v1164, %v1173
    %v1182 = vadd.f32 %v1165, %v1174
    %v1183 = vadd.f32 %v1166, %v1175
    %v1184 = vadd.f32 %v1167, %v1176
    %v1185 = vadd.f32 %v1168, %v1177
    %v1186 = vadd.f32 %v1169, %v1178
    %v1187 = vadd.f32 %v1170, %v1179
    %v1188 = vadd.f32 %v1171, %v1180
    %v1189 = vperm.slane %v454, 2
    %v1190 = vmul.f32 %v1127, %v1189
    %v1191 = vmul.f32 %v1128, %v1189
    %v1192 = vmul.f32 %v1129, %v1189
    %v1193 = vmul.f32 %v1130, %v1189
    %v1194 = vmul.f32 %v1131, %v1189
    %v1195 = vmul.f32 %v1132, %v1189
    %v1196 = vmul.f32 %v1133, %v1189
    %v1197 = vmul.f32 %v1134, %v1189
    %v1198 = vadd.f32 %v1181, %v1190
    %v1199 = vadd.f32 %v1182, %v1191
    %v1200 = vadd.f32 %v1183, %v1192
    %v1201 = vadd.f32 %v1184, %v1193
    %v1202 = vadd.f32 %v1185, %v1194
    %v1203 = vadd.f32 %v1186, %v1195
    %v1204 = vadd.f32 %v1187, %v1196
    %v1205 = vadd.f32 %v1188, %v1197
    %v1206 = vperm.slane %v455, 1
    %v1207 = vmul.f32 %v1128, %v1206
    %v1208 = vmul.f32 %v1129, %v1206
    %v1209 = vmul.f32 %v1130, %v1206
    %v1210 = vmul.f32 %v1131, %v1206
    %v1211 = vmul.f32 %v1132, %v1206
    %v1212 = vmul.f32 %v1133, %v1206
    %v1213 = vmul.f32 %v1134, %v1206
    %v1214 = vmul.f32 %v1135, %v1206
    %v1215 = vadd.f32 %v1198, %v1207
    %v1216 = vadd.f32 %v1199, %v1208
    %v1217 = vadd.f32 %v1200, %v1209
    %v1218 = vadd.f32 %v1201, %v1210
    %v1219 = vadd.f32 %v1202, %v1211
    %v1220 = vadd.f32 %v1203, %v1212
    %v1221 = vadd.f32 %v1204, %v1213
    %v1222 = vadd.f32 %v1205, %v1214
    %v1223 = vperm.slane %v456, 0
    %v1224 = vmul.f32 %v1129, %v1223
    %v1225 = vmul.f32 %v1130, %v1223
    %v1226 = vmul.f32 %v1131, %v1223
    %v1227 = vmul.f32 %v1132, %v1223
    %v1228 = vmul.f32 %v1133, %v1223
    %v1229 = vmul.f32 %v1134, %v1223
    %v1230 = vmul.f32 %v1135, %v1223
    %v1231 = vmul.f32 %v1136, %v1223
    %v1232 = vadd.f32 %v1215, %v1224
    %v1233 = vadd.f32 %v1216, %v1225
    %v1234 = vadd.f32 %v1217, %v1226
    %v1235 = vadd.f32 %v1218, %v1227
    %v1236 = vadd.f32 %v1219, %v1228
    %v1237 = vadd.f32 %v1220, %v1229
    %v1238 = vadd.f32 %v1221, %v1230
    %v1239 = vadd.f32 %v1222, %v1231
    %v1240 = vperm.slane %v456, 7
    %v1241 = vmul.f32 %v1130, %v1240
    %v1242 = vmul.f32 %v1131, %v1240
    %v1243 = vmul.f32 %v1132, %v1240
    %v1244 = vmul.f32 %v1133, %v1240
    %v1245 = vmul.f32 %v1134, %v1240
    %v1246 = vmul.f32 %v1135, %v1240
    %v1247 = vmul.f32 %v1136, %v1240
    %v1248 = vmul.f32 %v1137, %v1240
    %v1249 = vadd.f32 %v1232, %v1241
    %v1250 = vadd.f32 %v1233, %v1242
    %v1251 = vadd.f32 %v1234, %v1243
    %v1252 = vadd.f32 %v1235, %v1244
    %v1253 = vadd.f32 %v1236, %v1245
    %v1254 = vadd.f32 %v1237, %v1246
    %v1255 = vadd.f32 %v1238, %v1247
    %v1256 = vadd.f32 %v1239, %v1248
    %v1257 = vld [vmem:[#allocation2 + $0xb] sm:$0xff]
    %v1258 = vld [vmem:[#allocation2 + $0x23] sm:$0xff]
    %v1259 = vld [vmem:[#allocation2 + $0x3b] sm:$0xff]
    %v1260 = vld [vmem:[#allocation2 + $0x53] sm:$0xff]
    %v1261 = vld [vmem:[#allocation2 + $0x6b] sm:$0xff]
    %v1262 = vld [vmem:[#allocation2 + $0x83] sm:$0xff]
    %v1263 = vld [vmem:[#allocation2 + $0x9b] sm:$0xff]
    %v1264 = vld [vmem:[#allocation2 + $0xb3] sm:$0xff]
    %v1265 = vld [vmem:[#allocation2 + $0xcb] sm:$0xff]
    %v1266 = vld [vmem:[#allocation2 + $0xe3] sm:$0xff]
    %v1267 = vld [vmem:[#allocation2 + $0xfb] sm:$0xff]
    %v1268 = vld [vmem:[#allocation2 + $0x113] sm:$0xff]
    %v1269 = vld [vmem:[#allocation2 + $0x12b] sm:$0xff]
    %v1270 = vld [vmem:[#allocation2 + $0x143] sm:$0xff]
    %v1271 = vperm.slane %v451, 6
    %v1272 = vmul.f32 %v1257, %v1271
    %v1273 = vmul.f32 %v1258, %v1271
    %v1274 = vmul.f32 %v1259, %v1271
    %v1275 = vmul.f32 %v1260, %v1271
    %v1276 = vmul.f32 %v1261, %v1271
    %v1277 = vmul.f32 %v1262, %v1271
    %v1278 = vmul.f32 %v1263, %v1271
    %v1279 = vmul.f32 %v1264, %v1271
    %v1280 = vadd.f32 %v1249, %v1272
    %v1281 = vadd.f32 %v1250, %v1273
    %v1282 = vadd.f32 %v1251, %v1274
    %v1283 = vadd.f32 %v1252, %v1275
    %v1284 = vadd.f32 %v1253, %v1276
    %v1285 = vadd.f32 %v1254, %v1277
    %v1286 = vadd.f32 %v1255, %v1278
    %v1287 = vadd.f32 %v1256, %v1279
    %v1288 = vperm.slane %v452, 5
    %v1289 = vmul.f32 %v1258, %v1288
    %v1290 = vmul.f32 %v1259, %v1288
    %v1291 = vmul.f32 %v1260, %v1288
    %v1292 = vmul.f32 %v1261, %v1288
    %v1293 = vmul.f32 %v1262, %v1288
    %v1294 = vmul.f32 %v1263, %v1288
    %v1295 = vmul.f32 %v1264, %v1288
    %v1296 = vmul.f32 %v1265, %v1288
    %v1297 = vadd.f32 %v1280, %v1289
    %v1298 = vadd.f32 %v1281, %v1290
    %v1299 = vadd.f32 %v1282, %v1291
    %v1300 = vadd.f32 %v1283, %v1292
    %v1301 = vadd.f32 %v1284, %v1293
    %v1302 = vadd.f32 %v1285, %v1294
    %v1303 = vadd.f32 %v1286, %v1295
    %v1304 = vadd.f32 %v1287, %v1296
    %v1305 = vperm.slane %v453, 4
    %v1306 = vmul.f32 %v1259, %v1305
    %v1307 = vmul.f32 %v1260, %v1305
    %v1308 = vmul.f32 %v1261, %v1305
    %v1309 = vmul.f32 %v1262, %v1305
    %v1310 = vmul.f32 %v1263, %v1305
    %v1311 = vmul.f32 %v1264, %v1305
    %v1312 = vmul.f32 %v1265, %v1305
    %v1313 = vmul.f32 %v1266, %v1305
    %v1314 = vadd.f32 %v1297, %v1306
    %v1315 = vadd.f32 %v1298, %v1307
    %v1316 = vadd.f32 %v1299, %v1308
    %v1317 = vadd.f32 %v1300, %v1309
    %v1318 = vadd.f32 %v1301, %v1310
    %v1319 = vadd.f32 %v1302, %v1311
    %v1320 = vadd.f32 %v1303, %v1312
    %v1321 = vadd.f32 %v1304, %v1313
    %v1322 = vperm.slane %v454, 3
    %v1323 = vmul.f32 %v1260, %v1322
    %v1324 = vmul.f32 %v1261, %v1322
    %v1325 = vmul.f32 %v1262, %v1322
    %v1326 = vmul.f32 %v1263, %v1322
    %v1327 = vmul.f32 %v1264, %v1322
    %v1328 = vmul.f32 %v1265, %v1322
    %v1329 = vmul.f32 %v1266, %v1322
    %v1330 = vmul.f32 %v1267, %v1322
    %v1331 = vadd.f32 %v1314, %v1323
    %v1332 = vadd.f32 %v1315, %v1324
    %v1333 = vadd.f32 %v1316, %v1325
    %v1334 = vadd.f32 %v1317, %v1326
    %v1335 = vadd.f32 %v1318, %v1327
    %v1336 = vadd.f32 %v1319, %v1328
    %v1337 = vadd.f32 %v1320, %v1329
    %v1338 = vadd.f32 %v1321, %v1330
    %v1339 = vperm.slane %v455, 2
    %v1340 = vmul.f32 %v1261, %v1339
    %v1341 = vmul.f32 %v1262, %v1339
    %v1342 = vmul.f32 %v1263, %v1339
    %v1343 = vmul.f32 %v1264, %v1339
    %v1344 = vmul.f32 %v1265, %v1339
    %v1345 = vmul.f32 %v1266, %v1339
    %v1346 = vmul.f32 %v1267, %v1339
    %v1347 = vmul.f32 %v1268, %v1339
    %v1348 = vadd.f32 %v1331, %v1340
    %v1349 = vadd.f32 %v1332, %v1341
    %v1350 = vadd.f32 %v1333, %v1342
    %v1351 = vadd.f32 %v1334, %v1343
    %v1352 = vadd.f32 %v1335, %v1344
    %v1353 = vadd.f32 %v1336, %v1345
    %v1354 = vadd.f32 %v1337, %v1346
    %v1355 = vadd.f32 %v1338, %v1347
    %v1356 = vperm.slane %v456, 1
    %v1357 = vmul.f32 %v1262, %v1356
    %v1358 = vmul.f32 %v1263, %v1356
    %v1359 = vmul.f32 %v1264, %v1356
    %v1360 = vmul.f32 %v1265, %v1356
    %v1361 = vmul.f32 %v1266, %v1356
    %v1362 = vmul.f32 %v1267, %v1356
    %v1363 = vmul.f32 %v1268, %v1356
    %v1364 = vmul.f32 %v1269, %v1356
    %v1365 = vadd.f32 %v1348, %v1357
    %v1366 = vadd.f32 %v1349, %v1358
    %v1367 = vadd.f32 %v1350, %v1359
    %v1368 = vadd.f32 %v1351, %v1360
    %v1369 = vadd.f32 %v1352, %v1361
    %v1370 = vadd.f32 %v1353, %v1362
    %v1371 = vadd.f32 %v1354, %v1363
    %v1372 = vadd.f32 %v1355, %v1364
    %v1373 = vperm.slane %v457, 0
    %v1374 = vmul.f32 %v1263, %v1373
    %v1375 = vmul.f32 %v1264, %v1373
    %v1376 = vmul.f32 %v1265, %v1373
    %v1377 = vmul.f32 %v1266, %v1373
    %v1378 = vmul.f32 %v1267, %v1373
    %v1379 = vmul.f32 %v1268, %v1373
    %v1380 = vmul.f32 %v1269, %v1373
    %v1381 = vmul.f32 %v1270, %v1373
    %v1382 = vadd.f32 %v1365, %v1374
    %v1383 = vadd.f32 %v1366, %v1375
    %v1384 = vadd.f32 %v1367, %v1376
    %v1385 = vadd.f32 %v1368, %v1377
    %v1386 = vadd.f32 %v1369, %v1378
    %v1387 = vadd.f32 %v1370, %v1379
    %v1388 = vadd.f32 %v1371, %v1380
    %v1389 = vadd.f32 %v1372, %v1381
    %v1391 = vperm.slane %v458, 0
    %v1393 = vadd.f32 %v1382, %v1391
    %v1394 = vadd.f32 %v1383, %v1391
    %v1395 = vadd.f32 %v1384, %v1391
    %v1396 = vadd.f32 %v1385, %v1391
    %v1397 = vadd.f32 %v1386, %v1391
    %v1398 = vadd.f32 %v1387, %v1391
    %v1399 = vadd.f32 %v1388, %v1391
    %v1400 = vadd.f32 %v1389, %v1391
    %v1401 = vmax.f32 %v1393, 0.0
    %v1402 = vmax.f32 %v1394, 0.0
    %v1403 = vmax.f32 %v1395, 0.0
    %v1404 = vmax.f32 %v1396, 0.0
    %v1405 = vmax.f32 %v1397, 0.0
    %v1406 = vmax.f32 %v1398, 0.0
    %v1407 = vmax.f32 %v1399, 0.0
    %v1408 = vmax.f32 %v1400, 0.0
    %v1409 = vpack.c.bf16 %v1401, %v1401
    %v1410 = vpack.c.bf16 %v1402, %v1402
    %v1411 = vpack.c.bf16 %v1403, %v1403
    %v1412 = vpack.c.bf16 %v1404, %v1404
    %v1413 = vpack.c.bf16 %v1405, %v1405
    %v1414 = vpack.c.bf16 %v1406, %v1406
    %v1415 = vpack.c.bf16 %v1407, %v1407
    %v1416 = vpack.c.bf16 %v1408, %v1408
    %1417 = vst [vmem:[#allocation3] sm:$0xf] %v1409
    %1418 = vst [vmem:[#allocation3 + $0x4] sm:$0xf] %v1410
    %1419 = vst [vmem:[#allocation3 + $0x8] sm:$0xf] %v1411
    %1420 = vst [vmem:[#allocation3 + $0xc] sm:$0xf] %v1412
    %1421 = vst [vmem:[#allocation3 + $0x10] sm:$0xf] %v1413
    %1422 = vst [vmem:[#allocation3 + $0x14] sm:$0xf] %v1414
    %1423 = vst [vmem:[#allocation3 + $0x18] sm:$0xf] %v1415
    %1424 = vst [vmem:[#allocation3 + $0x1c] sm:$0xf] %v1416
    %s1425 = scalar_lea.vmem [#allocation2], 336
    %v1426 = vld [vmem:[%s1425 + $0x5] sm:$0xff]
    %v1427 = vld [vmem:[%s1425 + $0x1d] sm:$0xff]
    %v1428 = vld [vmem:[%s1425 + $0x35] sm:$0xff]
    %v1429 = vld [vmem:[%s1425 + $0x4d] sm:$0xff]
    %v1430 = vld [vmem:[%s1425 + $0x65] sm:$0xff]
    %v1431 = vld [vmem:[%s1425 + $0x7d] sm:$0xff]
    %v1432 = vld [vmem:[%s1425 + $0x95] sm:$0xff]
    %v1433 = vld [vmem:[%s1425 + $0xad] sm:$0xff]
    %v1434 = vld [vmem:[%s1425 + $0xc5] sm:$0xff]
    %v1435 = vld [vmem:[%s1425 + $0xdd] sm:$0xff]
    %v1436 = vld [vmem:[%s1425 + $0xf5] sm:$0xff]
    %v1437 = vld [vmem:[%s1425 + $0x10d] sm:$0xff]
    %v1438 = vld [vmem:[%s1425 + $0x125] sm:$0xff]
    %v1439 = vld [vmem:[%s1425 + $0x13d] sm:$0xff]
    %v1440 = vmul.f32 %v1426, %v473
    %v1441 = vmul.f32 %v1427, %v473
    %v1442 = vmul.f32 %v1428, %v473
    %v1443 = vmul.f32 %v1429, %v473
    %v1444 = vmul.f32 %v1430, %v473
    %v1445 = vmul.f32 %v1431, %v473
    %v1446 = vmul.f32 %v1432, %v473
    %v1447 = vmul.f32 %v1433, %v473
    %v1448 = vadd.f32 %v1440, 0.0
    %v1449 = vadd.f32 %v1441, 0.0
    %v1450 = vadd.f32 %v1442, 0.0
    %v1451 = vadd.f32 %v1443, 0.0
    %v1452 = vadd.f32 %v1444, 0.0
    %v1453 = vadd.f32 %v1445, 0.0
    %v1454 = vadd.f32 %v1446, 0.0
    %v1455 = vadd.f32 %v1447, 0.0
    %v1456 = vmul.f32 %v1427, %v490
    %v1457 = vmul.f32 %v1428, %v490
    %v1458 = vmul.f32 %v1429, %v490
    %v1459 = vmul.f32 %v1430, %v490
    %v1460 = vmul.f32 %v1431, %v490
    %v1461 = vmul.f32 %v1432, %v490
    %v1462 = vmul.f32 %v1433, %v490
    %v1463 = vmul.f32 %v1434, %v490
    %v1464 = vadd.f32 %v1448, %v1456
    %v1465 = vadd.f32 %v1449, %v1457
    %v1466 = vadd.f32 %v1450, %v1458
    %v1467 = vadd.f32 %v1451, %v1459
    %v1468 = vadd.f32 %v1452, %v1460
    %v1469 = vadd.f32 %v1453, %v1461
    %v1470 = vadd.f32 %v1454, %v1462
    %v1471 = vadd.f32 %v1455, %v1463
    %v1472 = vmul.f32 %v1428, %v507
    %v1473 = vmul.f32 %v1429, %v507
    %v1474 = vmul.f32 %v1430, %v507
    %v1475 = vmul.f32 %v1431, %v507
    %v1476 = vmul.f32 %v1432, %v507
    %v1477 = vmul.f32 %v1433, %v507
    %v1478 = vmul.f32 %v1434, %v507
    %v1479 = vmul.f32 %v1435, %v507
    %v1480 = vadd.f32 %v1464, %v1472
    %v1481 = vadd.f32 %v1465, %v1473
    %v1482 = vadd.f32 %v1466, %v1474
    %v1483 = vadd.f32 %v1467, %v1475
    %v1484 = vadd.f32 %v1468, %v1476
    %v1485 = vadd.f32 %v1469, %v1477
    %v1486 = vadd.f32 %v1470, %v1478
    %v1487 = vadd.f32 %v1471, %v1479
    %v1488 = vmul.f32 %v1429, %v524
    %v1489 = vmul.f32 %v1430, %v524
    %v1490 = vmul.f32 %v1431, %v524
    %v1491 = vmul.f32 %v1432, %v524
    %v1492 = vmul.f32 %v1433, %v524
    %v1493 = vmul.f32 %v1434, %v524
    %v1494 = vmul.f32 %v1435, %v524
    %v1495 = vmul.f32 %v1436, %v524
    %v1496 = vadd.f32 %v1480, %v1488
    %v1497 = vadd.f32 %v1481, %v1489
    %v1498 = vadd.f32 %v1482, %v1490
    %v1499 = vadd.f32 %v1483, %v1491
    %v1500 = vadd.f32 %v1484, %v1492
    %v1501 = vadd.f32 %v1485, %v1493
    %v1502 = vadd.f32 %v1486, %v1494
    %v1503 = vadd.f32 %v1487, %v1495
    %v1504 = vmul.f32 %v1430, %v541
    %v1505 = vmul.f32 %v1431, %v541
    %v1506 = vmul.f32 %v1432, %v541
    %v1507 = vmul.f32 %v1433, %v541
    %v1508 = vmul.f32 %v1434, %v541
    %v1509 = vmul.f32 %v1435, %v541
    %v1510 = vmul.f32 %v1436, %v541
    %v1511 = vmul.f32 %v1437, %v541
    %v1512 = vadd.f32 %v1496, %v1504
    %v1513 = vadd.f32 %v1497, %v1505
    %v1514 = vadd.f32 %v1498, %v1506
    %v1515 = vadd.f32 %v1499, %v1507
    %v1516 = vadd.f32 %v1500, %v1508
    %v1517 = vadd.f32 %v1501, %v1509
    %v1518 = vadd.f32 %v1502, %v1510
    %v1519 = vadd.f32 %v1503, %v1511
    %v1520 = vmul.f32 %v1431, %v558
    %v1521 = vmul.f32 %v1432, %v558
    %v1522 = vmul.f32 %v1433, %v558
    %v1523 = vmul.f32 %v1434, %v558
    %v1524 = vmul.f32 %v1435, %v558
    %v1525 = vmul.f32 %v1436, %v558
    %v1526 = vmul.f32 %v1437, %v558
    %v1527 = vmul.f32 %v1438, %v558
    %v1528 = vadd.f32 %v1512, %v1520
    %v1529 = vadd.f32 %v1513, %v1521
    %v1530 = vadd.f32 %v1514, %v1522
    %v1531 = vadd.f32 %v1515, %v1523
    %v1532 = vadd.f32 %v1516, %v1524
    %v1533 = vadd.f32 %v1517, %v1525
    %v1534 = vadd.f32 %v1518, %v1526
    %v1535 = vadd.f32 %v1519, %v1527
    %v1536 = vmul.f32 %v1432, %v575
    %v1537 = vmul.f32 %v1433, %v575
    %v1538 = vmul.f32 %v1434, %v575
    %v1539 = vmul.f32 %v1435, %v575
    %v1540 = vmul.f32 %v1436, %v575
    %v1541 = vmul.f32 %v1437, %v575
    %v1542 = vmul.f32 %v1438, %v575
    %v1543 = vmul.f32 %v1439, %v575
    %v1544 = vadd.f32 %v1528, %v1536
    %v1545 = vadd.f32 %v1529, %v1537
    %v1546 = vadd.f32 %v1530, %v1538
    %v1547 = vadd.f32 %v1531, %v1539
    %v1548 = vadd.f32 %v1532, %v1540
    %v1549 = vadd.f32 %v1533, %v1541
    %v1550 = vadd.f32 %v1534, %v1542
    %v1551 = vadd.f32 %v1535, %v1543
    %v1552 = vld [vmem:[%s1425 + $0x6] sm:$0xff]
    %v1553 = vld [vmem:[%s1425 + $0x1e] sm:$0xff]
    %v1554 = vld [vmem:[%s1425 + $0x36] sm:$0xff]
    %v1555 = vld [vmem:[%s1425 + $0x4e] sm:$0xff]
    %v1556 = vld [vmem:[%s1425 + $0x66] sm:$0xff]
    %v1557 = vld [vmem:[%s1425 + $0x7e] sm:$0xff]
    %v1558 = vld [vmem:[%s1425 + $0x96] sm:$0xff]
    %v1559 = vld [vmem:[%s1425 + $0xae] sm:$0xff]
    %v1560 = vld [vmem:[%s1425 + $0xc6] sm:$0xff]
    %v1561 = vld [vmem:[%s1425 + $0xde] sm:$0xff]
    %v1562 = vld [vmem:[%s1425 + $0xf6] sm:$0xff]
    %v1563 = vld [vmem:[%s1425 + $0x10e] sm:$0xff]
    %v1564 = vld [vmem:[%s1425 + $0x126] sm:$0xff]
    %v1565 = vld [vmem:[%s1425 + $0x13e] sm:$0xff]
    %v1566 = vmul.f32 %v1552, %v606
    %v1567 = vmul.f32 %v1553, %v606
    %v1568 = vmul.f32 %v1554, %v606
    %v1569 = vmul.f32 %v1555, %v606
    %v1570 = vmul.f32 %v1556, %v606
    %v1571 = vmul.f32 %v1557, %v606
    %v1572 = vmul.f32 %v1558, %v606
    %v1573 = vmul.f32 %v1559, %v606
    %v1574 = vadd.f32 %v1544, %v1566
    %v1575 = vadd.f32 %v1545, %v1567
    %v1576 = vadd.f32 %v1546, %v1568
    %v1577 = vadd.f32 %v1547, %v1569
    %v1578 = vadd.f32 %v1548, %v1570
    %v1579 = vadd.f32 %v1549, %v1571
    %v1580 = vadd.f32 %v1550, %v1572
    %v1581 = vadd.f32 %v1551, %v1573
    %v1582 = vmul.f32 %v1553, %v623
    %v1583 = vmul.f32 %v1554, %v623
    %v1584 = vmul.f32 %v1555, %v623
    %v1585 = vmul.f32 %v1556, %v623
    %v1586 = vmul.f32 %v1557, %v623
    %v1587 = vmul.f32 %v1558, %v623
    %v1588 = vmul.f32 %v1559, %v623
    %v1589 = vmul.f32 %v1560, %v623
    %v1590 = vadd.f32 %v1574, %v1582
    %v1591 = vadd.f32 %v1575, %v1583
    %v1592 = vadd.f32 %v1576, %v1584
    %v1593 = vadd.f32 %v1577, %v1585
    %v1594 = vadd.f32 %v1578, %v1586
    %v1595 = vadd.f32 %v1579, %v1587
    %v1596 = vadd.f32 %v1580, %v1588
    %v1597 = vadd.f32 %v1581, %v1589
    %v1598 = vmul.f32 %v1554, %v640
    %v1599 = vmul.f32 %v1555, %v640
    %v1600 = vmul.f32 %v1556, %v640
    %v1601 = vmul.f32 %v1557, %v640
    %v1602 = vmul.f32 %v1558, %v640
    %v1603 = vmul.f32 %v1559, %v640
    %v1604 = vmul.f32 %v1560, %v640
    %v1605 = vmul.f32 %v1561, %v640
    %v1606 = vadd.f32 %v1590, %v1598
    %v1607 = vadd.f32 %v1591, %v1599
    %v1608 = vadd.f32 %v1592, %v1600
    %v1609 = vadd.f32 %v1593, %v1601
    %v1610 = vadd.f32 %v1594, %v1602
    %v1611 = vadd.f32 %v1595, %v1603
    %v1612 = vadd.f32 %v1596, %v1604
    %v1613 = vadd.f32 %v1597, %v1605
    %v1614 = vmul.f32 %v1555, %v657
    %v1615 = vmul.f32 %v1556, %v657
    %v1616 = vmul.f32 %v1557, %v657
    %v1617 = vmul.f32 %v1558, %v657
    %v1618 = vmul.f32 %v1559, %v657
    %v1619 = vmul.f32 %v1560, %v657
    %v1620 = vmul.f32 %v1561, %v657
    %v1621 = vmul.f32 %v1562, %v657
    %v1622 = vadd.f32 %v1606, %v1614
    %v1623 = vadd.f32 %v1607, %v1615
    %v1624 = vadd.f32 %v1608, %v1616
    %v1625 = vadd.f32 %v1609, %v1617
    %v1626 = vadd.f32 %v1610, %v1618
    %v1627 = vadd.f32 %v1611, %v1619
    %v1628 = vadd.f32 %v1612, %v1620
    %v1629 = vadd.f32 %v1613, %v1621
    %v1630 = vmul.f32 %v1556, %v674
    %v1631 = vmul.f32 %v1557, %v674
    %v1632 = vmul.f32 %v1558, %v674
    %v1633 = vmul.f32 %v1559, %v674
    %v1634 = vmul.f32 %v1560, %v674
    %v1635 = vmul.f32 %v1561, %v674
    %v1636 = vmul.f32 %v1562, %v674
    %v1637 = vmul.f32 %v1563, %v674
    %v1638 = vadd.f32 %v1622, %v1630
    %v1639 = vadd.f32 %v1623, %v1631
    %v1640 = vadd.f32 %v1624, %v1632
    %v1641 = vadd.f32 %v1625, %v1633
    %v1642 = vadd.f32 %v1626, %v1634
    %v1643 = vadd.f32 %v1627, %v1635
    %v1644 = vadd.f32 %v1628, %v1636
    %v1645 = vadd.f32 %v1629, %v1637
    %v1646 = vmul.f32 %v1557, %v691
    %v1647 = vmul.f32 %v1558, %v691
    %v1648 = vmul.f32 %v1559, %v691
    %v1649 = vmul.f32 %v1560, %v691
    %v1650 = vmul.f32 %v1561, %v691
    %v1651 = vmul.f32 %v1562, %v691
    %v1652 = vmul.f32 %v1563, %v691
    %v1653 = vmul.f32 %v1564, %v691
    %v1654 = vadd.f32 %v1638, %v1646
    %v1655 = vadd.f32 %v1639, %v1647
    %v1656 = vadd.f32 %v1640, %v1648
    %v1657 = vadd.f32 %v1641, %v1649
    %v1658 = vadd.f32 %v1642, %v1650
    %v1659 = vadd.f32 %v1643, %v1651
    %v1660 = vadd.f32 %v1644, %v1652
    %v1661 = vadd.f32 %v1645, %v1653
    %v1662 = vmul.f32 %v1558, %v708
    %v1663 = vmul.f32 %v1559, %v708
    %v1664 = vmul.f32 %v1560, %v708
    %v1665 = vmul.f32 %v1561, %v708
    %v1666 = vmul.f32 %v1562, %v708
    %v1667 = vmul.f32 %v1563, %v708
    %v1668 = vmul.f32 %v1564, %v708
    %v1669 = vmul.f32 %v1565, %v708
    %v1670 = vadd.f32 %v1654, %v1662
    %v1671 = vadd.f32 %v1655, %v1663
    %v1672 = vadd.f32 %v1656, %v1664
    %v1673 = vadd.f32 %v1657, %v1665
    %v1674 = vadd.f32 %v1658, %v1666
    %v1675 = vadd.f32 %v1659, %v1667
    %v1676 = vadd.f32 %v1660, %v1668
    %v1677 = vadd.f32 %v1661, %v1669
    %v1678 = vld [vmem:[%s1425 + $0x7] sm:$0xff]
    %v1679 = vld [vmem:[%s1425 + $0x1f] sm:$0xff]
    %v1680 = vld [vmem:[%s1425 + $0x37] sm:$0xff]
    %v1681 = vld [vmem:[%s1425 + $0x4f] sm:$0xff]
    %v1682 = vld [vmem:[%s1425 + $0x67] sm:$0xff]
    %v1683 = vld [vmem:[%s1425 + $0x7f] sm:$0xff]
    %v1684 = vld [vmem:[%s1425 + $0x97] sm:$0xff]
    %v1685 = vld [vmem:[%s1425 + $0xaf] sm:$0xff]
    %v1686 = vld [vmem:[%s1425 + $0xc7] sm:$0xff]
    %v1687 = vld [vmem:[%s1425 + $0xdf] sm:$0xff]
    %v1688 = vld [vmem:[%s1425 + $0xf7] sm:$0xff]
    %v1689 = vld [vmem:[%s1425 + $0x10f] sm:$0xff]
    %v1690 = vld [vmem:[%s1425 + $0x127] sm:$0xff]
    %v1691 = vld [vmem:[%s1425 + $0x13f] sm:$0xff]
    %v1692 = vmul.f32 %v1678, %v739
    %v1693 = vmul.f32 %v1679, %v739
    %v1694 = vmul.f32 %v1680, %v739
    %v1695 = vmul.f32 %v1681, %v739
    %v1696 = vmul.f32 %v1682, %v739
    %v1697 = vmul.f32 %v1683, %v739
    %v1698 = vmul.f32 %v1684, %v739
    %v1699 = vmul.f32 %v1685, %v739
    %v1700 = vadd.f32 %v1670, %v1692
    %v1701 = vadd.f32 %v1671, %v1693
    %v1702 = vadd.f32 %v1672, %v1694
    %v1703 = vadd.f32 %v1673, %v1695
    %v1704 = vadd.f32 %v1674, %v1696
    %v1705 = vadd.f32 %v1675, %v1697
    %v1706 = vadd.f32 %v1676, %v1698
    %v1707 = vadd.f32 %v1677, %v1699
    %v1708 = vmul.f32 %v1679, %v756
    %v1709 = vmul.f32 %v1680, %v756
    %v1710 = vmul.f32 %v1681, %v756
    %v1711 = vmul.f32 %v1682, %v756
    %v1712 = vmul.f32 %v1683, %v756
    %v1713 = vmul.f32 %v1684, %v756
    %v1714 = vmul.f32 %v1685, %v756
    %v1715 = vmul.f32 %v1686, %v756
    %v1716 = vadd.f32 %v1700, %v1708
    %v1717 = vadd.f32 %v1701, %v1709
    %v1718 = vadd.f32 %v1702, %v1710
    %v1719 = vadd.f32 %v1703, %v1711
    %v1720 = vadd.f32 %v1704, %v1712
    %v1721 = vadd.f32 %v1705, %v1713
    %v1722 = vadd.f32 %v1706, %v1714
    %v1723 = vadd.f32 %v1707, %v1715
    %v1724 = vmul.f32 %v1680, %v773
    %v1725 = vmul.f32 %v1681, %v773
    %v1726 = vmul.f32 %v1682, %v773
    %v1727 = vmul.f32 %v1683, %v773
    %v1728 = vmul.f32 %v1684, %v773
    %v1729 = vmul.f32 %v1685, %v773
    %v1730 = vmul.f32 %v1686, %v773
    %v1731 = vmul.f32 %v1687, %v773
    %v1732 = vadd.f32 %v1716, %v1724
    %v1733 = vadd.f32 %v1717, %v1725
    %v1734 = vadd.f32 %v1718, %v1726
    %v1735 = vadd.f32 %v1719, %v1727
    %v1736 = vadd.f32 %v1720, %v1728
    %v1737 = vadd.f32 %v1721, %v1729
    %v1738 = vadd.f32 %v1722, %v1730
    %v1739 = vadd.f32 %v1723, %v1731
    %v1740 = vmul.f32 %v1681, %v790
    %v1741 = vmul.f32 %v1682, %v790
    %v1742 = vmul.f32 %v1683, %v790
    %v1743 = vmul.f32 %v1684, %v790
    %v1744 = vmul.f32 %v1685, %v790
    %v1745 = vmul.f32 %v1686, %v790
    %v1746 = vmul.f32 %v1687, %v790
    %v1747 = vmul.f32 %v1688, %v790
    %v1748 = vadd.f32 %v1732, %v1740
    %v1749 = vadd.f32 %v1733, %v1741
    %v1750 = vadd.f32 %v1734, %v1742
    %v1751 = vadd.f32 %v1735, %v1743
    %v1752 = vadd.f32 %v1736, %v1744
    %v1753 = vadd.f32 %v1737, %v1745
    %v1754 = vadd.f32 %v1738, %v1746
    %v1755 = vadd.f32 %v1739, %v1747
    %v1756 = vmul.f32 %v1682, %v807
    %v1757 = vmul.f32 %v1683, %v807
    %v1758 = vmul.f32 %v1684, %v807
    %v1759 = vmul.f32 %v1685, %v807
    %v1760 = vmul.f32 %v1686, %v807
    %v1761 = vmul.f32 %v1687, %v807
    %v1762 = vmul.f32 %v1688, %v807
    %v1763 = vmul.f32 %v1689, %v807
    %v1764 = vadd.f32 %v1748, %v1756
    %v1765 = vadd.f32 %v1749, %v1757
    %v1766 = vadd.f32 %v1750, %v1758
    %v1767 = vadd.f32 %v1751, %v1759
    %v1768 = vadd.f32 %v1752, %v1760
    %v1769 = vadd.f32 %v1753, %v1761
    %v1770 = vadd.f32 %v1754, %v1762
    %v1771 = vadd.f32 %v1755, %v1763
    %v1772 = vmul.f32 %v1683, %v824
    %v1773 = vmul.f32 %v1684, %v824
    %v1774 = vmul.f32 %v1685, %v824
    %v1775 = vmul.f32 %v1686, %v824
    %v1776 = vmul.f32 %v1687, %v824
    %v1777 = vmul.f32 %v1688, %v824
    %v1778 = vmul.f32 %v1689, %v824
    %v1779 = vmul.f32 %v1690, %v824
    %v1780 = vadd.f32 %v1764, %v1772
    %v1781 = vadd.f32 %v1765, %v1773
    %v1782 = vadd.f32 %v1766, %v1774
    %v1783 = vadd.f32 %v1767, %v1775
    %v1784 = vadd.f32 %v1768, %v1776
    %v1785 = vadd.f32 %v1769, %v1777
    %v1786 = vadd.f32 %v1770, %v1778
    %v1787 = vadd.f32 %v1771, %v1779
    %v1788 = vmul.f32 %v1684, %v841
    %v1789 = vmul.f32 %v1685, %v841
    %v1790 = vmul.f32 %v1686, %v841
    %v1791 = vmul.f32 %v1687, %v841
    %v1792 = vmul.f32 %v1688, %v841
    %v1793 = vmul.f32 %v1689, %v841
    %v1794 = vmul.f32 %v1690, %v841
    %v1795 = vmul.f32 %v1691, %v841
    %v1796 = vadd.f32 %v1780, %v1788
    %v1797 = vadd.f32 %v1781, %v1789
    %v1798 = vadd.f32 %v1782, %v1790
    %v1799 = vadd.f32 %v1783, %v1791
    %v1800 = vadd.f32 %v1784, %v1792
    %v1801 = vadd.f32 %v1785, %v1793
    %v1802 = vadd.f32 %v1786, %v1794
    %v1803 = vadd.f32 %v1787, %v1795
    %v1804 = vld [vmem:[%s1425 + $0x8] sm:$0xff]
    %v1805 = vld [vmem:[%s1425 + $0x20] sm:$0xff]
    %v1806 = vld [vmem:[%s1425 + $0x38] sm:$0xff]
    %v1807 = vld [vmem:[%s1425 + $0x50] sm:$0xff]
    %v1808 = vld [vmem:[%s1425 + $0x68] sm:$0xff]
    %v1809 = vld [vmem:[%s1425 + $0x80] sm:$0xff]
    %v1810 = vld [vmem:[%s1425 + $0x98] sm:$0xff]
    %v1811 = vld [vmem:[%s1425 + $0xb0] sm:$0xff]
    %v1812 = vld [vmem:[%s1425 + $0xc8] sm:$0xff]
    %v1813 = vld [vmem:[%s1425 + $0xe0] sm:$0xff]
    %v1814 = vld [vmem:[%s1425 + $0xf8] sm:$0xff]
    %v1815 = vld [vmem:[%s1425 + $0x110] sm:$0xff]
    %v1816 = vld [vmem:[%s1425 + $0x128] sm:$0xff]
    %v1817 = vld [vmem:[%s1425 + $0x140] sm:$0xff]
    %v1818 = vmul.f32 %v1804, %v872
    %v1819 = vmul.f32 %v1805, %v872
    %v1820 = vmul.f32 %v1806, %v872
    %v1821 = vmul.f32 %v1807, %v872
    %v1822 = vmul.f32 %v1808, %v872
    %v1823 = vmul.f32 %v1809, %v872
    %v1824 = vmul.f32 %v1810, %v872
    %v1825 = vmul.f32 %v1811, %v872
    %v1826 = vadd.f32 %v1796, %v1818
    %v1827 = vadd.f32 %v1797, %v1819
    %v1828 = vadd.f32 %v1798, %v1820
    %v1829 = vadd.f32 %v1799, %v1821
    %v1830 = vadd.f32 %v1800, %v1822
    %v1831 = vadd.f32 %v1801, %v1823
    %v1832 = vadd.f32 %v1802, %v1824
    %v1833 = vadd.f32 %v1803, %v1825
    %v1834 = vmul.f32 %v1805, %v889
    %v1835 = vmul.f32 %v1806, %v889
    %v1836 = vmul.f32 %v1807, %v889
    %v1837 = vmul.f32 %v1808, %v889
    %v1838 = vmul.f32 %v1809, %v889
    %v1839 = vmul.f32 %v1810, %v889
    %v1840 = vmul.f32 %v1811, %v889
    %v1841 = vmul.f32 %v1812, %v889
    %v1842 = vadd.f32 %v1826, %v1834
    %v1843 = vadd.f32 %v1827, %v1835
    %v1844 = vadd.f32 %v1828, %v1836
    %v1845 = vadd.f32 %v1829, %v1837
    %v1846 = vadd.f32 %v1830, %v1838
    %v1847 = vadd.f32 %v1831, %v1839
    %v1848 = vadd.f32 %v1832, %v1840
    %v1849 = vadd.f32 %v1833, %v1841
    %v1850 = vmul.f32 %v1806, %v906
    %v1851 = vmul.f32 %v1807, %v906
    %v1852 = vmul.f32 %v1808, %v906
    %v1853 = vmul.f32 %v1809, %v906
    %v1854 = vmul.f32 %v1810, %v906
    %v1855 = vmul.f32 %v1811, %v906
    %v1856 = vmul.f32 %v1812, %v906
    %v1857 = vmul.f32 %v1813, %v906
    %v1858 = vadd.f32 %v1842, %v1850
    %v1859 = vadd.f32 %v1843, %v1851
    %v1860 = vadd.f32 %v1844, %v1852
    %v1861 = vadd.f32 %v1845, %v1853
    %v1862 = vadd.f32 %v1846, %v1854
    %v1863 = vadd.f32 %v1847, %v1855
    %v1864 = vadd.f32 %v1848, %v1856
    %v1865 = vadd.f32 %v1849, %v1857
    %v1866 = vmul.f32 %v1807, %v923
    %v1867 = vmul.f32 %v1808, %v923
    %v1868 = vmul.f32 %v1809, %v923
    %v1869 = vmul.f32 %v1810, %v923
    %v1870 = vmul.f32 %v1811, %v923
    %v1871 = vmul.f32 %v1812, %v923
    %v1872 = vmul.f32 %v1813, %v923
    %v1873 = vmul.f32 %v1814, %v923
    %v1874 = vadd.f32 %v1858, %v1866
    %v1875 = vadd.f32 %v1859, %v1867
    %v1876 = vadd.f32 %v1860, %v1868
    %v1877 = vadd.f32 %v1861, %v1869
    %v1878 = vadd.f32 %v1862, %v1870
    %v1879 = vadd.f32 %v1863, %v1871
    %v1880 = vadd.f32 %v1864, %v1872
    %v1881 = vadd.f32 %v1865, %v1873
    %v1882 = vmul.f32 %v1808, %v940
    %v1883 = vmul.f32 %v1809, %v940
    %v1884 = vmul.f32 %v1810, %v940
    %v1885 = vmul.f32 %v1811, %v940
    %v1886 = vmul.f32 %v1812, %v940
    %v1887 = vmul.f32 %v1813, %v940
    %v1888 = vmul.f32 %v1814, %v940
    %v1889 = vmul.f32 %v1815, %v940
    %v1890 = vadd.f32 %v1874, %v1882
    %v1891 = vadd.f32 %v1875, %v1883
    %v1892 = vadd.f32 %v1876, %v1884
    %v1893 = vadd.f32 %v1877, %v1885
    %v1894 = vadd.f32 %v1878, %v1886
    %v1895 = vadd.f32 %v1879, %v1887
    %v1896 = vadd.f32 %v1880, %v1888
    %v1897 = vadd.f32 %v1881, %v1889
    %v1898 = vmul.f32 %v1809, %v957
    %v1899 = vmul.f32 %v1810, %v957
    %v1900 = vmul.f32 %v1811, %v957
    %v1901 = vmul.f32 %v1812, %v957
    %v1902 = vmul.f32 %v1813, %v957
    %v1903 = vmul.f32 %v1814, %v957
    %v1904 = vmul.f32 %v1815, %v957
    %v1905 = vmul.f32 %v1816, %v957
    %v1906 = vadd.f32 %v1890, %v1898
    %v1907 = vadd.f32 %v1891, %v1899
    %v1908 = vadd.f32 %v1892, %v1900
    %v1909 = vadd.f32 %v1893, %v1901
    %v1910 = vadd.f32 %v1894, %v1902
    %v1911 = vadd.f32 %v1895, %v1903
    %v1912 = vadd.f32 %v1896, %v1904
    %v1913 = vadd.f32 %v1897, %v1905
    %v1914 = vmul.f32 %v1810, %v974
    %v1915 = vmul.f32 %v1811, %v974
    %v1916 = vmul.f32 %v1812, %v974
    %v1917 = vmul.f32 %v1813, %v974
    %v1918 = vmul.f32 %v1814, %v974
    %v1919 = vmul.f32 %v1815, %v974
    %v1920 = vmul.f32 %v1816, %v974
    %v1921 = vmul.f32 %v1817, %v974
    %v1922 = vadd.f32 %v1906, %v1914
    %v1923 = vadd.f32 %v1907, %v1915
    %v1924 = vadd.f32 %v1908, %v1916
    %v1925 = vadd.f32 %v1909, %v1917
    %v1926 = vadd.f32 %v1910, %v1918
    %v1927 = vadd.f32 %v1911, %v1919
    %v1928 = vadd.f32 %v1912, %v1920
    %v1929 = vadd.f32 %v1913, %v1921
    %v1930 = vld [vmem:[%s1425 + $0x9] sm:$0xff]
    %v1931 = vld [vmem:[%s1425 + $0x21] sm:$0xff]
    %v1932 = vld [vmem:[%s1425 + $0x39] sm:$0xff]
    %v1933 = vld [vmem:[%s1425 + $0x51] sm:$0xff]
    %v1934 = vld [vmem:[%s1425 + $0x69] sm:$0xff]
    %v1935 = vld [vmem:[%s1425 + $0x81] sm:$0xff]
    %v1936 = vld [vmem:[%s1425 + $0x99] sm:$0xff]
    %v1937 = vld [vmem:[%s1425 + $0xb1] sm:$0xff]
    %v1938 = vld [vmem:[%s1425 + $0xc9] sm:$0xff]
    %v1939 = vld [vmem:[%s1425 + $0xe1] sm:$0xff]
    %v1940 = vld [vmem:[%s1425 + $0xf9] sm:$0xff]
    %v1941 = vld [vmem:[%s1425 + $0x111] sm:$0xff]
    %v1942 = vld [vmem:[%s1425 + $0x129] sm:$0xff]
    %v1943 = vld [vmem:[%s1425 + $0x141] sm:$0xff]
    %v1944 = vmul.f32 %v1930, %v1005
    %v1945 = vmul.f32 %v1931, %v1005
    %v1946 = vmul.f32 %v1932, %v1005
    %v1947 = vmul.f32 %v1933, %v1005
    %v1948 = vmul.f32 %v1934, %v1005
    %v1949 = vmul.f32 %v1935, %v1005
    %v1950 = vmul.f32 %v1936, %v1005
    %v1951 = vmul.f32 %v1937, %v1005
    %v1952 = vadd.f32 %v1922, %v1944
    %v1953 = vadd.f32 %v1923, %v1945
    %v1954 = vadd.f32 %v1924, %v1946
    %v1955 = vadd.f32 %v1925, %v1947
    %v1956 = vadd.f32 %v1926, %v1948
    %v1957 = vadd.f32 %v1927, %v1949
    %v1958 = vadd.f32 %v1928, %v1950
    %v1959 = vadd.f32 %v1929, %v1951
    %v1960 = vmul.f32 %v1931, %v1022
    %v1961 = vmul.f32 %v1932, %v1022
    %v1962 = vmul.f32 %v1933, %v1022
    %v1963 = vmul.f32 %v1934, %v1022
    %v1964 = vmul.f32 %v1935, %v1022
    %v1965 = vmul.f32 %v1936, %v1022
    %v1966 = vmul.f32 %v1937, %v1022
    %v1967 = vmul.f32 %v1938, %v1022
    %v1968 = vadd.f32 %v1952, %v1960
    %v1969 = vadd.f32 %v1953, %v1961
    %v1970 = vadd.f32 %v1954, %v1962
    %v1971 = vadd.f32 %v1955, %v1963
    %v1972 = vadd.f32 %v1956, %v1964
    %v1973 = vadd.f32 %v1957, %v1965
    %v1974 = vadd.f32 %v1958, %v1966
    %v1975 = vadd.f32 %v1959, %v1967
    %v1976 = vmul.f32 %v1932, %v1039
    %v1977 = vmul.f32 %v1933, %v1039
    %v1978 = vmul.f32 %v1934, %v1039
    %v1979 = vmul.f32 %v1935, %v1039
    %v1980 = vmul.f32 %v1936, %v1039
    %v1981 = vmul.f32 %v1937, %v1039
    %v1982 = vmul.f32 %v1938, %v1039
    %v1983 = vmul.f32 %v1939, %v1039
    %v1984 = vadd.f32 %v1968, %v1976
    %v1985 = vadd.f32 %v1969, %v1977
    %v1986 = vadd.f32 %v1970, %v1978
    %v1987 = vadd.f32 %v1971, %v1979
    %v1988 = vadd.f32 %v1972, %v1980
    %v1989 = vadd.f32 %v1973, %v1981
    %v1990 = vadd.f32 %v1974, %v1982
    %v1991 = vadd.f32 %v1975, %v1983
    %v1992 = vmul.f32 %v1933, %v1056
    %v1993 = vmul.f32 %v1934, %v1056
    %v1994 = vmul.f32 %v1935, %v1056
    %v1995 = vmul.f32 %v1936, %v1056
    %v1996 = vmul.f32 %v1937, %v1056
    %v1997 = vmul.f32 %v1938, %v1056
    %v1998 = vmul.f32 %v1939, %v1056
    %v1999 = vmul.f32 %v1940, %v1056
    %v2000 = vadd.f32 %v1984, %v1992
    %v2001 = vadd.f32 %v1985, %v1993
    %v2002 = vadd.f32 %v1986, %v1994
    %v2003 = vadd.f32 %v1987, %v1995
    %v2004 = vadd.f32 %v1988, %v1996
    %v2005 = vadd.f32 %v1989, %v1997
    %v2006 = vadd.f32 %v1990, %v1998
    %v2007 = vadd.f32 %v1991, %v1999
    %v2008 = vmul.f32 %v1934, %v1073
    %v2009 = vmul.f32 %v1935, %v1073
    %v2010 = vmul.f32 %v1936, %v1073
    %v2011 = vmul.f32 %v1937, %v1073
    %v2012 = vmul.f32 %v1938, %v1073
    %v2013 = vmul.f32 %v1939, %v1073
    %v2014 = vmul.f32 %v1940, %v1073
    %v2015 = vmul.f32 %v1941, %v1073
    %v2016 = vadd.f32 %v2000, %v2008
    %v2017 = vadd.f32 %v2001, %v2009
    %v2018 = vadd.f32 %v2002, %v2010
    %v2019 = vadd.f32 %v2003, %v2011
    %v2020 = vadd.f32 %v2004, %v2012
    %v2021 = vadd.f32 %v2005, %v2013
    %v2022 = vadd.f32 %v2006, %v2014
    %v2023 = vadd.f32 %v2007, %v2015
    %v2024 = vmul.f32 %v1935, %v1090
    %v2025 = vmul.f32 %v1936, %v1090
    %v2026 = vmul.f32 %v1937, %v1090
    %v2027 = vmul.f32 %v1938, %v1090
    %v2028 = vmul.f32 %v1939, %v1090
    %v2029 = vmul.f32 %v1940, %v1090
    %v2030 = vmul.f32 %v1941, %v1090
    %v2031 = vmul.f32 %v1942, %v1090
    %v2032 = vadd.f32 %v2016, %v2024
    %v2033 = vadd.f32 %v2017, %v2025
    %v2034 = vadd.f32 %v2018, %v2026
    %v2035 = vadd.f32 %v2019, %v2027
    %v2036 = vadd.f32 %v2020, %v2028
    %v2037 = vadd.f32 %v2021, %v2029
    %v2038 = vadd.f32 %v2022, %v2030
    %v2039 = vadd.f32 %v2023, %v2031
    %v2040 = vmul.f32 %v1936, %v1107
    %v2041 = vmul.f32 %v1937, %v1107
    %v2042 = vmul.f32 %v1938, %v1107
    %v2043 = vmul.f32 %v1939, %v1107
    %v2044 = vmul.f32 %v1940, %v1107
    %v2045 = vmul.f32 %v1941, %v1107
    %v2046 = vmul.f32 %v1942, %v1107
    %v2047 = vmul.f32 %v1943, %v1107
    %v2048 = vadd.f32 %v2032, %v2040
    %v2049 = vadd.f32 %v2033, %v2041
    %v2050 = vadd.f32 %v2034, %v2042
    %v2051 = vadd.f32 %v2035, %v2043
    %v2052 = vadd.f32 %v2036, %v2044
    %v2053 = vadd.f32 %v2037, %v2045
    %v2054 = vadd.f32 %v2038, %v2046
    %v2055 = vadd.f32 %v2039, %v2047
    %v2056 = vld [vmem:[%s1425 + $0xa] sm:$0xff]
    %v2057 = vld [vmem:[%s1425 + $0x22] sm:$0xff]
    %v2058 = vld [vmem:[%s1425 + $0x3a] sm:$0xff]
    %v2059 = vld [vmem:[%s1425 + $0x52] sm:$0xff]
    %v2060 = vld [vmem:[%s1425 + $0x6a] sm:$0xff]
    %v2061 = vld [vmem:[%s1425 + $0x82] sm:$0xff]
    %v2062 = vld [vmem:[%s1425 + $0x9a] sm:$0xff]
    %v2063 = vld [vmem:[%s1425 + $0xb2] sm:$0xff]
    %v2064 = vld [vmem:[%s1425 + $0xca] sm:$0xff]
    %v2065 = vld [vmem:[%s1425 + $0xe2] sm:$0xff]
    %v2066 = vld [vmem:[%s1425 + $0xfa] sm:$0xff]
    %v2067 = vld [vmem:[%s1425 + $0x112] sm:$0xff]
    %v2068 = vld [vmem:[%s1425 + $0x12a] sm:$0xff]
    %v2069 = vld [vmem:[%s1425 + $0x142] sm:$0xff]
    %v2070 = vmul.f32 %v2056, %v1138
    %v2071 = vmul.f32 %v2057, %v1138
    %v2072 = vmul.f32 %v2058, %v1138
    %v2073 = vmul.f32 %v2059, %v1138
    %v2074 = vmul.f32 %v2060, %v1138
    %v2075 = vmul.f32 %v2061, %v1138
    %v2076 = vmul.f32 %v2062, %v1138
    %v2077 = vmul.f32 %v2063, %v1138
    %v2078 = vadd.f32 %v2048, %v2070
    %v2079 = vadd.f32 %v2049, %v2071
    %v2080 = vadd.f32 %v2050, %v2072
    %v2081 = vadd.f32 %v2051, %v2073
    %v2082 = vadd.f32 %v2052, %v2074
    %v2083 = vadd.f32 %v2053, %v2075
    %v2084 = vadd.f32 %v2054, %v2076
    %v2085 = vadd.f32 %v2055, %v2077
    %v2086 = vmul.f32 %v2057, %v1155
    %v2087 = vmul.f32 %v2058, %v1155
    %v2088 = vmul.f32 %v2059, %v1155
    %v2089 = vmul.f32 %v2060, %v1155
    %v2090 = vmul.f32 %v2061, %v1155
    %v2091 = vmul.f32 %v2062, %v1155
    %v2092 = vmul.f32 %v2063, %v1155
    %v2093 = vmul.f32 %v2064, %v1155
    %v2094 = vadd.f32 %v2078, %v2086
    %v2095 = vadd.f32 %v2079, %v2087
    %v2096 = vadd.f32 %v2080, %v2088
    %v2097 = vadd.f32 %v2081, %v2089
    %v2098 = vadd.f32 %v2082, %v2090
    %v2099 = vadd.f32 %v2083, %v2091
    %v2100 = vadd.f32 %v2084, %v2092
    %v2101 = vadd.f32 %v2085, %v2093
    %v2102 = vmul.f32 %v2058, %v1172
    %v2103 = vmul.f32 %v2059, %v1172
    %v2104 = vmul.f32 %v2060, %v1172
    %v2105 = vmul.f32 %v2061, %v1172
    %v2106 = vmul.f32 %v2062, %v1172
    %v2107 = vmul.f32 %v2063, %v1172
    %v2108 = vmul.f32 %v2064, %v1172
    %v2109 = vmul.f32 %v2065, %v1172
    %v2110 = vadd.f32 %v2094, %v2102
    %v2111 = vadd.f32 %v2095, %v2103
    %v2112 = vadd.f32 %v2096, %v2104
    %v2113 = vadd.f32 %v2097, %v2105
    %v2114 = vadd.f32 %v2098, %v2106
    %v2115 = vadd.f32 %v2099, %v2107
    %v2116 = vadd.f32 %v2100, %v2108
    %v2117 = vadd.f32 %v2101, %v2109
    %v2118 = vmul.f32 %v2059, %v1189
    %v2119 = vmul.f32 %v2060, %v1189
    %v2120 = vmul.f32 %v2061, %v1189
    %v2121 = vmul.f32 %v2062, %v1189
    %v2122 = vmul.f32 %v2063, %v1189
    %v2123 = vmul.f32 %v2064, %v1189
    %v2124 = vmul.f32 %v2065, %v1189
    %v2125 = vmul.f32 %v2066, %v1189
    %v2126 = vadd.f32 %v2110, %v2118
    %v2127 = vadd.f32 %v2111, %v2119
    %v2128 = vadd.f32 %v2112, %v2120
    %v2129 = vadd.f32 %v2113, %v2121
    %v2130 = vadd.f32 %v2114, %v2122
    %v2131 = vadd.f32 %v2115, %v2123
    %v2132 = vadd.f32 %v2116, %v2124
    %v2133 = vadd.f32 %v2117, %v2125
    %v2134 = vmul.f32 %v2060, %v1206
    %v2135 = vmul.f32 %v2061, %v1206
    %v2136 = vmul.f32 %v2062, %v1206
    %v2137 = vmul.f32 %v2063, %v1206
    %v2138 = vmul.f32 %v2064, %v1206
    %v2139 = vmul.f32 %v2065, %v1206
    %v2140 = vmul.f32 %v2066, %v1206
    %v2141 = vmul.f32 %v2067, %v1206
    %v2142 = vadd.f32 %v2126, %v2134
    %v2143 = vadd.f32 %v2127, %v2135
    %v2144 = vadd.f32 %v2128, %v2136
    %v2145 = vadd.f32 %v2129, %v2137
    %v2146 = vadd.f32 %v2130, %v2138
    %v2147 = vadd.f32 %v2131, %v2139
    %v2148 = vadd.f32 %v2132, %v2140
    %v2149 = vadd.f32 %v2133, %v2141
    %v2150 = vmul.f32 %v2061, %v1223
    %v2151 = vmul.f32 %v2062, %v1223
    %v2152 = vmul.f32 %v2063, %v1223
    %v2153 = vmul.f32 %v2064, %v1223
    %v2154 = vmul.f32 %v2065, %v1223
    %v2155 = vmul.f32 %v2066, %v1223
    %v2156 = vmul.f32 %v2067, %v1223
    %v2157 = vmul.f32 %v2068, %v1223
    %v2158 = vadd.f32 %v2142, %v2150
    %v2159 = vadd.f32 %v2143, %v2151
    %v2160 = vadd.f32 %v2144, %v2152
    %v2161 = vadd.f32 %v2145, %v2153
    %v2162 = vadd.f32 %v2146, %v2154
    %v2163 = vadd.f32 %v2147, %v2155
    %v2164 = vadd.f32 %v2148, %v2156
    %v2165 = vadd.f32 %v2149, %v2157
    %v2166 = vmul.f32 %v2062, %v1240
    %v2167 = vmul.f32 %v2063, %v1240
    %v2168 = vmul.f32 %v2064, %v1240
    %v2169 = vmul.f32 %v2065, %v1240
    %v2170 = vmul.f32 %v2066, %v1240
    %v2171 = vmul.f32 %v2067, %v1240
    %v2172 = vmul.f32 %v2068, %v1240
    %v2173 = vmul.f32 %v2069, %v1240
    %v2174 = vadd.f32 %v2158, %v2166
    %v2175 = vadd.f32 %v2159, %v2167
    %v2176 = vadd.f32 %v2160, %v2168
    %v2177 = vadd.f32 %v2161, %v2169
    %v2178 = vadd.f32 %v2162, %v2170
    %v2179 = vadd.f32 %v2163, %v2171
    %v2180 = vadd.f32 %v2164, %v2172
    %v2181 = vadd.f32 %v2165, %v2173
    %v2182 = vld [vmem:[%s1425 + $0xb] sm:$0xff]
    %v2183 = vld [vmem:[%s1425 + $0x23] sm:$0xff]
    %v2184 = vld [vmem:[%s1425 + $0x3b] sm:$0xff]
    %v2185 = vld [vmem:[%s1425 + $0x53] sm:$0xff]
    %v2186 = vld [vmem:[%s1425 + $0x6b] sm:$0xff]
    %v2187 = vld [vmem:[%s1425 + $0x83] sm:$0xff]
    %v2188 = vld [vmem:[%s1425 + $0x9b] sm:$0xff]
    %v2189 = vld [vmem:[%s1425 + $0xb3] sm:$0xff]
    %v2190 = vld [vmem:[%s1425 + $0xcb] sm:$0xff]
    %v2191 = vld [vmem:[%s1425 + $0xe3] sm:$0xff]
    %v2192 = vld [vmem:[%s1425 + $0xfb] sm:$0xff]
    %v2193 = vld [vmem:[%s1425 + $0x113] sm:$0xff]
    %v2194 = vld [vmem:[%s1425 + $0x12b] sm:$0xff]
    %v2195 = vld [vmem:[%s1425 + $0x143] sm:$0xff]
    %v2196 = vmul.f32 %v2182, %v1271
    %v2197 = vmul.f32 %v2183, %v1271
    %v2198 = vmul.f32 %v2184, %v1271
    %v2199 = vmul.f32 %v2185, %v1271
    %v2200 = vmul.f32 %v2186, %v1271
    %v2201 = vmul.f32 %v2187, %v1271
    %v2202 = vmul.f32 %v2188, %v1271
    %v2203 = vmul.f32 %v2189, %v1271
    %v2204 = vadd.f32 %v2174, %v2196
    %v2205 = vadd.f32 %v2175, %v2197
    %v2206 = vadd.f32 %v2176, %v2198
    %v2207 = vadd.f32 %v2177, %v2199
    %v2208 = vadd.f32 %v2178, %v2200
    %v2209 = vadd.f32 %v2179, %v2201
    %v2210 = vadd.f32 %v2180, %v2202
    %v2211 = vadd.f32 %v2181, %v2203
    %v2212 = vmul.f32 %v2183, %v1288
    %v2213 = vmul.f32 %v2184, %v1288
    %v2214 = vmul.f32 %v2185, %v1288
    %v2215 = vmul.f32 %v2186, %v1288
    %v2216 = vmul.f32 %v2187, %v1288
    %v2217 = vmul.f32 %v2188, %v1288
    %v2218 = vmul.f32 %v2189, %v1288
    %v2219 = vmul.f32 %v2190, %v1288
    %v2220 = vadd.f32 %v2204, %v2212
    %v2221 = vadd.f32 %v2205, %v2213
    %v2222 = vadd.f32 %v2206, %v2214
    %v2223 = vadd.f32 %v2207, %v2215
    %v2224 = vadd.f32 %v2208, %v2216
    %v2225 = vadd.f32 %v2209, %v2217
    %v2226 = vadd.f32 %v2210, %v2218
    %v2227 = vadd.f32 %v2211, %v2219
    %v2228 = vmul.f32 %v2184, %v1305
    %v2229 = vmul.f32 %v2185, %v1305
    %v2230 = vmul.f32 %v2186, %v1305
    %v2231 = vmul.f32 %v2187, %v1305
    %v2232 = vmul.f32 %v2188, %v1305
    %v2233 = vmul.f32 %v2189, %v1305
    %v2234 = vmul.f32 %v2190, %v1305
    %v2235 = vmul.f32 %v2191, %v1305
    %v2236 = vadd.f32 %v2220, %v2228
    %v2237 = vadd.f32 %v2221, %v2229
    %v2238 = vadd.f32 %v2222, %v2230
    %v2239 = vadd.f32 %v2223, %v2231
    %v2240 = vadd.f32 %v2224, %v2232
    %v2241 = vadd.f32 %v2225, %v2233
    %v2242 = vadd.f32 %v2226, %v2234
    %v2243 = vadd.f32 %v2227, %v2235
    %v2244 = vmul.f32 %v2185, %v1322
    %v2245 = vmul.f32 %v2186, %v1322
    %v2246 = vmul.f32 %v2187, %v1322
    %v2247 = vmul.f32 %v2188, %v1322
    %v2248 = vmul.f32 %v2189, %v1322
    %v2249 = vmul.f32 %v2190, %v1322
    %v2250 = vmul.f32 %v2191, %v1322
    %v2251 = vmul.f32 %v2192, %v1322
    %v2252 = vadd.f32 %v2236, %v2244
    %v2253 = vadd.f32 %v2237, %v2245
    %v2254 = vadd.f32 %v2238, %v2246
    %v2255 = vadd.f32 %v2239, %v2247
    %v2256 = vadd.f32 %v2240, %v2248
    %v2257 = vadd.f32 %v2241, %v2249
    %v2258 = vadd.f32 %v2242, %v2250
    %v2259 = vadd.f32 %v2243, %v2251
    %v2260 = vmul.f32 %v2186, %v1339
    %v2261 = vmul.f32 %v2187, %v1339
    %v2262 = vmul.f32 %v2188, %v1339
    %v2263 = vmul.f32 %v2189, %v1339
    %v2264 = vmul.f32 %v2190, %v1339
    %v2265 = vmul.f32 %v2191, %v1339
    %v2266 = vmul.f32 %v2192, %v1339
    %v2267 = vmul.f32 %v2193, %v1339
    %v2268 = vadd.f32 %v2252, %v2260
    %v2269 = vadd.f32 %v2253, %v2261
    %v2270 = vadd.f32 %v2254, %v2262
    %v2271 = vadd.f32 %v2255, %v2263
    %v2272 = vadd.f32 %v2256, %v2264
    %v2273 = vadd.f32 %v2257, %v2265
    %v2274 = vadd.f32 %v2258, %v2266
    %v2275 = vadd.f32 %v2259, %v2267
    %v2276 = vmul.f32 %v2187, %v1356
    %v2277 = vmul.f32 %v2188, %v1356
    %v2278 = vmul.f32 %v2189, %v1356
    %v2279 = vmul.f32 %v2190, %v1356
    %v2280 = vmul.f32 %v2191, %v1356
    %v2281 = vmul.f32 %v2192, %v1356
    %v2282 = vmul.f32 %v2193, %v1356
    %v2283 = vmul.f32 %v2194, %v1356
    %v2284 = vadd.f32 %v2268, %v2276
    %v2285 = vadd.f32 %v2269, %v2277
    %v2286 = vadd.f32 %v2270, %v2278
    %v2287 = vadd.f32 %v2271, %v2279
    %v2288 = vadd.f32 %v2272, %v2280
    %v2289 = vadd.f32 %v2273, %v2281
    %v2290 = vadd.f32 %v2274, %v2282
    %v2291 = vadd.f32 %v2275, %v2283
    %v2292 = vmul.f32 %v2188, %v1373
    %v2293 = vmul.f32 %v2189, %v1373
    %v2294 = vmul.f32 %v2190, %v1373
    %v2295 = vmul.f32 %v2191, %v1373
    %v2296 = vmul.f32 %v2192, %v1373
    %v2297 = vmul.f32 %v2193, %v1373
    %v2298 = vmul.f32 %v2194, %v1373
    %v2299 = vmul.f32 %v2195, %v1373
    %v2300 = vadd.f32 %v2284, %v2292
    %v2301 = vadd.f32 %v2285, %v2293
    %v2302 = vadd.f32 %v2286, %v2294
    %v2303 = vadd.f32 %v2287, %v2295
    %v2304 = vadd.f32 %v2288, %v2296
    %v2305 = vadd.f32 %v2289, %v2297
    %v2306 = vadd.f32 %v2290, %v2298
    %v2307 = vadd.f32 %v2291, %v2299
    %v2308 = vadd.f32 %v2300, %v1391
    %v2309 = vadd.f32 %v2301, %v1391
    %v2310 = vadd.f32 %v2302, %v1391
    %v2311 = vadd.f32 %v2303, %v1391
    %v2312 = vadd.f32 %v2304, %v1391
    %v2313 = vadd.f32 %v2305, %v1391
    %v2314 = vadd.f32 %v2306, %v1391
    %v2315 = vadd.f32 %v2307, %v1391
    %v2316 = vmax.f32 %v2308, 0.0
    %v2317 = vmax.f32 %v2309, 0.0
    %v2318 = vmax.f32 %v2310, 0.0
    %v2319 = vmax.f32 %v2311, 0.0
    %v2320 = vmax.f32 %v2312, 0.0
    %v2321 = vmax.f32 %v2313, 0.0
    %v2322 = vmax.f32 %v2314, 0.0
    %v2323 = vmax.f32 %v2315, 0.0
    %v2324 = vpack.c.bf16 %v2316, %v2316
    %v2325 = vpack.c.bf16 %v2317, %v2317
    %v2326 = vpack.c.bf16 %v2318, %v2318
    %v2327 = vpack.c.bf16 %v2319, %v2319
    %v2328 = vpack.c.bf16 %v2320, %v2320
    %v2329 = vpack.c.bf16 %v2321, %v2321
    %v2330 = vpack.c.bf16 %v2322, %v2322
    %v2331 = vpack.c.bf16 %v2323, %v2323
    %s2332 = scalar_lea.vmem [#allocation3], 32
    %2333 = vst [vmem:[%s2332] sm:$0xf] %v2324
    %2334 = vst [vmem:[%s2332 + $0x4] sm:$0xf] %v2325
    %2335 = vst [vmem:[%s2332 + $0x8] sm:$0xf] %v2326
    %2336 = vst [vmem:[%s2332 + $0xc] sm:$0xf] %v2327
    %2337 = vst [vmem:[%s2332 + $0x10] sm:$0xf] %v2328
    %2338 = vst [vmem:[%s2332 + $0x14] sm:$0xf] %v2329
    %2339 = vst [vmem:[%s2332 + $0x18] sm:$0xf] %v2330
    %2340 = vst [vmem:[%s2332 + $0x1c] sm:$0xf] %v2331
    %v2341 = vld [vmem:[#allocation3] sm:$0xf]
    %v2342 = vld [vmem:[#allocation3 + $0x4] sm:$0xf]
    %v2343 = vld [vmem:[#allocation3 + $0x8] sm:$0xf]
    %v2344 = vld [vmem:[#allocation3 + $0xc] sm:$0xf]
    %v2345 = vld [vmem:[#allocation3 + $0x10] sm:$0xf]
    %v2346 = vld [vmem:[#allocation3 + $0x14] sm:$0xf]
    %v2347 = vld [vmem:[#allocation3 + $0x18] sm:$0xf]
    %v2348 = vld [vmem:[#allocation3 + $0x1c] sm:$0xf]
    %v2349 = vld [vmem:[#allocation3 + $0x20] sm:$0xf]
    %v2350 = vld [vmem:[#allocation3 + $0x24] sm:$0xf]
    %v2351 = vld [vmem:[#allocation3 + $0x28] sm:$0xf]
    %v2352 = vld [vmem:[#allocation3 + $0x2c] sm:$0xf]
    %v2353 = vld [vmem:[#allocation3 + $0x30] sm:$0xf]
    %v2354 = vld [vmem:[#allocation3 + $0x34] sm:$0xf]
    %v2355 = vld [vmem:[#allocation3 + $0x38] sm:$0xf]
    %v2356 = vld [vmem:[#allocation3 + $0x3c] sm:$0xf]
    %v2357 = vld [vmem:[%s4] sm:$0xf]
    %v2358 = vld [vmem:[%s4 + $0x10] sm:$0xf]
    %v2359 = vld [vmem:[%s4 + $0x20] sm:$0xf]
    %v2360 = vld [vmem:[%s4 + $0x30] sm:$0xf]
    %v2361 = vld [vmem:[%s4 + $0x40] sm:$0xf]
    %v2362 = vld [vmem:[%s4 + $0x50] sm:$0xf]
    %v2363 = vld [vmem:[%s4 + $0x60] sm:$0xf]
    %v2364 = vld [vmem:[%s4 + $0x70] sm:$0xf]
    %v2365 = vld [vmem:[%s4 + $0x80] sm:$0xf]
    %v2366 = vld [vmem:[%s4 + $0x90] sm:$0xf]
    %v2367 = vld [vmem:[%s4 + $0xa0] sm:$0xf]
    %v2368 = vld [vmem:[%s4 + $0xb0] sm:$0xf]
    %v2369 = vld [vmem:[%s4 + $0xc0] sm:$0xf]
    %v2370 = vld [vmem:[%s4 + $0xd0] sm:$0xf]
    %v2371 = vld [vmem:[%s4 + $0xe0] sm:$0xf]
    %v2372 = vld [vmem:[%s4 + $0xf0] sm:$0xf]
    %v2389 = vunpack.c.l.b16 %v2341
    %v2390 = vunpack.c.l.b16 %v2342
    %v2391 = vunpack.c.l.b16 %v2343
    %v2392 = vunpack.c.l.b16 %v2344
    %v2393 = vunpack.c.l.b16 %v2345
    %v2394 = vunpack.c.l.b16 %v2346
    %v2395 = vunpack.c.l.b16 %v2347
    %v2396 = vunpack.c.l.b16 %v2348
    %v2397 = vunpack.c.l.b16 %v2349
    %v2398 = vunpack.c.l.b16 %v2350
    %v2399 = vunpack.c.l.b16 %v2351
    %v2400 = vunpack.c.l.b16 %v2352
    %v2401 = vunpack.c.l.b16 %v2353
    %v2402 = vunpack.c.l.b16 %v2354
    %v2403 = vunpack.c.l.b16 %v2355
    %v2404 = vunpack.c.l.b16 %v2356
    %v2405 = vpack.c.b16 %v2390, %v2389
    %v2406 = vpack.c.b16 %v2392, %v2391
    %v2407 = vpack.c.b16 %v2394, %v2393
    %v2408 = vpack.c.b16 %v2396, %v2395
    %v2409 = vpack.c.b16 %v2398, %v2397
    %v2410 = vpack.c.b16 %v2400, %v2399
    %v2411 = vpack.c.b16 %v2402, %v2401
    %v2412 = vpack.c.b16 %v2404, %v2403
    %v2437 = vunpack.c.l.b16 %v2357
    %v2438 = vunpack.c.l.b16 %v2358
    %v2439 = vunpack.c.l.b16 %v2359
    %v2440 = vunpack.c.l.b16 %v2360
    %v2441 = vunpack.c.l.b16 %v2361
    %v2442 = vunpack.c.l.b16 %v2362
    %v2443 = vunpack.c.l.b16 %v2363
    %v2444 = vunpack.c.l.b16 %v2364
    %v2445 = vunpack.c.l.b16 %v2365
    %v2446 = vunpack.c.l.b16 %v2366
    %v2447 = vunpack.c.l.b16 %v2367
    %v2448 = vunpack.c.l.b16 %v2368
    %v2449 = vunpack.c.l.b16 %v2369
    %v2450 = vunpack.c.l.b16 %v2370
    %v2451 = vunpack.c.l.b16 %v2371
    %v2452 = vunpack.c.l.b16 %v2372
    %v2453 = vpack.c.b16 %v2438, %v2437
    %v2454 = vpack.c.b16 %v2440, %v2439
    %v2455 = vpack.c.b16 %v2442, %v2441
    %v2456 = vpack.c.b16 %v2444, %v2443
    %v2457 = vpack.c.b16 %v2446, %v2445
    %v2458 = vpack.c.b16 %v2448, %v2447
    %v2459 = vpack.c.b16 %v2450, %v2449
    %v2460 = vpack.c.b16 %v2452, %v2451
    %2469 = vmatpush.bf16.msra.mxu0 %v2460
    %2470 = vmatpush.bf16.msra.mxu0 %v2459
    %2471 = vmatpush.bf16.msra.mxu0 %v2458
    %2472 = vmatpush.bf16.msra.mxu0 %v2457
    %2473 = vmatpush.bf16.msra.mxu0 %v2456
    %2474 = vmatpush.bf16.msra.mxu0 %v2455
    %2475 = vmatpush.bf16.msra.mxu0 %v2454
    %2476 = vmatpush.bf16.msra.mxu0 %v2453
    %2477 = vmatmul.bf16.gmra.mxu0 %v2405
    %v2478 = vpop.f32.mrf.mxu0
    %v2479 = vadd.f32 0.0, %v2478
    %v2480 = vpop.f32.mrf.mxu0
    %v2481 = vadd.f32 0.0, %v2480
    %2482 = vmatmul.bf16.gmra.mxu0 %v2406
    %v2483 = vpop.f32.mrf.mxu0
    %v2484 = vadd.f32 0.0, %v2483
    %v2485 = vpop.f32.mrf.mxu0
    %v2486 = vadd.f32 0.0, %v2485
    %2487 = vmatmul.bf16.gmra.mxu0 %v2407
    %v2488 = vpop.f32.mrf.mxu0
    %v2489 = vadd.f32 0.0, %v2488
    %v2490 = vpop.f32.mrf.mxu0
    %v2491 = vadd.f32 0.0, %v2490
    %2492 = vmatmul.bf16.gmra.mxu0 %v2408
    %v2493 = vpop.f32.mrf.mxu0
    %v2494 = vadd.f32 0.0, %v2493
    %v2495 = vpop.f32.mrf.mxu0
    %v2496 = vadd.f32 0.0, %v2495
    %2497 = vmatmul.bf16.gmra.mxu0 %v2409
    %v2498 = vpop.f32.mrf.mxu0
    %v2499 = vadd.f32 0.0, %v2498
    %v2500 = vpop.f32.mrf.mxu0
    %v2501 = vadd.f32 0.0, %v2500
    %2502 = vmatmul.bf16.gmra.mxu0 %v2410
    %v2503 = vpop.f32.mrf.mxu0
    %v2504 = vadd.f32 0.0, %v2503
    %v2505 = vpop.f32.mrf.mxu0
    %v2506 = vadd.f32 0.0, %v2505
    %2507 = vmatmul.bf16.gmra.mxu0 %v2411
    %v2508 = vpop.f32.mrf.mxu0
    %v2509 = vadd.f32 0.0, %v2508
    %v2510 = vpop.f32.mrf.mxu0
    %v2511 = vadd.f32 0.0, %v2510
    %2512 = vmatmul.bf16.gmra.mxu0 %v2412
    %v2513 = vpop.f32.mrf.mxu0
    %v2514 = vadd.f32 0.0, %v2513
    %v2515 = vpop.f32.mrf.mxu0
    %v2516 = vadd.f32 0.0, %v2515
    %2517 = vdwg.mxu0
    %v2518 = vmax.f32 %v2479, 0.0
    %v2519 = vmax.f32 %v2481, 0.0
    %v2520 = vmax.f32 %v2484, 0.0
    %v2521 = vmax.f32 %v2486, 0.0
    %v2522 = vmax.f32 %v2489, 0.0
    %v2523 = vmax.f32 %v2491, 0.0
    %v2524 = vmax.f32 %v2494, 0.0
    %v2525 = vmax.f32 %v2496, 0.0
    %v2526 = vmax.f32 %v2499, 0.0
    %v2527 = vmax.f32 %v2501, 0.0
    %v2528 = vmax.f32 %v2504, 0.0
    %v2529 = vmax.f32 %v2506, 0.0
    %v2530 = vmax.f32 %v2509, 0.0
    %v2531 = vmax.f32 %v2511, 0.0
    %v2532 = vmax.f32 %v2514, 0.0
    %v2533 = vmax.f32 %v2516, 0.0
    %v2534 = vpack.c.bf16 %v2519, %v2518
    %v2535 = vpack.c.bf16 %v2521, %v2520
    %v2536 = vpack.c.bf16 %v2523, %v2522
    %v2537 = vpack.c.bf16 %v2525, %v2524
    %v2538 = vpack.c.bf16 %v2527, %v2526
    %v2539 = vpack.c.bf16 %v2529, %v2528
    %v2540 = vpack.c.bf16 %v2531, %v2530
    %v2541 = vpack.c.bf16 %v2533, %v2532
    %v2542 = vld [vmem:[%s5] sm:$0xf]
    %v2543 = vld [vmem:[%s5 + $0x4] sm:$0xf]
    %v2544 = vld [vmem:[%s5 + $0x8] sm:$0xf]
    %v2545 = vld [vmem:[%s5 + $0xc] sm:$0xf]
    %v2546 = vld [vmem:[%s5 + $0x10] sm:$0xf]
    %v2547 = vld [vmem:[%s5 + $0x14] sm:$0xf]
    %v2548 = vld [vmem:[%s5 + $0x18] sm:$0xf]
    %v2549 = vld [vmem:[%s5 + $0x1c] sm:$0xf]
    %v2550 = vld [vmem:[%s5 + $0x20] sm:$0xf]
    %v2551 = vld [vmem:[%s5 + $0x24] sm:$0xf]
    %v2552 = vld [vmem:[%s5 + $0x28] sm:$0xf]
    %v2553 = vld [vmem:[%s5 + $0x2c] sm:$0xf]
    %v2554 = vld [vmem:[%s5 + $0x30] sm:$0xf]
    %v2555 = vld [vmem:[%s5 + $0x34] sm:$0xf]
    %v2556 = vld [vmem:[%s5 + $0x38] sm:$0xf]
    %v2557 = vld [vmem:[%s5 + $0x3c] sm:$0xf]
    %v2558 = vld [vmem:[%s4 + $0x4] sm:$0xf]
    %v2559 = vld [vmem:[%s4 + $0x14] sm:$0xf]
    %v2560 = vld [vmem:[%s4 + $0x24] sm:$0xf]
    %v2561 = vld [vmem:[%s4 + $0x34] sm:$0xf]
    %v2562 = vld [vmem:[%s4 + $0x44] sm:$0xf]
    %v2563 = vld [vmem:[%s4 + $0x54] sm:$0xf]
    %v2564 = vld [vmem:[%s4 + $0x64] sm:$0xf]
    %v2565 = vld [vmem:[%s4 + $0x74] sm:$0xf]
    %v2566 = vld [vmem:[%s4 + $0x84] sm:$0xf]
    %v2567 = vld [vmem:[%s4 + $0x94] sm:$0xf]
    %v2568 = vld [vmem:[%s4 + $0xa4] sm:$0xf]
    %v2569 = vld [vmem:[%s4 + $0xb4] sm:$0xf]
    %v2570 = vld [vmem:[%s4 + $0xc4] sm:$0xf]
    %v2571 = vld [vmem:[%s4 + $0xd4] sm:$0xf]
    %v2572 = vld [vmem:[%s4 + $0xe4] sm:$0xf]
    %v2573 = vld [vmem:[%s4 + $0xf4] sm:$0xf]
    %v2590 = vunpack.c.l.b16 %v2558
    %v2591 = vunpack.c.l.b16 %v2559
    %v2592 = vunpack.c.l.b16 %v2560
    %v2593 = vunpack.c.l.b16 %v2561
    %v2594 = vunpack.c.l.b16 %v2562
    %v2595 = vunpack.c.l.b16 %v2563
    %v2596 = vunpack.c.l.b16 %v2564
    %v2597 = vunpack.c.l.b16 %v2565
    %v2598 = vunpack.c.l.b16 %v2566
    %v2599 = vunpack.c.l.b16 %v2567
    %v2600 = vunpack.c.l.b16 %v2568
    %v2601 = vunpack.c.l.b16 %v2569
    %v2602 = vunpack.c.l.b16 %v2570
    %v2603 = vunpack.c.l.b16 %v2571
    %v2604 = vunpack.c.l.b16 %v2572
    %v2605 = vunpack.c.l.b16 %v2573
    %v2606 = vpack.c.b16 %v2591, %v2590
    %v2607 = vpack.c.b16 %v2593, %v2592
    %v2608 = vpack.c.b16 %v2595, %v2594
    %v2609 = vpack.c.b16 %v2597, %v2596
    %v2610 = vpack.c.b16 %v2599, %v2598
    %v2611 = vpack.c.b16 %v2601, %v2600
    %v2612 = vpack.c.b16 %v2603, %v2602
    %v2613 = vpack.c.b16 %v2605, %v2604
    %2622 = vmatpush.bf16.msra.mxu0 %v2613
    %2623 = vmatpush.bf16.msra.mxu0 %v2612
    %2624 = vmatpush.bf16.msra.mxu0 %v2611
    %2625 = vmatpush.bf16.msra.mxu0 %v2610
    %2626 = vmatpush.bf16.msra.mxu0 %v2609
    %2627 = vmatpush.bf16.msra.mxu0 %v2608
    %2628 = vmatpush.bf16.msra.mxu0 %v2607
    %2629 = vmatpush.bf16.msra.mxu0 %v2606
    %2630 = vmatmul.bf16.gmra.mxu0 %v2405
    %v2631 = vpop.f32.mrf.mxu0
    %v2632 = vadd.f32 0.0, %v2631
    %v2633 = vpop.f32.mrf.mxu0
    %v2634 = vadd.f32 0.0, %v2633
    %2635 = vmatmul.bf16.gmra.mxu0 %v2406
    %v2636 = vpop.f32.mrf.mxu0
    %v2637 = vadd.f32 0.0, %v2636
    %v2638 = vpop.f32.mrf.mxu0
    %v2639 = vadd.f32 0.0, %v2638
    %2640 = vmatmul.bf16.gmra.mxu0 %v2407
    %v2641 = vpop.f32.mrf.mxu0
    %v2642 = vadd.f32 0.0, %v2641
    %v2643 = vpop.f32.mrf.mxu0
    %v2644 = vadd.f32 0.0, %v2643
    %2645 = vmatmul.bf16.gmra.mxu0 %v2408
    %v2646 = vpop.f32.mrf.mxu0
    %v2647 = vadd.f32 0.0, %v2646
    %v2648 = vpop.f32.mrf.mxu0
    %v2649 = vadd.f32 0.0, %v2648
    %2650 = vmatmul.bf16.gmra.mxu0 %v2409
    %v2651 = vpop.f32.mrf.mxu0
    %v2652 = vadd.f32 0.0, %v2651
    %v2653 = vpop.f32.mrf.mxu0
    %v2654 = vadd.f32 0.0, %v2653
    %2655 = vmatmul.bf16.gmra.mxu0 %v2410
    %v2656 = vpop.f32.mrf.mxu0
    %v2657 = vadd.f32 0.0, %v2656
    %v2658 = vpop.f32.mrf.mxu0
    %v2659 = vadd.f32 0.0, %v2658
    %2660 = vmatmul.bf16.gmra.mxu0 %v2411
    %v2661 = vpop.f32.mrf.mxu0
    %v2662 = vadd.f32 0.0, %v2661
    %v2663 = vpop.f32.mrf.mxu0
    %v2664 = vadd.f32 0.0, %v2663
    %2665 = vmatmul.bf16.gmra.mxu0 %v2412
    %v2666 = vpop.f32.mrf.mxu0
    %v2667 = vadd.f32 0.0, %v2666
    %v2668 = vpop.f32.mrf.mxu0
    %v2669 = vadd.f32 0.0, %v2668
    %2670 = vdwg.mxu0
    %v2671 = vmax.f32 %v2632, 0.0
    %v2672 = vmax.f32 %v2634, 0.0
    %v2673 = vmax.f32 %v2637, 0.0
    %v2674 = vmax.f32 %v2639, 0.0
    %v2675 = vmax.f32 %v2642, 0.0
    %v2676 = vmax.f32 %v2644, 0.0
    %v2677 = vmax.f32 %v2647, 0.0
    %v2678 = vmax.f32 %v2649, 0.0
    %v2679 = vmax.f32 %v2652, 0.0
    %v2680 = vmax.f32 %v2654, 0.0
    %v2681 = vmax.f32 %v2657, 0.0
    %v2682 = vmax.f32 %v2659, 0.0
    %v2683 = vmax.f32 %v2662, 0.0
    %v2684 = vmax.f32 %v2664, 0.0
    %v2685 = vmax.f32 %v2667, 0.0
    %v2686 = vmax.f32 %v2669, 0.0
    %v2687 = vpack.c.bf16 %v2672, %v2671
    %v2688 = vpack.c.bf16 %v2674, %v2673
    %v2689 = vpack.c.bf16 %v2676, %v2675
    %v2690 = vpack.c.bf16 %v2678, %v2677
    %v2691 = vpack.c.bf16 %v2680, %v2679
    %v2692 = vpack.c.bf16 %v2682, %v2681
    %v2693 = vpack.c.bf16 %v2684, %v2683
    %v2694 = vpack.c.bf16 %v2686, %v2685
    %v2695 = vld [vmem:[%s5 + $0x40] sm:$0xf]
    %v2696 = vld [vmem:[%s5 + $0x44] sm:$0xf]
    %v2697 = vld [vmem:[%s5 + $0x48] sm:$0xf]
    %v2698 = vld [vmem:[%s5 + $0x4c] sm:$0xf]
    %v2699 = vld [vmem:[%s5 + $0x50] sm:$0xf]
    %v2700 = vld [vmem:[%s5 + $0x54] sm:$0xf]
    %v2701 = vld [vmem:[%s5 + $0x58] sm:$0xf]
    %v2702 = vld [vmem:[%s5 + $0x5c] sm:$0xf]
    %v2703 = vld [vmem:[%s5 + $0x60] sm:$0xf]
    %v2704 = vld [vmem:[%s5 + $0x64] sm:$0xf]
    %v2705 = vld [vmem:[%s5 + $0x68] sm:$0xf]
    %v2706 = vld [vmem:[%s5 + $0x6c] sm:$0xf]
    %v2707 = vld [vmem:[%s5 + $0x70] sm:$0xf]
    %v2708 = vld [vmem:[%s5 + $0x74] sm:$0xf]
    %v2709 = vld [vmem:[%s5 + $0x78] sm:$0xf]
    %v2710 = vld [vmem:[%s5 + $0x7c] sm:$0xf]
    %v2727 = vunpack.c.l.b16 %v2695
    %v2728 = vunpack.c.l.b16 %v2696
    %v2729 = vunpack.c.l.b16 %v2697
    %v2730 = vunpack.c.l.b16 %v2698
    %v2731 = vunpack.c.l.b16 %v2699
    %v2732 = vunpack.c.l.b16 %v2700
    %v2733 = vunpack.c.l.b16 %v2701
    %v2734 = vunpack.c.l.b16 %v2702
    %v2735 = vunpack.c.l.b16 %v2703
    %v2736 = vunpack.c.l.b16 %v2704
    %v2737 = vunpack.c.l.b16 %v2705
    %v2738 = vunpack.c.l.b16 %v2706
    %v2739 = vunpack.c.l.b16 %v2707
    %v2740 = vunpack.c.l.b16 %v2708
    %v2741 = vunpack.c.l.b16 %v2709
    %v2742 = vunpack.c.l.b16 %v2710
    %v2743 = vpack.c.b16 %v2728, %v2727
    %v2744 = vpack.c.b16 %v2730, %v2729
    %v2745 = vpack.c.b16 %v2732, %v2731
    %v2746 = vpack.c.b16 %v2734, %v2733
    %v2747 = vpack.c.b16 %v2736, %v2735
    %v2748 = vpack.c.b16 %v2738, %v2737
    %v2749 = vpack.c.b16 %v2740, %v2739
    %v2750 = vpack.c.b16 %v2742, %v2741
    %2759 = vmatpush.bf16.msra.mxu0 %v2750
    %2760 = vmatpush.bf16.msra.mxu0 %v2749
    %2761 = vmatpush.bf16.msra.mxu0 %v2748
    %2762 = vmatpush.bf16.msra.mxu0 %v2747
    %2763 = vmatpush.bf16.msra.mxu0 %v2746
    %2764 = vmatpush.bf16.msra.mxu0 %v2745
    %2765 = vmatpush.bf16.msra.mxu0 %v2744
    %2766 = vmatpush.bf16.msra.mxu0 %v2743
    %2767 = vmatmul.bf16.gmra.mxu0 %v2687
    %v2768 = vpop.f32.mrf.mxu0
    %v2769 = vadd.f32 0.0, %v2768
    %v2770 = vpop.f32.mrf.mxu0
    %v2771 = vadd.f32 0.0, %v2770
    %2772 = vmatmul.bf16.gmra.mxu0 %v2688
    %v2773 = vpop.f32.mrf.mxu0
    %v2774 = vadd.f32 0.0, %v2773
    %v2775 = vpop.f32.mrf.mxu0
    %v2776 = vadd.f32 0.0, %v2775
    %2777 = vmatmul.bf16.gmra.mxu0 %v2689
    %v2778 = vpop.f32.mrf.mxu0
    %v2779 = vadd.f32 0.0, %v2778
    %v2780 = vpop.f32.mrf.mxu0
    %v2781 = vadd.f32 0.0, %v2780
    %2782 = vmatmul.bf16.gmra.mxu0 %v2690
    %v2783 = vpop.f32.mrf.mxu0
    %v2784 = vadd.f32 0.0, %v2783
    %v2785 = vpop.f32.mrf.mxu0
    %v2786 = vadd.f32 0.0, %v2785
    %2787 = vmatmul.bf16.gmra.mxu0 %v2691
    %v2788 = vpop.f32.mrf.mxu0
    %v2789 = vadd.f32 0.0, %v2788
    %v2790 = vpop.f32.mrf.mxu0
    %v2791 = vadd.f32 0.0, %v2790
    %2792 = vmatmul.bf16.gmra.mxu0 %v2692
    %v2793 = vpop.f32.mrf.mxu0
    %v2794 = vadd.f32 0.0, %v2793
    %v2795 = vpop.f32.mrf.mxu0
    %v2796 = vadd.f32 0.0, %v2795
    %2797 = vmatmul.bf16.gmra.mxu0 %v2693
    %v2798 = vpop.f32.mrf.mxu0
    %v2799 = vadd.f32 0.0, %v2798
    %v2800 = vpop.f32.mrf.mxu0
    %v2801 = vadd.f32 0.0, %v2800
    %2802 = vmatmul.bf16.gmra.mxu0 %v2694
    %v2803 = vpop.f32.mrf.mxu0
    %v2804 = vadd.f32 0.0, %v2803
    %v2805 = vpop.f32.mrf.mxu0
    %v2806 = vadd.f32 0.0, %v2805
    %2807 = vdwg.mxu0
    %v2824 = vunpack.c.l.b16 %v2542
    %v2825 = vunpack.c.l.b16 %v2543
    %v2826 = vunpack.c.l.b16 %v2544
    %v2827 = vunpack.c.l.b16 %v2545
    %v2828 = vunpack.c.l.b16 %v2546
    %v2829 = vunpack.c.l.b16 %v2547
    %v2830 = vunpack.c.l.b16 %v2548
    %v2831 = vunpack.c.l.b16 %v2549
    %v2832 = vunpack.c.l.b16 %v2550
    %v2833 = vunpack.c.l.b16 %v2551
    %v2834 = vunpack.c.l.b16 %v2552
    %v2835 = vunpack.c.l.b16 %v2553
    %v2836 = vunpack.c.l.b16 %v2554
    %v2837 = vunpack.c.l.b16 %v2555
    %v2838 = vunpack.c.l.b16 %v2556
    %v2839 = vunpack.c.l.b16 %v2557
    %v2840 = vpack.c.b16 %v2825, %v2824
    %v2841 = vpack.c.b16 %v2827, %v2826
    %v2842 = vpack.c.b16 %v2829, %v2828
    %v2843 = vpack.c.b16 %v2831, %v2830
    %v2844 = vpack.c.b16 %v2833, %v2832
    %v2845 = vpack.c.b16 %v2835, %v2834
    %v2846 = vpack.c.b16 %v2837, %v2836
    %v2847 = vpack.c.b16 %v2839, %v2838
    %2856 = vmatpush.bf16.msra.mxu0 %v2847
    %2857 = vmatpush.bf16.msra.mxu0 %v2846
    %2858 = vmatpush.bf16.msra.mxu0 %v2845
    %2859 = vmatpush.bf16.msra.mxu0 %v2844
    %2860 = vmatpush.bf16.msra.mxu0 %v2843
    %2861 = vmatpush.bf16.msra.mxu0 %v2842
    %2862 = vmatpush.bf16.msra.mxu0 %v2841
    %2863 = vmatpush.bf16.msra.mxu0 %v2840
    %2864 = vmatmul.bf16.gmra.mxu0 %v2534
    %v2865 = vpop.f32.mrf.mxu0
    %v2866 = vadd.f32 %v2769, %v2865
    %v2867 = vpop.f32.mrf.mxu0
    %v2868 = vadd.f32 %v2771, %v2867
    %2869 = vmatmul.bf16.gmra.mxu0 %v2535
    %v2870 = vpop.f32.mrf.mxu0
    %v2871 = vadd.f32 %v2774, %v2870
    %v2872 = vpop.f32.mrf.mxu0
    %v2873 = vadd.f32 %v2776, %v2872
    %2874 = vmatmul.bf16.gmra.mxu0 %v2536
    %v2875 = vpop.f32.mrf.mxu0
    %v2876 = vadd.f32 %v2779, %v2875
    %v2877 = vpop.f32.mrf.mxu0
    %v2878 = vadd.f32 %v2781, %v2877
    %2879 = vmatmul.bf16.gmra.mxu0 %v2537
    %v2880 = vpop.f32.mrf.mxu0
    %v2881 = vadd.f32 %v2784, %v2880
    %v2882 = vpop.f32.mrf.mxu0
    %v2883 = vadd.f32 %v2786, %v2882
    %2884 = vmatmul.bf16.gmra.mxu0 %v2538
    %v2885 = vpop.f32.mrf.mxu0
    %v2886 = vadd.f32 %v2789, %v2885
    %v2887 = vpop.f32.mrf.mxu0
    %v2888 = vadd.f32 %v2791, %v2887
    %2889 = vmatmul.bf16.gmra.mxu0 %v2539
    %v2890 = vpop.f32.mrf.mxu0
    %v2891 = vadd.f32 %v2794, %v2890
    %v2892 = vpop.f32.mrf.mxu0
    %v2893 = vadd.f32 %v2796, %v2892
    %2894 = vmatmul.bf16.gmra.mxu0 %v2540
    %v2895 = vpop.f32.mrf.mxu0
    %v2896 = vadd.f32 %v2799, %v2895
    %v2897 = vpop.f32.mrf.mxu0
    %v2898 = vadd.f32 %v2801, %v2897
    %2899 = vmatmul.bf16.gmra.mxu0 %v2541
    %v2900 = vpop.f32.mrf.mxu0
    %v2901 = vadd.f32 %v2804, %v2900
    %v2902 = vpop.f32.mrf.mxu0
    %v2903 = vadd.f32 %v2806, %v2902
    %2904 = vdwg.mxu0
    %v2905 = vld [vmem:[%s4 + $0x8] sm:$0xf]
    %v2906 = vld [vmem:[%s4 + $0x18] sm:$0xf]
    %v2907 = vld [vmem:[%s4 + $0x28] sm:$0xf]
    %v2908 = vld [vmem:[%s4 + $0x38] sm:$0xf]
    %v2909 = vld [vmem:[%s4 + $0x48] sm:$0xf]
    %v2910 = vld [vmem:[%s4 + $0x58] sm:$0xf]
    %v2911 = vld [vmem:[%s4 + $0x68] sm:$0xf]
    %v2912 = vld [vmem:[%s4 + $0x78] sm:$0xf]
    %v2913 = vld [vmem:[%s4 + $0x88] sm:$0xf]
    %v2914 = vld [vmem:[%s4 + $0x98] sm:$0xf]
    %v2915 = vld [vmem:[%s4 + $0xa8] sm:$0xf]
    %v2916 = vld [vmem:[%s4 + $0xb8] sm:$0xf]
    %v2917 = vld [vmem:[%s4 + $0xc8] sm:$0xf]
    %v2918 = vld [vmem:[%s4 + $0xd8] sm:$0xf]
    %v2919 = vld [vmem:[%s4 + $0xe8] sm:$0xf]
    %v2920 = vld [vmem:[%s4 + $0xf8] sm:$0xf]
    %v2937 = vunpack.c.l.b16 %v2905
    %v2938 = vunpack.c.l.b16 %v2906
    %v2939 = vunpack.c.l.b16 %v2907
    %v2940 = vunpack.c.l.b16 %v2908
    %v2941 = vunpack.c.l.b16 %v2909
    %v2942 = vunpack.c.l.b16 %v2910
    %v2943 = vunpack.c.l.b16 %v2911
    %v2944 = vunpack.c.l.b16 %v2912
    %v2945 = vunpack.c.l.b16 %v2913
    %v2946 = vunpack.c.l.b16 %v2914
    %v2947 = vunpack.c.l.b16 %v2915
    %v2948 = vunpack.c.l.b16 %v2916
    %v2949 = vunpack.c.l.b16 %v2917
    %v2950 = vunpack.c.l.b16 %v2918
    %v2951 = vunpack.c.l.b16 %v2919
    %v2952 = vunpack.c.l.b16 %v2920
    %v2953 = vpack.c.b16 %v2938, %v2937
    %v2954 = vpack.c.b16 %v2940, %v2939
    %v2955 = vpack.c.b16 %v2942, %v2941
    %v2956 = vpack.c.b16 %v2944, %v2943
    %v2957 = vpack.c.b16 %v2946, %v2945
    %v2958 = vpack.c.b16 %v2948, %v2947
    %v2959 = vpack.c.b16 %v2950, %v2949
    %v2960 = vpack.c.b16 %v2952, %v2951
    %2969 = vmatpush.bf16.msra.mxu0 %v2960
    %2970 = vmatpush.bf16.msra.mxu0 %v2959
    %2971 = vmatpush.bf16.msra.mxu0 %v2958
    %2972 = vmatpush.bf16.msra.mxu0 %v2957
    %2973 = vmatpush.bf16.msra.mxu0 %v2956
    %2974 = vmatpush.bf16.msra.mxu0 %v2955
    %2975 = vmatpush.bf16.msra.mxu0 %v2954
    %2976 = vmatpush.bf16.msra.mxu0 %v2953
    %2977 = vmatmul.bf16.gmra.mxu0 %v2405
    %v2978 = vpop.f32.mrf.mxu0
    %v2979 = vadd.f32 0.0, %v2978
    %v2980 = vpop.f32.mrf.mxu0
    %v2981 = vadd.f32 0.0, %v2980
    %2982 = vmatmul.bf16.gmra.mxu0 %v2406
    %v2983 = vpop.f32.mrf.mxu0
    %v2984 = vadd.f32 0.0, %v2983
    %v2985 = vpop.f32.mrf.mxu0
    %v2986 = vadd.f32 0.0, %v2985
    %2987 = vmatmul.bf16.gmra.mxu0 %v2407
    %v2988 = vpop.f32.mrf.mxu0
    %v2989 = vadd.f32 0.0, %v2988
    %v2990 = vpop.f32.mrf.mxu0
    %v2991 = vadd.f32 0.0, %v2990
    %2992 = vmatmul.bf16.gmra.mxu0 %v2408
    %v2993 = vpop.f32.mrf.mxu0
    %v2994 = vadd.f32 0.0, %v2993
    %v2995 = vpop.f32.mrf.mxu0
    %v2996 = vadd.f32 0.0, %v2995
    %2997 = vmatmul.bf16.gmra.mxu0 %v2409
    %v2998 = vpop.f32.mrf.mxu0
    %v2999 = vadd.f32 0.0, %v2998
    %v3000 = vpop.f32.mrf.mxu0
    %v3001 = vadd.f32 0.0, %v3000
    %3002 = vmatmul.bf16.gmra.mxu0 %v2410
    %v3003 = vpop.f32.mrf.mxu0
    %v3004 = vadd.f32 0.0, %v3003
    %v3005 = vpop.f32.mrf.mxu0
    %v3006 = vadd.f32 0.0, %v3005
    %3007 = vmatmul.bf16.gmra.mxu0 %v2411
    %v3008 = vpop.f32.mrf.mxu0
    %v3009 = vadd.f32 0.0, %v3008
    %v3010 = vpop.f32.mrf.mxu0
    %v3011 = vadd.f32 0.0, %v3010
    %3012 = vmatmul.bf16.gmra.mxu0 %v2412
    %v3013 = vpop.f32.mrf.mxu0
    %v3014 = vadd.f32 0.0, %v3013
    %v3015 = vpop.f32.mrf.mxu0
    %v3016 = vadd.f32 0.0, %v3015
    %3017 = vdwg.mxu0
    %v3018 = vmax.f32 %v2979, 0.0
    %v3019 = vmax.f32 %v2981, 0.0
    %v3020 = vmax.f32 %v2984, 0.0
    %v3021 = vmax.f32 %v2986, 0.0
    %v3022 = vmax.f32 %v2989, 0.0
    %v3023 = vmax.f32 %v2991, 0.0
    %v3024 = vmax.f32 %v2994, 0.0
    %v3025 = vmax.f32 %v2996, 0.0
    %v3026 = vmax.f32 %v2999, 0.0
    %v3027 = vmax.f32 %v3001, 0.0
    %v3028 = vmax.f32 %v3004, 0.0
    %v3029 = vmax.f32 %v3006, 0.0
    %v3030 = vmax.f32 %v3009, 0.0
    %v3031 = vmax.f32 %v3011, 0.0
    %v3032 = vmax.f32 %v3014, 0.0
    %v3033 = vmax.f32 %v3016, 0.0
    %v3034 = vpack.c.bf16 %v3019, %v3018
    %v3035 = vpack.c.bf16 %v3021, %v3020
    %v3036 = vpack.c.bf16 %v3023, %v3022
    %v3037 = vpack.c.bf16 %v3025, %v3024
    %v3038 = vpack.c.bf16 %v3027, %v3026
    %v3039 = vpack.c.bf16 %v3029, %v3028
    %v3040 = vpack.c.bf16 %v3031, %v3030
    %v3041 = vpack.c.bf16 %v3033, %v3032
    %v3042 = vld [vmem:[%s5 + $0x80] sm:$0xf]
    %v3043 = vld [vmem:[%s5 + $0x84] sm:$0xf]
    %v3044 = vld [vmem:[%s5 + $0x88] sm:$0xf]
    %v3045 = vld [vmem:[%s5 + $0x8c] sm:$0xf]
    %v3046 = vld [vmem:[%s5 + $0x90] sm:$0xf]
    %v3047 = vld [vmem:[%s5 + $0x94] sm:$0xf]
    %v3048 = vld [vmem:[%s5 + $0x98] sm:$0xf]
    %v3049 = vld [vmem:[%s5 + $0x9c] sm:$0xf]
    %v3050 = vld [vmem:[%s5 + $0xa0] sm:$0xf]
    %v3051 = vld [vmem:[%s5 + $0xa4] sm:$0xf]
    %v3052 = vld [vmem:[%s5 + $0xa8] sm:$0xf]
    %v3053 = vld [vmem:[%s5 + $0xac] sm:$0xf]
    %v3054 = vld [vmem:[%s5 + $0xb0] sm:$0xf]
    %v3055 = vld [vmem:[%s5 + $0xb4] sm:$0xf]
    %v3056 = vld [vmem:[%s5 + $0xb8] sm:$0xf]
    %v3057 = vld [vmem:[%s5 + $0xbc] sm:$0xf]
    %v3074 = vunpack.c.l.b16 %v3042
    %v3075 = vunpack.c.l.b16 %v3043
    %v3076 = vunpack.c.l.b16 %v3044
    %v3077 = vunpack.c.l.b16 %v3045
    %v3078 = vunpack.c.l.b16 %v3046
    %v3079 = vunpack.c.l.b16 %v3047
    %v3080 = vunpack.c.l.b16 %v3048
    %v3081 = vunpack.c.l.b16 %v3049
    %v3082 = vunpack.c.l.b16 %v3050
    %v3083 = vunpack.c.l.b16 %v3051
    %v3084 = vunpack.c.l.b16 %v3052
    %v3085 = vunpack.c.l.b16 %v3053
    %v3086 = vunpack.c.l.b16 %v3054
    %v3087 = vunpack.c.l.b16 %v3055
    %v3088 = vunpack.c.l.b16 %v3056
    %v3089 = vunpack.c.l.b16 %v3057
    %v3090 = vpack.c.b16 %v3075, %v3074
    %v3091 = vpack.c.b16 %v3077, %v3076
    %v3092 = vpack.c.b16 %v3079, %v3078
    %v3093 = vpack.c.b16 %v3081, %v3080
    %v3094 = vpack.c.b16 %v3083, %v3082
    %v3095 = vpack.c.b16 %v3085, %v3084
    %v3096 = vpack.c.b16 %v3087, %v3086
    %v3097 = vpack.c.b16 %v3089, %v3088
    %3106 = vmatpush.bf16.msra.mxu0 %v3097
    %3107 = vmatpush.bf16.msra.mxu0 %v3096
    %3108 = vmatpush.bf16.msra.mxu0 %v3095
    %3109 = vmatpush.bf16.msra.mxu0 %v3094
    %3110 = vmatpush.bf16.msra.mxu0 %v3093
    %3111 = vmatpush.bf16.msra.mxu0 %v3092
    %3112 = vmatpush.bf16.msra.mxu0 %v3091
    %3113 = vmatpush.bf16.msra.mxu0 %v3090
    %3114 = vmatmul.bf16.gmra.mxu0 %v3034
    %v3115 = vpop.f32.mrf.mxu0
    %v3116 = vadd.f32 0.0, %v3115
    %v3117 = vpop.f32.mrf.mxu0
    %v3118 = vadd.f32 0.0, %v3117
    %3119 = vmatmul.bf16.gmra.mxu0 %v3035
    %v3120 = vpop.f32.mrf.mxu0
    %v3121 = vadd.f32 0.0, %v3120
    %v3122 = vpop.f32.mrf.mxu0
    %v3123 = vadd.f32 0.0, %v3122
    %3124 = vmatmul.bf16.gmra.mxu0 %v3036
    %v3125 = vpop.f32.mrf.mxu0
    %v3126 = vadd.f32 0.0, %v3125
    %v3127 = vpop.f32.mrf.mxu0
    %v3128 = vadd.f32 0.0, %v3127
    %3129 = vmatmul.bf16.gmra.mxu0 %v3037
    %v3130 = vpop.f32.mrf.mxu0
    %v3131 = vadd.f32 0.0, %v3130
    %v3132 = vpop.f32.mrf.mxu0
    %v3133 = vadd.f32 0.0, %v3132
    %3134 = vmatmul.bf16.gmra.mxu0 %v3038
    %v3135 = vpop.f32.mrf.mxu0
    %v3136 = vadd.f32 0.0, %v3135
    %v3137 = vpop.f32.mrf.mxu0
    %v3138 = vadd.f32 0.0, %v3137
    %3139 = vmatmul.bf16.gmra.mxu0 %v3039
    %v3140 = vpop.f32.mrf.mxu0
    %v3141 = vadd.f32 0.0, %v3140
    %v3142 = vpop.f32.mrf.mxu0
    %v3143 = vadd.f32 0.0, %v3142
    %3144 = vmatmul.bf16.gmra.mxu0 %v3040
    %v3145 = vpop.f32.mrf.mxu0
    %v3146 = vadd.f32 0.0, %v3145
    %v3147 = vpop.f32.mrf.mxu0
    %v3148 = vadd.f32 0.0, %v3147
    %3149 = vmatmul.bf16.gmra.mxu0 %v3041
    %v3150 = vpop.f32.mrf.mxu0
    %v3151 = vadd.f32 0.0, %v3150
    %v3152 = vpop.f32.mrf.mxu0
    %v3153 = vadd.f32 0.0, %v3152
    %3154 = vdwg.mxu0
    %v3155 = vadd.f32 %v2866, %v3116
    %v3156 = vadd.f32 %v2868, %v3118
    %v3157 = vadd.f32 %v2871, %v3121
    %v3158 = vadd.f32 %v2873, %v3123
    %v3159 = vadd.f32 %v2876, %v3126
    %v3160 = vadd.f32 %v2878, %v3128
    %v3161 = vadd.f32 %v2881, %v3131
    %v3162 = vadd.f32 %v2883, %v3133
    %v3163 = vadd.f32 %v2886, %v3136
    %v3164 = vadd.f32 %v2888, %v3138
    %v3165 = vadd.f32 %v2891, %v3141
    %v3166 = vadd.f32 %v2893, %v3143
    %v3167 = vadd.f32 %v2896, %v3146
    %v3168 = vadd.f32 %v2898, %v3148
    %v3169 = vadd.f32 %v2901, %v3151
    %v3170 = vadd.f32 %v2903, %v3153
    %v3171 = vld [vmem:[%s4 + $0xc] sm:$0xf]
    %v3172 = vld [vmem:[%s4 + $0x1c] sm:$0xf]
    %v3173 = vld [vmem:[%s4 + $0x2c] sm:$0xf]
    %v3174 = vld [vmem:[%s4 + $0x3c] sm:$0xf]
    %v3175 = vld [vmem:[%s4 + $0x4c] sm:$0xf]
    %v3176 = vld [vmem:[%s4 + $0x5c] sm:$0xf]
    %v3177 = vld [vmem:[%s4 + $0x6c] sm:$0xf]
    %v3178 = vld [vmem:[%s4 + $0x7c] sm:$0xf]
    %v3179 = vld [vmem:[%s4 + $0x8c] sm:$0xf]
    %v3180 = vld [vmem:[%s4 + $0x9c] sm:$0xf]
    %v3181 = vld [vmem:[%s4 + $0xac] sm:$0xf]
    %v3182 = vld [vmem:[%s4 + $0xbc] sm:$0xf]
    %v3183 = vld [vmem:[%s4 + $0xcc] sm:$0xf]
    %v3184 = vld [vmem:[%s4 + $0xdc] sm:$0xf]
    %v3185 = vld [vmem:[%s4 + $0xec] sm:$0xf]
    %v3186 = vld [vmem:[%s4 + $0xfc] sm:$0xf]
    %v3203 = vunpack.c.l.b16 %v3171
    %v3204 = vunpack.c.l.b16 %v3172
    %v3205 = vunpack.c.l.b16 %v3173
    %v3206 = vunpack.c.l.b16 %v3174
    %v3207 = vunpack.c.l.b16 %v3175
    %v3208 = vunpack.c.l.b16 %v3176
    %v3209 = vunpack.c.l.b16 %v3177
    %v3210 = vunpack.c.l.b16 %v3178
    %v3211 = vunpack.c.l.b16 %v3179
    %v3212 = vunpack.c.l.b16 %v3180
    %v3213 = vunpack.c.l.b16 %v3181
    %v3214 = vunpack.c.l.b16 %v3182
    %v3215 = vunpack.c.l.b16 %v3183
    %v3216 = vunpack.c.l.b16 %v3184
    %v3217 = vunpack.c.l.b16 %v3185
    %v3218 = vunpack.c.l.b16 %v3186
    %v3219 = vpack.c.b16 %v3204, %v3203
    %v3220 = vpack.c.b16 %v3206, %v3205
    %v3221 = vpack.c.b16 %v3208, %v3207
    %v3222 = vpack.c.b16 %v3210, %v3209
    %v3223 = vpack.c.b16 %v3212, %v3211
    %v3224 = vpack.c.b16 %v3214, %v3213
    %v3225 = vpack.c.b16 %v3216, %v3215
    %v3226 = vpack.c.b16 %v3218, %v3217
    %3235 = vmatpush.bf16.msra.mxu0 %v3226
    %3236 = vmatpush.bf16.msra.mxu0 %v3225
    %3237 = vmatpush.bf16.msra.mxu0 %v3224
    %3238 = vmatpush.bf16.msra.mxu0 %v3223
    %3239 = vmatpush.bf16.msra.mxu0 %v3222
    %3240 = vmatpush.bf16.msra.mxu0 %v3221
    %3241 = vmatpush.bf16.msra.mxu0 %v3220
    %3242 = vmatpush.bf16.msra.mxu0 %v3219
    %3243 = vmatmul.bf16.gmra.mxu0 %v2405
    %v3244 = vpop.f32.mrf.mxu0
    %v3245 = vadd.f32 0.0, %v3244
    %v3246 = vpop.f32.mrf.mxu0
    %v3247 = vadd.f32 0.0, %v3246
    %3248 = vmatmul.bf16.gmra.mxu0 %v2406
    %v3249 = vpop.f32.mrf.mxu0
    %v3250 = vadd.f32 0.0, %v3249
    %v3251 = vpop.f32.mrf.mxu0
    %v3252 = vadd.f32 0.0, %v3251
    %3253 = vmatmul.bf16.gmra.mxu0 %v2407
    %v3254 = vpop.f32.mrf.mxu0
    %v3255 = vadd.f32 0.0, %v3254
    %v3256 = vpop.f32.mrf.mxu0
    %v3257 = vadd.f32 0.0, %v3256
    %3258 = vmatmul.bf16.gmra.mxu0 %v2408
    %v3259 = vpop.f32.mrf.mxu0
    %v3260 = vadd.f32 0.0, %v3259
    %v3261 = vpop.f32.mrf.mxu0
    %v3262 = vadd.f32 0.0, %v3261
    %3263 = vmatmul.bf16.gmra.mxu0 %v2409
    %v3264 = vpop.f32.mrf.mxu0
    %v3265 = vadd.f32 0.0, %v3264
    %v3266 = vpop.f32.mrf.mxu0
    %v3267 = vadd.f32 0.0, %v3266
    %3268 = vmatmul.bf16.gmra.mxu0 %v2410
    %v3269 = vpop.f32.mrf.mxu0
    %v3270 = vadd.f32 0.0, %v3269
    %v3271 = vpop.f32.mrf.mxu0
    %v3272 = vadd.f32 0.0, %v3271
    %3273 = vmatmul.bf16.gmra.mxu0 %v2411
    %v3274 = vpop.f32.mrf.mxu0
    %v3275 = vadd.f32 0.0, %v3274
    %v3276 = vpop.f32.mrf.mxu0
    %v3277 = vadd.f32 0.0, %v3276
    %3278 = vmatmul.bf16.gmra.mxu0 %v2412
    %v3279 = vpop.f32.mrf.mxu0
    %v3280 = vadd.f32 0.0, %v3279
    %v3281 = vpop.f32.mrf.mxu0
    %v3282 = vadd.f32 0.0, %v3281
    %3283 = vdwg.mxu0
    %v3284 = vmax.f32 %v3245, 0.0
    %v3285 = vmax.f32 %v3247, 0.0
    %v3286 = vmax.f32 %v3250, 0.0
    %v3287 = vmax.f32 %v3252, 0.0
    %v3288 = vmax.f32 %v3255, 0.0
    %v3289 = vmax.f32 %v3257, 0.0
    %v3290 = vmax.f32 %v3260, 0.0
    %v3291 = vmax.f32 %v3262, 0.0
    %v3292 = vmax.f32 %v3265, 0.0
    %v3293 = vmax.f32 %v3267, 0.0
    %v3294 = vmax.f32 %v3270, 0.0
    %v3295 = vmax.f32 %v3272, 0.0
    %v3296 = vmax.f32 %v3275, 0.0
    %v3297 = vmax.f32 %v3277, 0.0
    %v3298 = vmax.f32 %v3280, 0.0
    %v3299 = vmax.f32 %v3282, 0.0
    %v3300 = vpack.c.bf16 %v3285, %v3284
    %v3301 = vpack.c.bf16 %v3287, %v3286
    %v3302 = vpack.c.bf16 %v3289, %v3288
    %v3303 = vpack.c.bf16 %v3291, %v3290
    %v3304 = vpack.c.bf16 %v3293, %v3292
    %v3305 = vpack.c.bf16 %v3295, %v3294
    %v3306 = vpack.c.bf16 %v3297, %v3296
    %v3307 = vpack.c.bf16 %v3299, %v3298
    %v3308 = vld [vmem:[%s5 + $0xc0] sm:$0xf]
    %v3309 = vld [vmem:[%s5 + $0xc4] sm:$0xf]
    %v3310 = vld [vmem:[%s5 + $0xc8] sm:$0xf]
    %v3311 = vld [vmem:[%s5 + $0xcc] sm:$0xf]
    %v3312 = vld [vmem:[%s5 + $0xd0] sm:$0xf]
    %v3313 = vld [vmem:[%s5 + $0xd4] sm:$0xf]
    %v3314 = vld [vmem:[%s5 + $0xd8] sm:$0xf]
    %v3315 = vld [vmem:[%s5 + $0xdc] sm:$0xf]
    %v3316 = vld [vmem:[%s5 + $0xe0] sm:$0xf]
    %v3317 = vld [vmem:[%s5 + $0xe4] sm:$0xf]
    %v3318 = vld [vmem:[%s5 + $0xe8] sm:$0xf]
    %v3319 = vld [vmem:[%s5 + $0xec] sm:$0xf]
    %v3320 = vld [vmem:[%s5 + $0xf0] sm:$0xf]
    %v3321 = vld [vmem:[%s5 + $0xf4] sm:$0xf]
    %v3322 = vld [vmem:[%s5 + $0xf8] sm:$0xf]
    %v3323 = vld [vmem:[%s5 + $0xfc] sm:$0xf]
    %v3340 = vunpack.c.l.b16 %v3308
    %v3341 = vunpack.c.l.b16 %v3309
    %v3342 = vunpack.c.l.b16 %v3310
    %v3343 = vunpack.c.l.b16 %v3311
    %v3344 = vunpack.c.l.b16 %v3312
    %v3345 = vunpack.c.l.b16 %v3313
    %v3346 = vunpack.c.l.b16 %v3314
    %v3347 = vunpack.c.l.b16 %v3315
    %v3348 = vunpack.c.l.b16 %v3316
    %v3349 = vunpack.c.l.b16 %v3317
    %v3350 = vunpack.c.l.b16 %v3318
    %v3351 = vunpack.c.l.b16 %v3319
    %v3352 = vunpack.c.l.b16 %v3320
    %v3353 = vunpack.c.l.b16 %v3321
    %v3354 = vunpack.c.l.b16 %v3322
    %v3355 = vunpack.c.l.b16 %v3323
    %v3356 = vpack.c.b16 %v3341, %v3340
    %v3357 = vpack.c.b16 %v3343, %v3342
    %v3358 = vpack.c.b16 %v3345, %v3344
    %v3359 = vpack.c.b16 %v3347, %v3346
    %v3360 = vpack.c.b16 %v3349, %v3348
    %v3361 = vpack.c.b16 %v3351, %v3350
    %v3362 = vpack.c.b16 %v3353, %v3352
    %v3363 = vpack.c.b16 %v3355, %v3354
    %3372 = vmatpush.bf16.msra.mxu0 %v3363
    %3373 = vmatpush.bf16.msra.mxu0 %v3362
    %3374 = vmatpush.bf16.msra.mxu0 %v3361
    %3375 = vmatpush.bf16.msra.mxu0 %v3360
    %3376 = vmatpush.bf16.msra.mxu0 %v3359
    %3377 = vmatpush.bf16.msra.mxu0 %v3358
    %3378 = vmatpush.bf16.msra.mxu0 %v3357
    %3379 = vmatpush.bf16.msra.mxu0 %v3356
    %3380 = vmatmul.bf16.gmra.mxu0 %v3300
    %v3381 = vpop.f32.mrf.mxu0
    %v3382 = vadd.f32 0.0, %v3381
    %v3383 = vpop.f32.mrf.mxu0
    %v3384 = vadd.f32 0.0, %v3383
    %3385 = vmatmul.bf16.gmra.mxu0 %v3301
    %v3386 = vpop.f32.mrf.mxu0
    %v3387 = vadd.f32 0.0, %v3386
    %v3388 = vpop.f32.mrf.mxu0
    %v3389 = vadd.f32 0.0, %v3388
    %3390 = vmatmul.bf16.gmra.mxu0 %v3302
    %v3391 = vpop.f32.mrf.mxu0
    %v3392 = vadd.f32 0.0, %v3391
    %v3393 = vpop.f32.mrf.mxu0
    %v3394 = vadd.f32 0.0, %v3393
    %3395 = vmatmul.bf16.gmra.mxu0 %v3303
    %v3396 = vpop.f32.mrf.mxu0
    %v3397 = vadd.f32 0.0, %v3396
    %v3398 = vpop.f32.mrf.mxu0
    %v3399 = vadd.f32 0.0, %v3398
    %3400 = vmatmul.bf16.gmra.mxu0 %v3304
    %v3401 = vpop.f32.mrf.mxu0
    %v3402 = vadd.f32 0.0, %v3401
    %v3403 = vpop.f32.mrf.mxu0
    %v3404 = vadd.f32 0.0, %v3403
    %3405 = vmatmul.bf16.gmra.mxu0 %v3305
    %v3406 = vpop.f32.mrf.mxu0
    %v3407 = vadd.f32 0.0, %v3406
    %v3408 = vpop.f32.mrf.mxu0
    %v3409 = vadd.f32 0.0, %v3408
    %3410 = vmatmul.bf16.gmra.mxu0 %v3306
    %v3411 = vpop.f32.mrf.mxu0
    %v3412 = vadd.f32 0.0, %v3411
    %v3413 = vpop.f32.mrf.mxu0
    %v3414 = vadd.f32 0.0, %v3413
    %3415 = vmatmul.bf16.gmra.mxu0 %v3307
    %v3416 = vpop.f32.mrf.mxu0
    %v3417 = vadd.f32 0.0, %v3416
    %v3418 = vpop.f32.mrf.mxu0
    %v3419 = vadd.f32 0.0, %v3418
    %3420 = vdwg.mxu0
    %v3421 = vadd.f32 %v3155, %v3382
    %v3422 = vadd.f32 %v3156, %v3384
    %v3423 = vadd.f32 %v3157, %v3387
    %v3424 = vadd.f32 %v3158, %v3389
    %v3425 = vadd.f32 %v3159, %v3392
    %v3426 = vadd.f32 %v3160, %v3394
    %v3427 = vadd.f32 %v3161, %v3397
    %v3428 = vadd.f32 %v3162, %v3399
    %v3429 = vadd.f32 %v3163, %v3402
    %v3430 = vadd.f32 %v3164, %v3404
    %v3431 = vadd.f32 %v3165, %v3407
    %v3432 = vadd.f32 %v3166, %v3409
    %v3433 = vadd.f32 %v3167, %v3412
    %v3434 = vadd.f32 %v3168, %v3414
    %v3435 = vadd.f32 %v3169, %v3417
    %v3436 = vadd.f32 %v3170, %v3419
    %v3437 = vmax.f32 %v3421, 0.0
    %v3438 = vmax.f32 %v3422, 0.0
    %v3439 = vmax.f32 %v3423, 0.0
    %v3440 = vmax.f32 %v3424, 0.0
    %v3441 = vmax.f32 %v3425, 0.0
    %v3442 = vmax.f32 %v3426, 0.0
    %v3443 = vmax.f32 %v3427, 0.0
    %v3444 = vmax.f32 %v3428, 0.0
    %v3445 = vmax.f32 %v3429, 0.0
    %v3446 = vmax.f32 %v3430, 0.0
    %v3447 = vmax.f32 %v3431, 0.0
    %v3448 = vmax.f32 %v3432, 0.0
    %v3449 = vmax.f32 %v3433, 0.0
    %v3450 = vmax.f32 %v3434, 0.0
    %v3451 = vmax.f32 %v3435, 0.0
    %v3452 = vmax.f32 %v3436, 0.0
    %3453 = vst [vmem:[#allocation4] sm:$0xff] %v3437
    %3454 = vst [vmem:[#allocation4 + $0x8] sm:$0xff] %v3438
    %3455 = vst [vmem:[#allocation4 + $0x10] sm:$0xff] %v3439
    %3456 = vst [vmem:[#allocation4 + $0x18] sm:$0xff] %v3440
    %3457 = vst [vmem:[#allocation4 + $0x20] sm:$0xff] %v3441
    %3458 = vst [vmem:[#allocation4 + $0x28] sm:$0xff] %v3442
    %3459 = vst [vmem:[#allocation4 + $0x30] sm:$0xff] %v3443
    %3460 = vst [vmem:[#allocation4 + $0x38] sm:$0xff] %v3444
    %3461 = vst [vmem:[#allocation4 + $0x40] sm:$0xff] %v3445
    %3462 = vst [vmem:[#allocation4 + $0x48] sm:$0xff] %v3446
    %3463 = vst [vmem:[#allocation4 + $0x50] sm:$0xff] %v3447
    %3464 = vst [vmem:[#allocation4 + $0x58] sm:$0xff] %v3448
    %3465 = vst [vmem:[#allocation4 + $0x60] sm:$0xff] %v3449
    %3466 = vst [vmem:[#allocation4 + $0x68] sm:$0xff] %v3450
    %3467 = vst [vmem:[#allocation4 + $0x70] sm:$0xff] %v3451
    %3468 = vst [vmem:[#allocation4 + $0x78] sm:$0xff] %v3452
    // Predicated region
    $region30: #{downx_forward.1} parent=1 // pred_check
      _
    $region31: #{downx_forward.1} parent=1 // pred_check_branch
      %3470 = sbr.rel (0) target = $region33
    $region32: #{downx_forward.1} parent=1 // pred_region
      %3472 = vsyncadd [#allocation5], 0
      %s3473 = sshll.u32 [#allocation4], 4
      %s3474 = int_to_ptr.vmem [resolvable:$true] %s3473
      %s3475 = sshll.u32 %s6, 4
      %s3476 = int_to_ptr.hbm [resolvable:$true] %s3475
      %3481 = dma.vmem_to_hbm [thread:$0]  %s3474, 2048, %s3476, [#allocation5], 128, 128, 8
    $region33: #{downx_forward.1} parent=1 // pred_fallthru
      _
    // Predicated region
    $region34: #{downx_forward.1} parent=1 // pred_check
      _
    $region35: #{downx_forward.1} parent=1 // pred_check_branch
      %3483 = sbr.rel (0) target = $region37
    $region36: #{downx_forward.1} parent=1 // pred_region
      %3485 = dma.done [#allocation5], 2048
    $region37: #{downx_forward.1} parent=1 // pred_fallthru
      _
    %3486 = vsyncpa [#allocation5], 1

</llo_original>
